<compile_context>
chip_gen: v6e
topology: v6e:2x2x1
jax: 0.10.0
libtpu: 0.0.40
codegen_flags: <defaults>
</compile_context>

<pallas_src>
import functools
import math

import jax
import jax.numpy as jnp
from jax import lax
from jax.experimental import pallas as pl
from jax.experimental.pallas import tpu as pltpu

_NEG_INF = -1e30


def _varlen_flash_kernel(kv_lo_ref, kv_hi_ref,                  # scalar prefetch (SMEM)
                         qseg_ref, qend_ref, kseg_ref, krel_ref,  # metadata blocks
                         q_ref, k_ref, v_ref,                   # data blocks
                         o_ref,                                 # output block
                         m_scr, l_scr, acc_scr,                 # VMEM scratch
                         *, softmax_scale, is_causal):
    qi = pl.program_id(1)            # query-tile index
    ki = pl.program_id(2)            # kv-tile index (reduction axis, innermost)
    nk = pl.num_programs(2)

    @pl.when(ki == 0)
    def _init():
        m_scr[...] = jnp.full(m_scr.shape, _NEG_INF, jnp.float32)
        l_scr[...] = jnp.zeros(l_scr.shape, jnp.float32)
        acc_scr[...] = jnp.zeros(acc_scr.shape, jnp.float32)

    lo = kv_lo_ref[qi]
    hi = kv_hi_ref[qi]

    # Skip KV tiles that cannot contain any allowed key for this Q tile.
    @pl.when(jnp.logical_and(ki >= lo, ki <= hi))
    def _compute():
        q = q_ref[0]                                  # (block_q, D), input dtype
        k = k_ref[0]                                  # (block_k, D)
        v = v_ref[0]                                  # (block_k, D)
        # f32 inputs keep full precision; bf16 inputs stay bf16 (MXU-native).
        prec = lax.Precision.HIGHEST if q.dtype == jnp.float32 else None

        # Pre-scale Q once per tile: O(tq*D) instead of O(tq*tk).
        qs = q * jnp.asarray(softmax_scale, q.dtype)
        s = lax.dot_general(qs, k, (((1,), (1,)), ((), ())),
                            preferred_element_type=jnp.float32,
                            precision=prec)           # (block_q, block_k) f32

        # Varlen mask: same sequence; plus bottom-right aligned causal mask.
        mask = qseg_ref[...] == kseg_ref[...]         # (block_q,1) == (1,block_k)
        if is_causal:
            mask = jnp.logical_and(mask, krel_ref[...] <= qend_ref[...])

        s = jnp.where(mask, s, _NEG_INF)
        m_prev = m_scr[...]
        m_new = jnp.maximum(m_prev, jnp.max(s, axis=-1, keepdims=True))
        alpha = jnp.exp(m_prev - m_new)
        p = jnp.where(mask, jnp.exp(s - m_new), 0.0)  # exact zeros on masked slots

        l_scr[...] = alpha * l_scr[...] + jnp.sum(p, axis=-1, keepdims=True)
        acc_scr[...] = alpha * acc_scr[...] + lax.dot_general(
            p.astype(v.dtype), v, (((1,), (0,)), ((), ())),
            preferred_element_type=jnp.float32, precision=prec)
        m_scr[...] = m_new

    @pl.when(ki == nk - 1)
    def _finalize():
        l = l_scr[...]
        # Single normalization at finalize; rows with no valid keys -> 0.
        # (exact divide kept for interpreter portability / reference accuracy;
        #  on HW pl.reciprocal(l, approx=True) would move this to the EUP)
        inv = jnp.where(l > 0.0, 1.0 / l, 0.0)
        o_ref[0] = (acc_scr[...] * inv).astype(o_ref.dtype)


def varlen_attention(query, key, value, cu_seqlen_q, cu_seqlen_k,
                     max_seqlen_q, max_seqlen_k,
                     pdropout=0.0, softmax_scale=None, is_causal=True,
                     block_q=128, block_k=256):
    """query/key/value: packed [tokens, H, D].  cu_seqlen_*: [B+1] int32 offsets."""
    assert pdropout == 0.0, "dropout not supported"   # TODO(synk): pdropout > 0
    del max_seqlen_q, max_seqlen_k                     # not needed (packed tiling)

    Tq, H, D = query.shape
    Tk = key.shape[0]
    B = cu_seqlen_q.shape[0] - 1
    if softmax_scale is None:
        softmax_scale = 1.0 / math.sqrt(D)

    cu_q = cu_seqlen_q.astype(jnp.int32)
    cu_k = cu_seqlen_k.astype(jnp.int32)
    q_len = cu_q[1:] - cu_q[:-1]                       # (B,)
    k_len = cu_k[1:] - cu_k[:-1]                       # (B,)

    num_q_tiles = pl.cdiv(Tq, block_q)
    num_kv_tiles = pl.cdiv(Tk, block_k)
    Tq_pad = num_q_tiles * block_q
    Tk_pad = num_kv_tiles * block_k

    # ---- cheap O(T) metadata (segment ids / relative positions) ----
    tok_q = jnp.arange(Tq_pad, dtype=jnp.int32)
    valid_q = tok_q < Tq
    bq = jnp.clip(jnp.searchsorted(cu_q, tok_q, side="right") - 1, 0, B - 1)
    q_rel = tok_q - cu_q[bq]
    q_seg = jnp.where(valid_q, bq, -1).astype(jnp.int32)
    # bottom-right aligned causal: key allowed iff k_rel <= q_rel + (k_len - q_len)
    q_end = jnp.where(valid_q, q_rel + (k_len[bq] - q_len[bq]), -1).astype(jnp.int32)

    tok_k = jnp.arange(Tk_pad, dtype=jnp.int32)
    valid_k = tok_k < Tk
    bk = jnp.clip(jnp.searchsorted(cu_k, tok_k, side="right") - 1, 0, B - 1)
    k_seg = jnp.where(valid_k, bk, -2).astype(jnp.int32)
    k_rel = jnp.where(valid_k, tok_k - cu_k[bk], 2 ** 30).astype(jnp.int32)

    # ---- per-q-tile KV tile range (enables masked-tile skipping) ----
    if is_causal:
        kv_cnt = jnp.clip(q_end + 1, 0, k_len[bq])
    else:
        kv_cnt = k_len[bq]
    kv_start = jnp.where(valid_q, cu_k[bq], Tk_pad)
    kv_end = jnp.where(valid_q, cu_k[bq] + kv_cnt, 0)
    kv_start_t = jnp.min(kv_start.reshape(num_q_tiles, block_q), axis=1)
    kv_end_t = jnp.max(kv_end.reshape(num_q_tiles, block_q), axis=1)
    kv_lo = jnp.clip(kv_start_t // block_k, 0, num_kv_tiles - 1).astype(jnp.int32)
    kv_hi = jnp.clip((kv_end_t - 1) // block_k, kv_lo, num_kv_tiles - 1).astype(jnp.int32)

    q_seg2 = q_seg.reshape(Tq_pad, 1)
    q_end2 = q_end.reshape(Tq_pad, 1)
    k_seg2 = k_seg.reshape(1, Tk_pad)
    k_rel2 = k_rel.reshape(1, Tk_pad)

    # ---- layout: packed [T,H,D] -> [H,T_pad,D] (one transpose; no per-seq padding) ----
    def to_htd(x, t_pad):
        x = jnp.pad(x, ((0, t_pad - x.shape[0]), (0, 0), (0, 0)))
        return jnp.transpose(x, (1, 0, 2))

    qT = to_htd(query, Tq_pad)
    kT = to_htd(key, Tk_pad)
    vT = to_htd(value, Tk_pad)

    kernel = functools.partial(_varlen_flash_kernel,
                               softmax_scale=float(softmax_scale),
                               is_causal=bool(is_causal))

    def kv_clamp(qi, ki, lo, hi):
        # Skipped iterations map to an already-fetched block (no redundant DMA).
        return jnp.clip(ki, lo[qi], hi[qi])

    def q_map(h, qi, ki, lo, hi):     return (h, qi, 0)
    def o_map(h, qi, ki, lo, hi):     return (h, qi, 0)
    def qmeta_map(h, qi, ki, lo, hi): return (qi, 0)
    def kv_map(h, qi, ki, lo, hi):    return (h, kv_clamp(qi, ki, lo, hi), 0)
    def kmeta_map(h, qi, ki, lo, hi): return (0, kv_clamp(qi, ki, lo, hi))

    grid_spec = pltpu.PrefetchScalarGridSpec(
        num_scalar_prefetch=2,
        grid=(H, num_q_tiles, num_kv_tiles),
        in_specs=[
            pl.BlockSpec((block_q, 1), qmeta_map),      # q segment id
            pl.BlockSpec((block_q, 1), qmeta_map),      # q causal end
            pl.BlockSpec((1, block_k), kmeta_map),      # k segment id
            pl.BlockSpec((1, block_k), kmeta_map),      # k relative pos
            pl.BlockSpec((1, block_q, D), q_map),       # Q
            pl.BlockSpec((1, block_k, D), kv_map),      # K
            pl.BlockSpec((1, block_k, D), kv_map),      # V
        ],
        out_specs=pl.BlockSpec((1, block_q, D), o_map),
        scratch_shapes=[
            pltpu.VMEM((block_q, 1), jnp.float32),      # running max  m
            pltpu.VMEM((block_q, 1), jnp.float32),      # running sum  l
            pltpu.VMEM((block_q, D), jnp.float32),      # running acc
        ],
    )

    out_pad = pl.pallas_call(
        kernel,
        grid_spec=grid_spec,
        out_shape=jax.ShapeDtypeStruct((H, Tq_pad, D), query.dtype),
        compiler_params=pltpu.CompilerParams(
            dimension_semantics=("parallel", "parallel", "arbitrary")),
    )(kv_lo, kv_hi, q_seg2, q_end2, k_seg2, k_rel2, qT, kT, vT)

    return jnp.transpose(out_pad, (1, 0, 2))[:Tq]


def _reference(query, key, value, cu_q, cu_k, softmax_scale, is_causal):
    """Plain numpy reference (flash-attn varlen convention: all-masked rows -> 0)."""
    import numpy as np
    q = np.asarray(jax.device_get(query), dtype=np.float32)
    k = np.asarray(jax.device_get(key), dtype=np.float32)
    v = np.asarray(jax.device_get(value), dtype=np.float32)
    cu_q = np.asarray(jax.device_get(cu_q))
    cu_k = np.asarray(jax.device_get(cu_k))
    out = np.zeros_like(q)
    B = len(cu_q) - 1
    for b in range(B):
        qs, qe = int(cu_q[b]), int(cu_q[b + 1])
        ks, ke = int(cu_k[b]), int(cu_k[b + 1])
        Lq, Lk = qe - qs, ke - ks
        if Lq == 0 or Lk == 0:
            continue
        qb = q[qs:qe].transpose(1, 0, 2)   # (H, Lq, D)
        kb = k[ks:ke].transpose(1, 0, 2)
        vb = v[ks:ke].transpose(1, 0, 2)
        s = np.einsum("hqd,hkd->hqk", qb, kb) * softmax_scale
        if is_causal:
            qi = np.arange(Lq)[:, None]
            ki = np.arange(Lk)[None, :]
            mask = ki <= qi + (Lk - Lq)
        else:
            mask = np.ones((Lq, Lk), dtype=bool)
        s = np.where(mask[None], s, -1e30)
        m = s.max(-1, keepdims=True)
        p = np.exp(s - m) * mask[None]
        l = p.sum(-1, keepdims=True)
        ob = np.einsum("hqk,hkd->hqd", p, vb)
        ob = np.where(l > 0, ob / np.maximum(l, 1e-30), 0.0)
        out[qs:qe] = ob.transpose(1, 0, 2)
    return out


if __name__ == "__main__":
    import numpy as np

    H, D = 4, 64
    base_key = jax.random.PRNGKey(0)

    cases = [
        # (name,               q_lens,     k_lens,     causal, block_q, block_k)
        ("small_causal",       [5, 11],    [7, 9],     True,   128,     128),
        ("small_noncausal",    [5, 11],    [7, 9],     False,  128,     128),
        ("multi_tile_causal",  [100, 200], [150, 120], True,   128,     128),
    ]

    for idx, (name, q_lens, k_lens, causal, bq, bk) in enumerate(cases):
        Tq, Tk = sum(q_lens), sum(k_lens)
        kq, kk, kv = jax.random.split(jax.random.fold_in(base_key, idx), 3)
        query = jax.random.normal(kq, (Tq, H, D), dtype=jnp.float32)
        key_t = jax.random.normal(kk, (Tk, H, D), dtype=jnp.float32)
        value = jax.random.normal(kv, (Tk, H, D), dtype=jnp.float32)
        cu_seqlen_q = jnp.array(np.concatenate([[0], np.cumsum(q_lens)]), dtype=jnp.int32)
        cu_seqlen_k = jnp.array(np.concatenate([[0], np.cumsum(k_lens)]), dtype=jnp.int32)
        scale = 1.0 / math.sqrt(D)

        out = varlen_attention(query, key_t, value, cu_seqlen_q, cu_seqlen_k,
                               max(q_lens), max(k_lens),
                               pdropout=0.0, softmax_scale=scale,
                               is_causal=causal, block_q=bq, block_k=bk)
        out = jax.block_until_ready(out)

        ref = _reference(query, key_t, value, cu_seqlen_q, cu_seqlen_k, scale, causal)
        np.testing.assert_allclose(np.asarray(out), ref, rtol=2e-3, atol=2e-3,
                                   err_msg=f"case {name} mismatch")

    print("KERNEL_OK")
</pallas_src>

<mosaic_0001>
module attributes {stable_mosaic.version = 11 : i64} {
  func.func @_varlen_flash_kernel(%arg0: i32, %arg1: i32, %arg2: i32, %arg3: memref<1xi32, #tpu.memory_space<smem>>, %arg4: memref<1xi32, #tpu.memory_space<smem>>, %arg5: memref<128x1xi32, #tpu.memory_space<vmem>>, %arg6: memref<128x1xi32, #tpu.memory_space<vmem>>, %arg7: memref<1x128xi32, #tpu.memory_space<vmem>>, %arg8: memref<1x128xi32, #tpu.memory_space<vmem>>, %arg9: memref<1x128x64xf32, #tpu.memory_space<vmem>>, %arg10: memref<1x128x64xf32, #tpu.memory_space<vmem>>, %arg11: memref<1x128x64xf32, #tpu.memory_space<vmem>>, %arg12: memref<1x128x64xf32, #tpu.memory_space<vmem>>, %arg13: memref<128x1xf32, #tpu.memory_space<vmem>>, %arg14: memref<128x1xf32, #tpu.memory_space<vmem>>, %arg15: memref<128x64xf32, #tpu.memory_space<vmem>>) attributes {dimension_semantics = [#tpu.dimension_semantics<parallel>, #tpu.dimension_semantics<parallel>, #tpu.dimension_semantics<arbitrary>], iteration_bounds = array<i64: 4, 1, 1>, scalar_prefetch = 2 : i64, scratch_operands = 3 : i64, tpu.core_type = #tpu.core_type<tc>, window_params = [{transform_indices = @transform_0, window_bounds = array<i64: 128, 1>}, {transform_indices = @transform_1, window_bounds = array<i64: 128, 1>}, {transform_indices = @transform_2, window_bounds = array<i64: 1, 128>}, {transform_indices = @transform_3, window_bounds = array<i64: 1, 128>}, {transform_indices = @transform_4, window_bounds = array<i64: 1, 128, 64>}, {transform_indices = @transform_5, window_bounds = array<i64: 1, 128, 64>}, {transform_indices = @transform_6, window_bounds = array<i64: 1, 128, 64>}, {transform_indices = @transform_7, window_bounds = array<i64: 1, 128, 64>}]} {
    %c0_i32 = arith.constant 0 : i32
    %0 = arith.cmpi eq, %arg2, %c0_i32 : i32
    %1 = arith.extui %0 : i1 to i32
    %c0_i32_0 = arith.constant 0 : i32
    %2 = arith.cmpi ne, %1, %c0_i32_0 : i32
    scf.if %2 {
      %cst = arith.constant -1.000000e+30 : f32
      %15 = vector.broadcast %cst : f32 to vector<128x1xf32>
      %c0 = arith.constant 0 : index
      %c0_4 = arith.constant 0 : index
      %16 = vector.load %arg13[%c0, %c0_4] : memref<128x1xf32, #tpu.memory_space<vmem>>, vector<128x1xf32>
      tpu.vector_store %arg13[%c0, %c0_4], %15 {strides = array<i32>} : memref<128x1xf32, #tpu.memory_space<vmem>>, vector<128x1xf32>,
      %cst_5 = arith.constant 0.000000e+00 : f32
      %17 = vector.broadcast %cst_5 : f32 to vector<128x1xf32>
      %c0_6 = arith.constant 0 : index
      %c0_7 = arith.constant 0 : index
      %18 = vector.load %arg14[%c0_6, %c0_7] : memref<128x1xf32, #tpu.memory_space<vmem>>, vector<128x1xf32>
      tpu.vector_store %arg14[%c0_6, %c0_7], %17 {strides = array<i32>} : memref<128x1xf32, #tpu.memory_space<vmem>>, vector<128x1xf32>,
      %cst_8 = arith.constant 0.000000e+00 : f32
      %19 = vector.broadcast %cst_8 : f32 to vector<128x64xf32>
      %c0_9 = arith.constant 0 : index
      %c0_10 = arith.constant 0 : index
      %20 = vector.load %arg15[%c0_9, %c0_10] : memref<128x64xf32, #tpu.memory_space<vmem>>, vector<128x64xf32>
      tpu.vector_store %arg15[%c0_9, %c0_10], %19 {strides = array<i32>} : memref<128x64xf32, #tpu.memory_space<vmem>>, vector<128x64xf32>,
    } else {
    }
    %3 = arith.index_cast %arg1 : i32 to index
    %4 = memref.load %arg3[%3] : memref<1xi32, #tpu.memory_space<smem>>
    %5 = arith.index_cast %arg1 : i32 to index
    %6 = memref.load %arg4[%5] : memref<1xi32, #tpu.memory_space<smem>>
    %7 = arith.cmpi sge, %arg2, %4 : i32
    %8 = arith.cmpi sle, %arg2, %6 : i32
    %9 = arith.andi %7, %8 : i1
    %10 = arith.extui %9 : i1 to i32
    %c0_i32_1 = arith.constant 0 : i32
    %11 = arith.cmpi ne, %10, %c0_i32_1 : i32
    scf.if %11 {
      %c0 = arith.constant 0 : index
      %c0_4 = arith.constant 0 : index
      %c0_5 = arith.constant 0 : index
      %15 = vector.load %arg9[%c0, %c0_4, %c0_5] : memref<1x128x64xf32, #tpu.memory_space<vmem>>, vector<1x128x64xf32>
      %16 = vector.shape_cast %15 : vector<1x128x64xf32> to vector<128x64xf32>
      %c0_6 = arith.constant 0 : index
      %c0_7 = arith.constant 0 : index
      %c0_8 = arith.constant 0 : index
      %17 = vector.load %arg10[%c0_6, %c0_7, %c0_8] : memref<1x128x64xf32, #tpu.memory_space<vmem>>, vector<1x128x64xf32>
      %18 = vector.shape_cast %17 : vector<1x128x64xf32> to vector<128x64xf32>
      %c0_9 = arith.constant 0 : index
      %c0_10 = arith.constant 0 : index
      %c0_11 = arith.constant 0 : index
      %19 = vector.load %arg11[%c0_9, %c0_10, %c0_11] : memref<1x128x64xf32, #tpu.memory_space<vmem>>, vector<1x128x64xf32>
      %20 = vector.shape_cast %19 : vector<1x128x64xf32> to vector<128x64xf32>
      %cst = arith.constant 1.250000e-01 : f32
      %21 = vector.broadcast %cst : f32 to vector<128x64xf32>
      %22 = arith.mulf %16, %21 : vector<128x64xf32>
      %cst_12 = arith.constant dense<0.000000e+00> : vector<128x128xf32>
      %23 = tpu.matmul %22, %18, %cst_12 {dimension_numbers = #tpu.dot_dimension_numbers<[1], [1], [0], [0], [0, 0, 1, 0], [], []>, precision = #tpu.contract_precision<fp32>} : vector<128x64xf32>, vector<128x64xf32>, vector<128x128xf32> -> vector<128x128xf32>
      %c0_13 = arith.constant 0 : index
      %c0_14 = arith.constant 0 : index
      %24 = vector.load %arg5[%c0_13, %c0_14] : memref<128x1xi32, #tpu.memory_space<vmem>>, vector<128x1xi32>
      %c0_15 = arith.constant 0 : index
      %c0_16 = arith.constant 0 : index
      %25 = vector.load %arg7[%c0_15, %c0_16] : memref<1x128xi32, #tpu.memory_space<vmem>>, vector<1x128xi32>
      %26 = vector.broadcast %24 : vector<128x1xi32> to vector<128x128xi32>
      %27 = vector.broadcast %25 : vector<1x128xi32> to vector<128x128xi32>
      %28 = arith.cmpi eq, %26, %27 : vector<128x128xi32>
      %c0_17 = arith.constant 0 : index
      %c0_18 = arith.constant 0 : index
      %29 = vector.load %arg8[%c0_17, %c0_18] : memref<1x128xi32, #tpu.memory_space<vmem>>, vector<1x128xi32>
      %c0_19 = arith.constant 0 : index
      %c0_20 = arith.constant 0 : index
      %30 = vector.load %arg6[%c0_19, %c0_20] : memref<128x1xi32, #tpu.memory_space<vmem>>, vector<128x1xi32>
      %31 = vector.broadcast %29 : vector<1x128xi32> to vector<128x128xi32>
      %32 = vector.broadcast %30 : vector<128x1xi32> to vector<128x128xi32>
      %33 = arith.cmpi sle, %31, %32 : vector<128x128xi32>
      %34 = arith.andi %28, %33 : vector<128x128xi1>
      %cst_21 = arith.constant -1.000000e+30 : f32
      %35 = vector.broadcast %cst_21 : f32 to vector<128x128xf32>
      %36 = arith.select %34, %23, %35 : vector<128x128xi1>, vector<128x128xf32>
      %c0_22 = arith.constant 0 : index
      %c0_23 = arith.constant 0 : index
      %37 = vector.load %arg13[%c0_22, %c0_23] : memref<128x1xf32, #tpu.memory_space<vmem>>, vector<128x1xf32>
      %cst_24 = arith.constant dense<0xFF800000> : vector<128xf32>
      %38 = vector.multi_reduction <maximumf>, %36, %cst_24 [1] : vector<128x128xf32> to vector<128xf32>
      %39 = vector.shape_cast %38 : vector<128xf32> to vector<128x1xf32>
      %40 = arith.maximumf %37, %39 : vector<128x1xf32>
      %41 = arith.subf %37, %40 : vector<128x1xf32>
      %42 = math.exp %41 : vector<128x1xf32>
      %43 = vector.broadcast %40 : vector<128x1xf32> to vector<128x128xf32>
      %44 = arith.subf %36, %43 : vector<128x128xf32>
      %45 = math.exp %44 : vector<128x128xf32>
      %cst_25 = arith.constant 0.000000e+00 : f32
      %46 = vector.broadcast %cst_25 : f32 to vector<128x128xf32>
      %47 = arith.select %34, %45, %46 : vector<128x128xi1>, vector<128x128xf32>
      %c0_26 = arith.constant 0 : index
      %c0_27 = arith.constant 0 : index
      %48 = vector.load %arg14[%c0_26, %c0_27] : memref<128x1xf32, #tpu.memory_space<vmem>>, vector<128x1xf32>
      %49 = arith.mulf %42, %48 : vector<128x1xf32>
      %cst_28 = arith.constant dense<0.000000e+00> : vector<128xf32>
      %50 = vector.multi_reduction <add>, %47, %cst_28 [1] : vector<128x128xf32> to vector<128xf32>
      %51 = vector.shape_cast %50 : vector<128xf32> to vector<128x1xf32>
      %52 = arith.addf %49, %51 : vector<128x1xf32>
      %c0_29 = arith.constant 0 : index
      %c0_30 = arith.constant 0 : index
      %53 = vector.load %arg14[%c0_29, %c0_30] : memref<128x1xf32, #tpu.memory_space<vmem>>, vector<128x1xf32>
      tpu.vector_store %arg14[%c0_29, %c0_30], %52 {strides = array<i32>} : memref<128x1xf32, #tpu.memory_space<vmem>>, vector<128x1xf32>,
      %c0_31 = arith.constant 0 : index
      %c0_32 = arith.constant 0 : index
      %54 = vector.load %arg15[%c0_31, %c0_32] : memref<128x64xf32, #tpu.memory_space<vmem>>, vector<128x64xf32>
      %55 = vector.broadcast %42 : vector<128x1xf32> to vector<128x64xf32>
      %56 = arith.mulf %55, %54 : vector<128x64xf32>
      %cst_33 = arith.constant dense<0.000000e+00> : vector<128x64xf32>
      %57 = tpu.matmul %47, %20, %cst_33 {dimension_numbers = #tpu.dot_dimension_numbers<[1], [0], [0], [1], [0, 0, 1, 1], [], []>, precision = #tpu.contract_precision<fp32>} : vector<128x128xf32>, vector<128x64xf32>, vector<128x64xf32> -> vector<128x64xf32>
      %58 = arith.addf %56, %57 : vector<128x64xf32>
      %c0_34 = arith.constant 0 : index
      %c0_35 = arith.constant 0 : index
      %59 = vector.load %arg15[%c0_34, %c0_35] : memref<128x64xf32, #tpu.memory_space<vmem>>, vector<128x64xf32>
      tpu.vector_store %arg15[%c0_34, %c0_35], %58 {strides = array<i32>} : memref<128x64xf32, #tpu.memory_space<vmem>>, vector<128x64xf32>,
      %c0_36 = arith.constant 0 : index
      %c0_37 = arith.constant 0 : index
      %60 = vector.load %arg13[%c0_36, %c0_37] : memref<128x1xf32, #tpu.memory_space<vmem>>, vector<128x1xf32>
      tpu.vector_store %arg13[%c0_36, %c0_37], %40 {strides = array<i32>} : memref<128x1xf32, #tpu.memory_space<vmem>>, vector<128x1xf32>,
    } else {
    }
    %c0_i32_2 = arith.constant 0 : i32
    %12 = arith.cmpi eq, %arg2, %c0_i32_2 : i32
    %13 = arith.extui %12 : i1 to i32
    %c0_i32_3 = arith.constant 0 : i32
    %14 = arith.cmpi ne, %13, %c0_i32_3 : i32
    scf.if %14 {
      %c0 = arith.constant 0 : index
      %c0_4 = arith.constant 0 : index
      %15 = vector.load %arg14[%c0, %c0_4] : memref<128x1xf32, #tpu.memory_space<vmem>>, vector<128x1xf32>
      %cst = arith.constant 0.000000e+00 : f32
      %16 = vector.broadcast %cst : f32 to vector<128x1xf32>
      %17 = arith.cmpf ogt, %15, %16 : vector<128x1xf32>
      %cst_5 = arith.constant 1.000000e+00 : f32
      %18 = vector.broadcast %cst_5 : f32 to vector<128x1xf32>
      %19 = arith.divf %18, %15 : vector<128x1xf32>
      %cst_6 = arith.constant 0.000000e+00 : f32
      %20 = vector.broadcast %cst_6 : f32 to vector<128x1xf32>
      %21 = arith.select %17, %19, %20 : vector<128x1xi1>, vector<128x1xf32>
      %c0_7 = arith.constant 0 : index
      %c0_8 = arith.constant 0 : index
      %22 = vector.load %arg15[%c0_7, %c0_8] : memref<128x64xf32, #tpu.memory_space<vmem>>, vector<128x64xf32>
      %23 = vector.broadcast %21 : vector<128x1xf32> to vector<128x64xf32>
      %24 = arith.mulf %22, %23 : vector<128x64xf32>
      %c0_9 = arith.constant 0 : index
      %c0_10 = arith.constant 0 : index
      %c0_11 = arith.constant 0 : index
      %25 = vector.load %arg12[%c0_9, %c0_10, %c0_11] : memref<1x128x64xf32, #tpu.memory_space<vmem>>, vector<1x128x64xf32>
      %26 = vector.shape_cast %25 : vector<1x128x64xf32> to vector<128x64xf32>
      %27 = vector.shape_cast %24 : vector<128x64xf32> to vector<1x128x64xf32>
      tpu.vector_store %arg12[%c0_9, %c0_10, %c0_11], %27 {strides = array<i32>} : memref<1x128x64xf32, #tpu.memory_space<vmem>>, vector<1x128x64xf32>,
    } else {
    }
    return
  }
  func.func @transform_0(%arg0: i32, %arg1: i32, %arg2: i32, %arg3: memref<1xi32, #tpu.memory_space<smem>>, %arg4: memref<1xi32, #tpu.memory_space<smem>>) -> (i32, i32) {
    %c0_i32 = arith.constant 0 : i32
    %c0_i32_0 = arith.constant 0 : i32
    return %arg1, %c0_i32 : i32, i32
  }
  func.func @transform_1(%arg0: i32, %arg1: i32, %arg2: i32, %arg3: memref<1xi32, #tpu.memory_space<smem>>, %arg4: memref<1xi32, #tpu.memory_space<smem>>) -> (i32, i32) {
    %c0_i32 = arith.constant 0 : i32
    %c0_i32_0 = arith.constant 0 : i32
    return %arg1, %c0_i32 : i32, i32
  }
  func.func @transform_2(%arg0: i32, %arg1: i32, %arg2: i32, %arg3: memref<1xi32, #tpu.memory_space<smem>>, %arg4: memref<1xi32, #tpu.memory_space<smem>>) -> (i32, i32) {
    %0 = arith.index_cast %arg1 : i32 to index
    %1 = memref.load %arg3[%0] : memref<1xi32, #tpu.memory_space<smem>>
    %2 = arith.index_cast %arg1 : i32 to index
    %3 = memref.load %arg4[%2] : memref<1xi32, #tpu.memory_space<smem>>
    %4 = arith.maxsi %1, %arg2 : i32
    %5 = arith.minsi %3, %4 : i32
    %c0_i32 = arith.constant 0 : i32
    %c0_i32_0 = arith.constant 0 : i32
    return %c0_i32, %5 : i32, i32
  }
  func.func @transform_3(%arg0: i32, %arg1: i32, %arg2: i32, %arg3: memref<1xi32, #tpu.memory_space<smem>>, %arg4: memref<1xi32, #tpu.memory_space<smem>>) -> (i32, i32) {
    %0 = arith.index_cast %arg1 : i32 to index
    %1 = memref.load %arg3[%0] : memref<1xi32, #tpu.memory_space<smem>>
    %2 = arith.index_cast %arg1 : i32 to index
    %3 = memref.load %arg4[%2] : memref<1xi32, #tpu.memory_space<smem>>
    %4 = arith.maxsi %1, %arg2 : i32
    %5 = arith.minsi %3, %4 : i32
    %c0_i32 = arith.constant 0 : i32
    %c0_i32_0 = arith.constant 0 : i32
    return %c0_i32, %5 : i32, i32
  }
  func.func @transform_4(%arg0: i32, %arg1: i32, %arg2: i32, %arg3: memref<1xi32, #tpu.memory_space<smem>>, %arg4: memref<1xi32, #tpu.memory_space<smem>>) -> (i32, i32, i32) {
    %c0_i32 = arith.constant 0 : i32
    %c0_i32_0 = arith.constant 0 : i32
    return %arg0, %arg1, %c0_i32 : i32, i32, i32
  }
  func.func @transform_5(%arg0: i32, %arg1: i32, %arg2: i32, %arg3: memref<1xi32, #tpu.memory_space<smem>>, %arg4: memref<1xi32, #tpu.memory_space<smem>>) -> (i32, i32, i32) {
    %0 = arith.index_cast %arg1 : i32 to index
    %1 = memref.load %arg3[%0] : memref<1xi32, #tpu.memory_space<smem>>
    %2 = arith.index_cast %arg1 : i32 to index
    %3 = memref.load %arg4[%2] : memref<1xi32, #tpu.memory_space<smem>>
    %4 = arith.maxsi %1, %arg2 : i32
    %5 = arith.minsi %3, %4 : i32
    %c0_i32 = arith.constant 0 : i32
    %c0_i32_0 = arith.constant 0 : i32
    return %arg0, %5, %c0_i32 : i32, i32, i32
  }
  func.func @transform_6(%arg0: i32, %arg1: i32, %arg2: i32, %arg3: memref<1xi32, #tpu.memory_space<smem>>, %arg4: memref<1xi32, #tpu.memory_space<smem>>) -> (i32, i32, i32) {
    %0 = arith.index_cast %arg1 : i32 to index
    %1 = memref.load %arg3[%0] : memref<1xi32, #tpu.memory_space<smem>>
    %2 = arith.index_cast %arg1 : i32 to index
    %3 = memref.load %arg4[%2] : memref<1xi32, #tpu.memory_space<smem>>
    %4 = arith.maxsi %1, %arg2 : i32
    %5 = arith.minsi %3, %4 : i32
    %c0_i32 = arith.constant 0 : i32
    %c0_i32_0 = arith.constant 0 : i32
    return %arg0, %5, %c0_i32 : i32, i32, i32
  }
  func.func @transform_7(%arg0: i32, %arg1: i32, %arg2: i32, %arg3: memref<1xi32, #tpu.memory_space<smem>>, %arg4: memref<1xi32, #tpu.memory_space<smem>>) -> (i32, i32, i32) {
    %c0_i32 = arith.constant 0 : i32
    %c0_i32_0 = arith.constant 0 : i32
    return %arg0, %arg1, %c0_i32 : i32, i32, i32
  }
}

</mosaic_0001>

<llo_original>
// kernel: tpu_custom_call.1
$region0: #{tpu_custom_call.1}
  #allocation0 [shape = 'u32[]', space=smem, size = 0x4, offset = 0x4, fixed_abs, tag = 'smem constant byte address 0x4 - core index']
  #allocation1 [shape = 'u32[144,128]{1,0:T(1,128)}', space=vmem, size = 0x12000, scoped, tag = 'internal scratch']
  #allocation2 [shape = 'f32[128,1]{1,0:T(8,128)}', space=vmem, size = 0x10000, scoped, tag = 'scratch operand']
  #allocation3 [shape = 'f32[128,1]{1,0:T(8,128)}', space=vmem, size = 0x10000, scoped, tag = 'scratch operand']
  #allocation4 [shape = 'f32[128,64]{1,0:T(8,128)}', space=vmem, size = 0x10000, scoped, tag = 'scratch operand']
  #allocation5 [shape = 's32[1]{0}', space=sflag, size = 0x4, scoped, tag = 'scoped memory for tpu_custom_call.1']
  #allocation6 [shape = 's32[1]{0:T(128)S(6)}', space=smem, size = 0x200, scoped, tag = 'prefetched SMEM operand 0']
  #allocation7 [shape = 's32[1]{0:T(128)S(6)}', space=smem, size = 0x200, scoped, tag = 'prefetched SMEM operand 1']
  %s0 = inlined_call_operand.<no memory space> [shape: s32[1], index: 0, kind: input, shape index: {}]
  %s1 = inlined_call_operand.<no memory space> [shape: s32[1], index: 1, kind: input, shape index: {}]
  %s2 = inlined_call_operand.vmem [shape: s32[128,1], index: 2, kind: input, shape index: {}]
  %s3 = inlined_call_operand.vmem [shape: s32[128,1], index: 3, kind: input, shape index: {}]
  %s4 = inlined_call_operand.vmem [shape: s32[1,128], index: 4, kind: input, shape index: {}]
  %s5 = inlined_call_operand.vmem [shape: s32[1,128], index: 5, kind: input, shape index: {}]
  %s6 = inlined_call_operand.vmem [shape: f32[4,128,64], index: 6, kind: input, shape index: {}]
  %s7 = inlined_call_operand.vmem [shape: f32[4,128,64], index: 7, kind: input, shape index: {}]
  %s8 = inlined_call_operand.vmem [shape: f32[4,128,64], index: 8, kind: input, shape index: {}]
  %s9 = inlined_call_operand.vmem [shape: f32[4,128,64], index: 9, kind: output, shape index: {}]
  %s10 = sld [smem:[#allocation0]]
  $region73: #{tpu_custom_call.1} parent=0
    _
  %s12 = ssub.s32 1, %s10
  %s13 = scalar_select 0, %s12, %s10
  %14 = sst [smem:[#allocation6]] %s0
  %15 = sst [smem:[#allocation7]] %s1
  loop: start=0, step=1, limit=6
  $region2: #{tpu_custom_call.1} parent=0 // loop_pre_header
    _
  $region3: #{tpu_custom_call.1} parent=0 // loop_header
    %s17 = sphi 0, %s21
    %p18 = scmp.ge.s32.totalorder %s17, 6
    %s24 = sphi 0, %s43
    %s25 = sphi 0, %s39
    %s26 = sphi 0, %s35
    %s27 = sphi 0, %s24
    %s28 = sphi 0, %s25
    %s29 = sphi 0, %s26
    %s30 = sphi 0, %s27
    %s31 = sphi 0, %s28
    %s32 = sphi 0, %s29
    %s46 = sphi 0, %s48
    %s49 = sphi 0, %s46
    %s50 = sphi 0, %s49
    %s66 = sphi 0, %s50
    %s72 = sphi 0, %s74
    %s75 = sphi 0, %s72
    %s76 = sphi 0, %s75
    %s92 = sphi 0, %s76
    %s110 = sphi 0, %s112
    %s113 = sphi 0, %s110
    %s114 = sphi 0, %s113
    %s130 = sphi 0, %s114
    %s148 = sphi 0, %s150
    %s151 = sphi 0, %s148
    %s152 = sphi 0, %s151
    %s168 = sphi 0, %s152
    %s176 = sphi 0, %s178
    %s179 = sphi 0, %s176
    %s180 = sphi 0, %s179
    %s196 = sphi 0, %s180
    %s216 = sphi 0, %s218
    %s219 = sphi 0, %s216
    %s220 = sphi 0, %s219
    %s236 = sphi 0, %s220
    %s256 = sphi 0, %s258
    %s259 = sphi 0, %s256
    %s260 = sphi 0, %s259
    %s276 = sphi 0, %s260
    %s284 = sphi 0, %s286
    %s287 = sphi 0, %s284
    %s288 = sphi 0, %s287
    %s304 = sphi 0, %s288
  $region4: #{tpu_custom_call.1} parent=0 // loop_header_branch
    %20 = sbr.rel (%p18) target = $region8
  $region5: #{tpu_custom_call.1} parent=0 // loop_body
    %s22 = ssub.s32 %s17, 1
    %s23 = ssub.s32 %s17, 2
    %s33 = sadd.s32 1, %s26
    %p34 = scmp.ge.s32.totalorder %s33, 1
    %s35 = scalar_select %p34, 0, %s33
    %s36 = sadd.s32 1, %s25
    %s37 = scalar_select %p34, %s36, %s25
    %p38 = scmp.ge.s32.totalorder %s37, 1
    %s39 = scalar_select %p38, 0, %s37
    %s40 = sadd.s32 1, %s24
    %s41 = scalar_select %p38, %s40, %s24
    %p42 = scmp.ge.s32.totalorder %s41, 4
    %s43 = scalar_select %p42, 0, %s41
    %s44 = ssub.s32 %s25, %s39
    %p45 = scmp.eq.s32.totalorder %s44, 0
    %s47 = sadd.s32 %s46, 1
    %s48 = scalar_select %p45, %s46, %s47
    %p51 = pneg %p45
    %p52 = scmp.eq.s32.totalorder %s17, 3
    %p53 = por %p51, %p52
    %p54 = scmp.ne.s32.totalorder %s46, %s49
    %p55 = scmp.eq.s32.totalorder %s17, 0
    %p56 = por %p54, %p55
    %p57 = scmp.ne.s32.totalorder %s46, %s49
    %p58 = scmp.eq.s32.totalorder %s22, 3
    %p59 = por %p57, %p58
    %p60 = scmp.ne.s32.totalorder %s49, %s50
    %p61 = scmp.eq.s32.totalorder %s22, 0
    %p62 = por %p60, %p61
    %p63 = scmp.ne.s32.totalorder %s49, %s50
    %p64 = scmp.eq.s32.totalorder %s23, 3
    %p65 = por %p63, %p64
    %p67 = scmp.ne.s32.totalorder %s50, %s66
    %p68 = scmp.eq.s32.totalorder %s23, 0
    %p69 = por %p67, %p68
    %s70 = ssub.s32 %s25, %s39
    %p71 = scmp.eq.s32.totalorder %s70, 0
    %s73 = sadd.s32 %s72, 1
    %s74 = scalar_select %p71, %s72, %s73
    %p77 = pneg %p71
    %p78 = scmp.eq.s32.totalorder %s17, 3
    %p79 = por %p77, %p78
    %p80 = scmp.ne.s32.totalorder %s72, %s75
    %p81 = scmp.eq.s32.totalorder %s17, 0
    %p82 = por %p80, %p81
    %p83 = scmp.ne.s32.totalorder %s72, %s75
    %p84 = scmp.eq.s32.totalorder %s22, 3
    %p85 = por %p83, %p84
    %p86 = scmp.ne.s32.totalorder %s75, %s76
    %p87 = scmp.eq.s32.totalorder %s22, 0
    %p88 = por %p86, %p87
    %p89 = scmp.ne.s32.totalorder %s75, %s76
    %p90 = scmp.eq.s32.totalorder %s23, 3
    %p91 = por %p89, %p90
    %p93 = scmp.ne.s32.totalorder %s76, %s92
    %p94 = scmp.eq.s32.totalorder %s23, 0
    %p95 = por %p93, %p94
    %s96 = sld [smem:[#allocation6 + %s25]]
    %s97 = sld [smem:[#allocation7 + %s25]]
    %p98 = scmp.gt.s32.totalorder %s96, %s26
    %s99 = scalar_select %p98, %s96, %s26
    %p100 = scmp.lt.s32.totalorder %s97, %s99
    %s101 = scalar_select %p100, %s97, %s99
    %s102 = sld [smem:[#allocation6 + %s39]]
    %s103 = sld [smem:[#allocation7 + %s39]]
    %p104 = scmp.gt.s32.totalorder %s102, %s35
    %s105 = scalar_select %p104, %s102, %s35
    %p106 = scmp.lt.s32.totalorder %s103, %s105
    %s107 = scalar_select %p106, %s103, %s105
    %s108 = ssub.s32 %s101, %s107
    %p109 = scmp.eq.s32.totalorder %s108, 0
    %s111 = sadd.s32 %s110, 1
    %s112 = scalar_select %p109, %s110, %s111
    %p115 = pneg %p109
    %p116 = scmp.eq.s32.totalorder %s17, 3
    %p117 = por %p115, %p116
    %p118 = scmp.ne.s32.totalorder %s110, %s113
    %p119 = scmp.eq.s32.totalorder %s17, 0
    %p120 = por %p118, %p119
    %p121 = scmp.ne.s32.totalorder %s110, %s113
    %p122 = scmp.eq.s32.totalorder %s22, 3
    %p123 = por %p121, %p122
    %p124 = scmp.ne.s32.totalorder %s113, %s114
    %p125 = scmp.eq.s32.totalorder %s22, 0
    %p126 = por %p124, %p125
    %p127 = scmp.ne.s32.totalorder %s113, %s114
    %p128 = scmp.eq.s32.totalorder %s23, 3
    %p129 = por %p127, %p128
    %p131 = scmp.ne.s32.totalorder %s114, %s130
    %p132 = scmp.eq.s32.totalorder %s23, 0
    %p133 = por %p131, %p132
    %s134 = sld [smem:[#allocation6 + %s25]]
    %s135 = sld [smem:[#allocation7 + %s25]]
    %p136 = scmp.gt.s32.totalorder %s134, %s26
    %s137 = scalar_select %p136, %s134, %s26
    %p138 = scmp.lt.s32.totalorder %s135, %s137
    %s139 = scalar_select %p138, %s135, %s137
    %s140 = sld [smem:[#allocation6 + %s39]]
    %s141 = sld [smem:[#allocation7 + %s39]]
    %p142 = scmp.gt.s32.totalorder %s140, %s35
    %s143 = scalar_select %p142, %s140, %s35
    %p144 = scmp.lt.s32.totalorder %s141, %s143
    %s145 = scalar_select %p144, %s141, %s143
    %s146 = ssub.s32 %s139, %s145
    %p147 = scmp.eq.s32.totalorder %s146, 0
    %s149 = sadd.s32 %s148, 1
    %s150 = scalar_select %p147, %s148, %s149
    %p153 = pneg %p147
    %p154 = scmp.eq.s32.totalorder %s17, 3
    %p155 = por %p153, %p154
    %p156 = scmp.ne.s32.totalorder %s148, %s151
    %p157 = scmp.eq.s32.totalorder %s17, 0
    %p158 = por %p156, %p157
    %p159 = scmp.ne.s32.totalorder %s148, %s151
    %p160 = scmp.eq.s32.totalorder %s22, 3
    %p161 = por %p159, %p160
    %p162 = scmp.ne.s32.totalorder %s151, %s152
    %p163 = scmp.eq.s32.totalorder %s22, 0
    %p164 = por %p162, %p163
    %p165 = scmp.ne.s32.totalorder %s151, %s152
    %p166 = scmp.eq.s32.totalorder %s23, 3
    %p167 = por %p165, %p166
    %p169 = scmp.ne.s32.totalorder %s152, %s168
    %p170 = scmp.eq.s32.totalorder %s23, 0
    %p171 = por %p169, %p170
    %s172 = ssub.s32 %s24, %s43
    %s173 = ssub.s32 %s25, %s39
    %s174 = sor.u32 %s172, %s173
    %p175 = scmp.eq.s32.totalorder %s174, 0
    %s177 = sadd.s32 %s176, 1
    %s178 = scalar_select %p175, %s176, %s177
    %p181 = pneg %p175
    %p182 = scmp.eq.s32.totalorder %s17, 3
    %p183 = por %p181, %p182
    %p184 = scmp.ne.s32.totalorder %s176, %s179
    %p185 = scmp.eq.s32.totalorder %s17, 0
    %p186 = por %p184, %p185
    %p187 = scmp.ne.s32.totalorder %s176, %s179
    %p188 = scmp.eq.s32.totalorder %s22, 3
    %p189 = por %p187, %p188
    %p190 = scmp.ne.s32.totalorder %s179, %s180
    %p191 = scmp.eq.s32.totalorder %s22, 0
    %p192 = por %p190, %p191
    %p193 = scmp.ne.s32.totalorder %s179, %s180
    %p194 = scmp.eq.s32.totalorder %s23, 3
    %p195 = por %p193, %p194
    %p197 = scmp.ne.s32.totalorder %s180, %s196
    %p198 = scmp.eq.s32.totalorder %s23, 0
    %p199 = por %p197, %p198
    %s200 = sld [smem:[#allocation6 + %s25]]
    %s201 = sld [smem:[#allocation7 + %s25]]
    %p202 = scmp.gt.s32.totalorder %s200, %s26
    %s203 = scalar_select %p202, %s200, %s26
    %p204 = scmp.lt.s32.totalorder %s201, %s203
    %s205 = scalar_select %p204, %s201, %s203
    %s206 = sld [smem:[#allocation6 + %s39]]
    %s207 = sld [smem:[#allocation7 + %s39]]
    %p208 = scmp.gt.s32.totalorder %s206, %s35
    %s209 = scalar_select %p208, %s206, %s35
    %p210 = scmp.lt.s32.totalorder %s207, %s209
    %s211 = scalar_select %p210, %s207, %s209
    %s212 = ssub.s32 %s24, %s43
    %s213 = ssub.s32 %s205, %s211
    %s214 = sor.u32 %s212, %s213
    %p215 = scmp.eq.s32.totalorder %s214, 0
    %s217 = sadd.s32 %s216, 1
    %s218 = scalar_select %p215, %s216, %s217
    %p221 = pneg %p215
    %p222 = scmp.eq.s32.totalorder %s17, 3
    %p223 = por %p221, %p222
    %p224 = scmp.ne.s32.totalorder %s216, %s219
    %p225 = scmp.eq.s32.totalorder %s17, 0
    %p226 = por %p224, %p225
    %p227 = scmp.ne.s32.totalorder %s216, %s219
    %p228 = scmp.eq.s32.totalorder %s22, 3
    %p229 = por %p227, %p228
    %p230 = scmp.ne.s32.totalorder %s219, %s220
    %p231 = scmp.eq.s32.totalorder %s22, 0
    %p232 = por %p230, %p231
    %p233 = scmp.ne.s32.totalorder %s219, %s220
    %p234 = scmp.eq.s32.totalorder %s23, 3
    %p235 = por %p233, %p234
    %p237 = scmp.ne.s32.totalorder %s220, %s236
    %p238 = scmp.eq.s32.totalorder %s23, 0
    %p239 = por %p237, %p238
    %s240 = sld [smem:[#allocation6 + %s25]]
    %s241 = sld [smem:[#allocation7 + %s25]]
    %p242 = scmp.gt.s32.totalorder %s240, %s26
    %s243 = scalar_select %p242, %s240, %s26
    %p244 = scmp.lt.s32.totalorder %s241, %s243
    %s245 = scalar_select %p244, %s241, %s243
    %s246 = sld [smem:[#allocation6 + %s39]]
    %s247 = sld [smem:[#allocation7 + %s39]]
    %p248 = scmp.gt.s32.totalorder %s246, %s35
    %s249 = scalar_select %p248, %s246, %s35
    %p250 = scmp.lt.s32.totalorder %s247, %s249
    %s251 = scalar_select %p250, %s247, %s249
    %s252 = ssub.s32 %s24, %s43
    %s253 = ssub.s32 %s245, %s251
    %s254 = sor.u32 %s252, %s253
    %p255 = scmp.eq.s32.totalorder %s254, 0
    %s257 = sadd.s32 %s256, 1
    %s258 = scalar_select %p255, %s256, %s257
    %p261 = pneg %p255
    %p262 = scmp.eq.s32.totalorder %s17, 3
    %p263 = por %p261, %p262
    %p264 = scmp.ne.s32.totalorder %s256, %s259
    %p265 = scmp.eq.s32.totalorder %s17, 0
    %p266 = por %p264, %p265
    %p267 = scmp.ne.s32.totalorder %s256, %s259
    %p268 = scmp.eq.s32.totalorder %s22, 3
    %p269 = por %p267, %p268
    %p270 = scmp.ne.s32.totalorder %s259, %s260
    %p271 = scmp.eq.s32.totalorder %s22, 0
    %p272 = por %p270, %p271
    %p273 = scmp.ne.s32.totalorder %s259, %s260
    %p274 = scmp.eq.s32.totalorder %s23, 3
    %p275 = por %p273, %p274
    %p277 = scmp.ne.s32.totalorder %s260, %s276
    %p278 = scmp.eq.s32.totalorder %s23, 0
    %p279 = por %p277, %p278
    %s280 = ssub.s32 %s24, %s43
    %s281 = ssub.s32 %s25, %s39
    %s282 = sor.u32 %s280, %s281
    %p283 = scmp.eq.s32.totalorder %s282, 0
    %s285 = sadd.s32 %s284, 1
    %s286 = scalar_select %p283, %s284, %s285
    %p289 = pneg %p283
    %p290 = scmp.eq.s32.totalorder %s17, 3
    %p291 = por %p289, %p290
    %p292 = scmp.ne.s32.totalorder %s284, %s287
    %p293 = scmp.eq.s32.totalorder %s17, 0
    %p294 = por %p292, %p293
    %p295 = scmp.ne.s32.totalorder %s284, %s287
    %p296 = scmp.eq.s32.totalorder %s22, 3
    %p297 = por %p295, %p296
    %p298 = scmp.ne.s32.totalorder %s287, %s288
    %p299 = scmp.eq.s32.totalorder %s22, 0
    %p300 = por %p298, %p299
    %p301 = scmp.ne.s32.totalorder %s287, %s288
    %p302 = scmp.eq.s32.totalorder %s23, 3
    %p303 = por %p301, %p302
    %p305 = scmp.ne.s32.totalorder %s288, %s304
    %p306 = scmp.eq.s32.totalorder %s23, 0
    %p307 = por %p305, %p306
    %p308 = scmp.le.s32.totalorder 1, %s17
    %p309 = scmp.lt.s32.totalorder %s17, 5
    %p310 = pnand %p308, %p309
    %p311 = pneg %p310
    // Predicated region
    $region9: #{tpu_custom_call.1} parent=5 // pred_check
      _
    $region10: #{tpu_custom_call.1} parent=5 // pred_check_branch
      %313 = sbr.rel (%p310) target = $region12
    $region11: #{tpu_custom_call.1} parent=5 // pred_region
      %s314 = ssub.s32 %s17, 1
      // Predicated region
      $region13: #{tpu_custom_call.1} parent=11 // pred_check
        %p315 = pneg %p62
      $region14: #{tpu_custom_call.1} parent=11 // pred_check_branch
        %317 = sbr.rel (%p315) target = $region16
      $region15: #{tpu_custom_call.1} parent=11 // pred_region
        %s318 = smul.u32 16, %s28
        %p319 = scmp.lt.s32.totalorder %s318, 15
        %s320 = scalar_select %p319, %s318, 15
        %s321 = smul.addr %s320, 8
        %s322 = scalar_lea.vmem %s2, %s321
        %s323 = smul.u32 16, %s28
      $region16: #{tpu_custom_call.1} parent=11 // pred_fallthru
        _
      // Predicated region
      $region17: #{tpu_custom_call.1} parent=11 // pred_check
        %p324 = pneg %p88
      $region18: #{tpu_custom_call.1} parent=11 // pred_check_branch
        %326 = sbr.rel (%p324) target = $region20
      $region19: #{tpu_custom_call.1} parent=11 // pred_region
        %s327 = smul.u32 16, %s28
        %p328 = scmp.lt.s32.totalorder %s327, 15
        %s329 = scalar_select %p328, %s327, 15
        %s330 = smul.addr %s329, 8
        %s331 = scalar_lea.vmem %s3, %s330
        %s332 = smul.u32 16, %s28
      $region20: #{tpu_custom_call.1} parent=11 // pred_fallthru
        _
      // Predicated region
      $region21: #{tpu_custom_call.1} parent=11 // pred_check
        %p333 = pneg %p126
      $region22: #{tpu_custom_call.1} parent=11 // pred_check_branch
        %335 = sbr.rel (%p333) target = $region24
      $region23: #{tpu_custom_call.1} parent=11 // pred_region
        %s336 = sld [smem:[#allocation6 + %s28]]
        %s337 = sld [smem:[#allocation7 + %s28]]
        %p338 = scmp.gt.s32.totalorder %s336, %s29
        %s339 = scalar_select %p338, %s336, %s29
        %p340 = scmp.lt.s32.totalorder %s337, %s339
        %s341 = scalar_select %p340, %s337, %s339
        %p342 = scmp.lt.s32.totalorder %s341, 0
        %s343 = scalar_select %p342, %s341, 0
        %s344 = scalar_lea.vmem %s4, %s343
        %s345 = sld [smem:[#allocation6 + %s28]]
        %s346 = sld [smem:[#allocation7 + %s28]]
        %p347 = scmp.gt.s32.totalorder %s345, %s29
        %s348 = scalar_select %p347, %s345, %s29
        %p349 = scmp.lt.s32.totalorder %s346, %s348
        %s350 = scalar_select %p349, %s346, %s348
      $region24: #{tpu_custom_call.1} parent=11 // pred_fallthru
        _
      // Predicated region
      $region25: #{tpu_custom_call.1} parent=11 // pred_check
        %p351 = pneg %p164
      $region26: #{tpu_custom_call.1} parent=11 // pred_check_branch
        %353 = sbr.rel (%p351) target = $region28
      $region27: #{tpu_custom_call.1} parent=11 // pred_region
        %s354 = sld [smem:[#allocation6 + %s28]]
        %s355 = sld [smem:[#allocation7 + %s28]]
        %p356 = scmp.gt.s32.totalorder %s354, %s29
        %s357 = scalar_select %p356, %s354, %s29
        %p358 = scmp.lt.s32.totalorder %s355, %s357
        %s359 = scalar_select %p358, %s355, %s357
        %p360 = scmp.lt.s32.totalorder %s359, 0
        %s361 = scalar_select %p360, %s359, 0
        %s362 = scalar_lea.vmem %s5, %s361
        %s363 = sld [smem:[#allocation6 + %s28]]
        %s364 = sld [smem:[#allocation7 + %s28]]
        %p365 = scmp.gt.s32.totalorder %s363, %s29
        %s366 = scalar_select %p365, %s363, %s29
        %p367 = scmp.lt.s32.totalorder %s364, %s366
        %s368 = scalar_select %p367, %s364, %s366
      $region28: #{tpu_custom_call.1} parent=11 // pred_fallthru
        _
    $region12: #{tpu_custom_call.1} parent=5 // pred_fallthru
      _
    %p369 = scmp.lt.s32.totalorder %s17, 4
    // Predicated region
    $region29: #{tpu_custom_call.1} parent=5 // pred_check
      %p370 = pneg %p369
    $region30: #{tpu_custom_call.1} parent=5 // pred_check_branch
      %372 = sbr.rel (%p370) target = $region32
    $region31: #{tpu_custom_call.1} parent=5 // pred_region
      // Predicated region
      $region33: #{tpu_custom_call.1} parent=31 // pred_check
        %p373 = pneg %p186
      $region34: #{tpu_custom_call.1} parent=31 // pred_check_branch
        %375 = sbr.rel (%p373) target = $region36
      $region35: #{tpu_custom_call.1} parent=31 // pred_region
        %s376 = smul.u32 16, %s25
        %p377 = scmp.lt.s32.totalorder %s24, 3
        %s378 = scalar_select %p377, %s24, 3
        %p379 = scmp.lt.s32.totalorder %s376, 15
        %s380 = scalar_select %p379, %s376, 15
        %s381 = smul.addr %s378, 16
        %s382 = sadd.s32 %s380, %s381
        %s383 = smul.addr %s382, 8
        %s384 = scalar_lea.vmem %s6, %s383
        %s385 = smul.u32 16, %s25
      $region36: #{tpu_custom_call.1} parent=31 // pred_fallthru
        _
      // Predicated region
      $region37: #{tpu_custom_call.1} parent=31 // pred_check
        %p386 = pneg %p226
      $region38: #{tpu_custom_call.1} parent=31 // pred_check_branch
        %388 = sbr.rel (%p386) target = $region40
      $region39: #{tpu_custom_call.1} parent=31 // pred_region
        %s389 = sld [smem:[#allocation6 + %s25]]
        %s390 = sld [smem:[#allocation7 + %s25]]
        %p391 = scmp.gt.s32.totalorder %s389, %s26
        %s392 = scalar_select %p391, %s389, %s26
        %p393 = scmp.lt.s32.totalorder %s390, %s392
        %s394 = scalar_select %p393, %s390, %s392
        %s395 = smul.u32 16, %s394
        %p396 = scmp.lt.s32.totalorder %s24, 3
        %s397 = scalar_select %p396, %s24, 3
        %p398 = scmp.lt.s32.totalorder %s395, 15
        %s399 = scalar_select %p398, %s395, 15
        %s400 = smul.addr %s397, 16
        %s401 = sadd.s32 %s399, %s400
        %s402 = smul.addr %s401, 8
        %s403 = scalar_lea.vmem %s7, %s402
        %s404 = sld [smem:[#allocation6 + %s25]]
        %s405 = sld [smem:[#allocation7 + %s25]]
        %p406 = scmp.gt.s32.totalorder %s404, %s26
        %s407 = scalar_select %p406, %s404, %s26
        %p408 = scmp.lt.s32.totalorder %s405, %s407
        %s409 = scalar_select %p408, %s405, %s407
        %s410 = smul.u32 16, %s409
      $region40: #{tpu_custom_call.1} parent=31 // pred_fallthru
        _
      // Predicated region
      $region41: #{tpu_custom_call.1} parent=31 // pred_check
        %p411 = pneg %p266
      $region42: #{tpu_custom_call.1} parent=31 // pred_check_branch
        %413 = sbr.rel (%p411) target = $region44
      $region43: #{tpu_custom_call.1} parent=31 // pred_region
        %s414 = sld [smem:[#allocation6 + %s25]]
        %s415 = sld [smem:[#allocation7 + %s25]]
        %p416 = scmp.gt.s32.totalorder %s414, %s26
        %s417 = scalar_select %p416, %s414, %s26
        %p418 = scmp.lt.s32.totalorder %s415, %s417
        %s419 = scalar_select %p418, %s415, %s417
        %s420 = smul.u32 16, %s419
        %p421 = scmp.lt.s32.totalorder %s24, 3
        %s422 = scalar_select %p421, %s24, 3
        %p423 = scmp.lt.s32.totalorder %s420, 15
        %s424 = scalar_select %p423, %s420, 15
        %s425 = smul.addr %s422, 16
        %s426 = sadd.s32 %s424, %s425
        %s427 = smul.addr %s426, 8
        %s428 = scalar_lea.vmem %s8, %s427
        %s429 = sld [smem:[#allocation6 + %s25]]
        %s430 = sld [smem:[#allocation7 + %s25]]
        %p431 = scmp.gt.s32.totalorder %s429, %s26
        %s432 = scalar_select %p431, %s429, %s26
        %p433 = scmp.lt.s32.totalorder %s430, %s432
        %s434 = scalar_select %p433, %s430, %s432
        %s435 = smul.u32 16, %s434
      $region44: #{tpu_custom_call.1} parent=31 // pred_fallthru
        _
    $region32: #{tpu_custom_call.1} parent=5 // pred_fallthru
      _
    %p436 = scmp.le.s32.totalorder 1, %s17
    %p437 = scmp.lt.s32.totalorder %s17, 5
    %p438 = pnand %p436, %p437
    %p439 = pneg %p438
    // Predicated region
    $region45: #{tpu_custom_call.1} parent=5 // pred_check
      _
    $region46: #{tpu_custom_call.1} parent=5 // pred_check_branch
      %441 = sbr.rel (%p438) target = $region48
    $region47: #{tpu_custom_call.1} parent=5 // pred_region
      %s442 = ssub.s32 %s17, 1
      %s443 = smul.u32 16, %s28
      %p444 = scmp.lt.s32.totalorder %s443, 15
      %s445 = scalar_select %p444, %s443, 15
      %s446 = smul.addr %s445, 8
      %s447 = scalar_lea.vmem %s2, %s446
      %p448 = pneg %p62
      %p449 = pneg %p59
      %s450 = smul.u32 16, %s28
      %p451 = scmp.lt.s32.totalorder %s450, 15
      %s452 = scalar_select %p451, %s450, 15
      %s453 = smul.addr %s452, 8
      %s454 = scalar_lea.vmem %s3, %s453
      %p455 = pneg %p88
      %p456 = pneg %p85
      %s457 = sld [smem:[#allocation6 + %s28]]
      %s458 = sld [smem:[#allocation7 + %s28]]
      %p459 = scmp.gt.s32.totalorder %s457, %s29
      %s460 = scalar_select %p459, %s457, %s29
      %p461 = scmp.lt.s32.totalorder %s458, %s460
      %s462 = scalar_select %p461, %s458, %s460
      %p463 = scmp.lt.s32.totalorder %s462, 0
      %s464 = scalar_select %p463, %s462, 0
      %s465 = scalar_lea.vmem %s4, %s464
      %p466 = pneg %p126
      %p467 = pneg %p123
      %s468 = sld [smem:[#allocation6 + %s28]]
      %s469 = sld [smem:[#allocation7 + %s28]]
      %p470 = scmp.gt.s32.totalorder %s468, %s29
      %s471 = scalar_select %p470, %s468, %s29
      %p472 = scmp.lt.s32.totalorder %s469, %s471
      %s473 = scalar_select %p472, %s469, %s471
      %p474 = scmp.lt.s32.totalorder %s473, 0
      %s475 = scalar_select %p474, %s473, 0
      %s476 = scalar_lea.vmem %s5, %s475
      %p477 = pneg %p164
      %p478 = pneg %p161
      %s479 = smul.u32 16, %s28
      %p480 = scmp.lt.s32.totalorder %s27, 3
      %s481 = scalar_select %p480, %s27, 3
      %p482 = scmp.lt.s32.totalorder %s479, 15
      %s483 = scalar_select %p482, %s479, 15
      %s484 = smul.addr %s481, 16
      %s485 = sadd.s32 %s483, %s484
      %s486 = smul.addr %s485, 8
      %s487 = scalar_lea.vmem %s6, %s486
      %p488 = pneg %p192
      %p489 = pneg %p189
      %s490 = sld [smem:[#allocation6 + %s28]]
      %s491 = sld [smem:[#allocation7 + %s28]]
      %p492 = scmp.gt.s32.totalorder %s490, %s29
      %s493 = scalar_select %p492, %s490, %s29
      %p494 = scmp.lt.s32.totalorder %s491, %s493
      %s495 = scalar_select %p494, %s491, %s493
      %s496 = smul.u32 16, %s495
      %p497 = scmp.lt.s32.totalorder %s27, 3
      %s498 = scalar_select %p497, %s27, 3
      %p499 = scmp.lt.s32.totalorder %s496, 15
      %s500 = scalar_select %p499, %s496, 15
      %s501 = smul.addr %s498, 16
      %s502 = sadd.s32 %s500, %s501
      %s503 = smul.addr %s502, 8
      %s504 = scalar_lea.vmem %s7, %s503
      %p505 = pneg %p232
      %p506 = pneg %p229
      %s507 = sld [smem:[#allocation6 + %s28]]
      %s508 = sld [smem:[#allocation7 + %s28]]
      %p509 = scmp.gt.s32.totalorder %s507, %s29
      %s510 = scalar_select %p509, %s507, %s29
      %p511 = scmp.lt.s32.totalorder %s508, %s510
      %s512 = scalar_select %p511, %s508, %s510
      %s513 = smul.u32 16, %s512
      %p514 = scmp.lt.s32.totalorder %s27, 3
      %s515 = scalar_select %p514, %s27, 3
      %p516 = scmp.lt.s32.totalorder %s513, 15
      %s517 = scalar_select %p516, %s513, 15
      %s518 = smul.addr %s515, 16
      %s519 = sadd.s32 %s517, %s518
      %s520 = smul.addr %s519, 8
      %s521 = scalar_lea.vmem %s8, %s520
      %p522 = pneg %p272
      %p523 = pneg %p269
      %p524 = pneg %p300
      %p525 = pneg %p297
      %s526 = smul.u32 16, %s28
      %p527 = scmp.lt.s32.totalorder %s27, 3
      %s528 = scalar_select %p527, %s27, 3
      %p529 = scmp.lt.s32.totalorder %s526, 15
      %s530 = scalar_select %p529, %s526, 15
      %s531 = smul.addr %s528, 16
      %s532 = sadd.s32 %s530, %s531
      %s533 = smul.addr %s532, 8
      %s534 = scalar_lea.vmem %s9, %s533
      %s535 = smul.u32 16, %s28
      %p536 = scmp.lt.s32.totalorder %s535, 15
      %s537 = scalar_select %p536, %s535, 15
      %s538 = smul.addr %s537, 8
      %s539 = scalar_lea.vmem %s2, %s538
      %s540 = smul.u32 16, %s28
      %s541 = smul.u32 16, %s28
      %p542 = scmp.lt.s32.totalorder %s541, 15
      %s543 = scalar_select %p542, %s541, 15
      %s544 = smul.addr %s543, 8
      %s545 = scalar_lea.vmem %s3, %s544
      %s546 = smul.u32 16, %s28
      %s547 = sld [smem:[#allocation6 + %s28]]
      %s548 = sld [smem:[#allocation7 + %s28]]
      %p549 = scmp.gt.s32.totalorder %s547, %s29
      %s550 = scalar_select %p549, %s547, %s29
      %p551 = scmp.lt.s32.totalorder %s548, %s550
      %s552 = scalar_select %p551, %s548, %s550
      %p553 = scmp.lt.s32.totalorder %s552, 0
      %s554 = scalar_select %p553, %s552, 0
      %s555 = scalar_lea.vmem %s4, %s554
      %s556 = sld [smem:[#allocation6 + %s28]]
      %s557 = sld [smem:[#allocation7 + %s28]]
      %p558 = scmp.gt.s32.totalorder %s556, %s29
      %s559 = scalar_select %p558, %s556, %s29
      %p560 = scmp.lt.s32.totalorder %s557, %s559
      %s561 = scalar_select %p560, %s557, %s559
      %s562 = sld [smem:[#allocation6 + %s28]]
      %s563 = sld [smem:[#allocation7 + %s28]]
      %p564 = scmp.gt.s32.totalorder %s562, %s29
      %s565 = scalar_select %p564, %s562, %s29
      %p566 = scmp.lt.s32.totalorder %s563, %s565
      %s567 = scalar_select %p566, %s563, %s565
      %p568 = scmp.lt.s32.totalorder %s567, 0
      %s569 = scalar_select %p568, %s567, 0
      %s570 = scalar_lea.vmem %s5, %s569
      %s571 = sld [smem:[#allocation6 + %s28]]
      %s572 = sld [smem:[#allocation7 + %s28]]
      %p573 = scmp.gt.s32.totalorder %s571, %s29
      %s574 = scalar_select %p573, %s571, %s29
      %p575 = scmp.lt.s32.totalorder %s572, %s574
      %s576 = scalar_select %p575, %s572, %s574
      %s577 = smul.u32 16, %s28
      %p578 = scmp.lt.s32.totalorder %s27, 3
      %s579 = scalar_select %p578, %s27, 3
      %p580 = scmp.lt.s32.totalorder %s577, 15
      %s581 = scalar_select %p580, %s577, 15
      %s582 = smul.addr %s579, 16
      %s583 = sadd.s32 %s581, %s582
      %s584 = smul.addr %s583, 8
      %s585 = scalar_lea.vmem %s6, %s584
      %s586 = smul.u32 16, %s28
      %s587 = sld [smem:[#allocation6 + %s28]]
      %s588 = sld [smem:[#allocation7 + %s28]]
      %p589 = scmp.gt.s32.totalorder %s587, %s29
      %s590 = scalar_select %p589, %s587, %s29
      %p591 = scmp.lt.s32.totalorder %s588, %s590
      %s592 = scalar_select %p591, %s588, %s590
      %s593 = smul.u32 16, %s592
      %p594 = scmp.lt.s32.totalorder %s27, 3
      %s595 = scalar_select %p594, %s27, 3
      %p596 = scmp.lt.s32.totalorder %s593, 15
      %s597 = scalar_select %p596, %s593, 15
      %s598 = smul.addr %s595, 16
      %s599 = sadd.s32 %s597, %s598
      %s600 = smul.addr %s599, 8
      %s601 = scalar_lea.vmem %s7, %s600
      %s602 = sld [smem:[#allocation6 + %s28]]
      %s603 = sld [smem:[#allocation7 + %s28]]
      %p604 = scmp.gt.s32.totalorder %s602, %s29
      %s605 = scalar_select %p604, %s602, %s29
      %p606 = scmp.lt.s32.totalorder %s603, %s605
      %s607 = scalar_select %p606, %s603, %s605
      %s608 = smul.u32 16, %s607
      %s609 = sld [smem:[#allocation6 + %s28]]
      %s610 = sld [smem:[#allocation7 + %s28]]
      %p611 = scmp.gt.s32.totalorder %s609, %s29
      %s612 = scalar_select %p611, %s609, %s29
      %p613 = scmp.lt.s32.totalorder %s610, %s612
      %s614 = scalar_select %p613, %s610, %s612
      %s615 = smul.u32 16, %s614
      %p616 = scmp.lt.s32.totalorder %s27, 3
      %s617 = scalar_select %p616, %s27, 3
      %p618 = scmp.lt.s32.totalorder %s615, 15
      %s619 = scalar_select %p618, %s615, 15
      %s620 = smul.addr %s617, 16
      %s621 = sadd.s32 %s619, %s620
      %s622 = smul.addr %s621, 8
      %s623 = scalar_lea.vmem %s8, %s622
      %s624 = sld [smem:[#allocation6 + %s28]]
      %s625 = sld [smem:[#allocation7 + %s28]]
      %p626 = scmp.gt.s32.totalorder %s624, %s29
      %s627 = scalar_select %p626, %s624, %s29
      %p628 = scmp.lt.s32.totalorder %s625, %s627
      %s629 = scalar_select %p628, %s625, %s627
      %s630 = smul.u32 16, %s629
      %s631 = smul.u32 16, %s28
      %p632 = scmp.lt.s32.totalorder %s27, 3
      %s633 = scalar_select %p632, %s27, 3
      %p634 = scmp.lt.s32.totalorder %s631, 15
      %s635 = scalar_select %p634, %s631, 15
      %s636 = smul.addr %s633, 16
      %s637 = sadd.s32 %s635, %s636
      %s638 = smul.addr %s637, 8
      %s639 = scalar_lea.vmem %s9, %s638
      %s640 = smul.u32 16, %s28
      %p641 = scmp.eq.s32.totalorder %s29, 0
      // Predicated region
      $region49: #{tpu_custom_call.1} parent=47 // pred_check
        %p642 = pneg %p641
      $region50: #{tpu_custom_call.1} parent=47 // pred_check_branch
        %644 = sbr.rel (%p642) target = $region52
      $region51: #{tpu_custom_call.1} parent=47 // pred_region
        %vm645 = vcmask 7168
        %646 = vst.msk [vmem:[#allocation2] sm:$0xff] %vm645, -1e+30
        %647 = vst.msk [vmem:[#allocation2 + $0x8] sm:$0xff] %vm645, -1e+30
        %648 = vst.msk [vmem:[#allocation2 + $0x10] sm:$0xff] %vm645, -1e+30
        %649 = vst.msk [vmem:[#allocation2 + $0x18] sm:$0xff] %vm645, -1e+30
        %650 = vst.msk [vmem:[#allocation2 + $0x20] sm:$0xff] %vm645, -1e+30
        %651 = vst.msk [vmem:[#allocation2 + $0x28] sm:$0xff] %vm645, -1e+30
        %652 = vst.msk [vmem:[#allocation2 + $0x30] sm:$0xff] %vm645, -1e+30
        %653 = vst.msk [vmem:[#allocation2 + $0x38] sm:$0xff] %vm645, -1e+30
        %654 = vst.msk [vmem:[#allocation2 + $0x40] sm:$0xff] %vm645, -1e+30
        %655 = vst.msk [vmem:[#allocation2 + $0x48] sm:$0xff] %vm645, -1e+30
        %656 = vst.msk [vmem:[#allocation2 + $0x50] sm:$0xff] %vm645, -1e+30
        %657 = vst.msk [vmem:[#allocation2 + $0x58] sm:$0xff] %vm645, -1e+30
        %658 = vst.msk [vmem:[#allocation2 + $0x60] sm:$0xff] %vm645, -1e+30
        %659 = vst.msk [vmem:[#allocation2 + $0x68] sm:$0xff] %vm645, -1e+30
        %660 = vst.msk [vmem:[#allocation2 + $0x70] sm:$0xff] %vm645, -1e+30
        %661 = vst.msk [vmem:[#allocation2 + $0x78] sm:$0xff] %vm645, -1e+30
        %662 = vst.msk [vmem:[#allocation3] sm:$0xff] %vm645, 0.0
        %663 = vst.msk [vmem:[#allocation3 + $0x8] sm:$0xff] %vm645, 0.0
        %664 = vst.msk [vmem:[#allocation3 + $0x10] sm:$0xff] %vm645, 0.0
        %665 = vst.msk [vmem:[#allocation3 + $0x18] sm:$0xff] %vm645, 0.0
        %666 = vst.msk [vmem:[#allocation3 + $0x20] sm:$0xff] %vm645, 0.0
        %667 = vst.msk [vmem:[#allocation3 + $0x28] sm:$0xff] %vm645, 0.0
        %668 = vst.msk [vmem:[#allocation3 + $0x30] sm:$0xff] %vm645, 0.0
        %669 = vst.msk [vmem:[#allocation3 + $0x38] sm:$0xff] %vm645, 0.0
        %670 = vst.msk [vmem:[#allocation3 + $0x40] sm:$0xff] %vm645, 0.0
        %671 = vst.msk [vmem:[#allocation3 + $0x48] sm:$0xff] %vm645, 0.0
        %672 = vst.msk [vmem:[#allocation3 + $0x50] sm:$0xff] %vm645, 0.0
        %673 = vst.msk [vmem:[#allocation3 + $0x58] sm:$0xff] %vm645, 0.0
        %674 = vst.msk [vmem:[#allocation3 + $0x60] sm:$0xff] %vm645, 0.0
        %675 = vst.msk [vmem:[#allocation3 + $0x68] sm:$0xff] %vm645, 0.0
        %676 = vst.msk [vmem:[#allocation3 + $0x70] sm:$0xff] %vm645, 0.0
        %677 = vst.msk [vmem:[#allocation3 + $0x78] sm:$0xff] %vm645, 0.0
        %vm678 = vcmask 523264
        %679 = vst.msk [vmem:[#allocation4] sm:$0xff] %vm678, 0.0
        %680 = vst.msk [vmem:[#allocation4 + $0x8] sm:$0xff] %vm678, 0.0
        %681 = vst.msk [vmem:[#allocation4 + $0x10] sm:$0xff] %vm678, 0.0
        %682 = vst.msk [vmem:[#allocation4 + $0x18] sm:$0xff] %vm678, 0.0
        %683 = vst.msk [vmem:[#allocation4 + $0x20] sm:$0xff] %vm678, 0.0
        %684 = vst.msk [vmem:[#allocation4 + $0x28] sm:$0xff] %vm678, 0.0
        %685 = vst.msk [vmem:[#allocation4 + $0x30] sm:$0xff] %vm678, 0.0
        %686 = vst.msk [vmem:[#allocation4 + $0x38] sm:$0xff] %vm678, 0.0
        %687 = vst.msk [vmem:[#allocation4 + $0x40] sm:$0xff] %vm678, 0.0
        %688 = vst.msk [vmem:[#allocation4 + $0x48] sm:$0xff] %vm678, 0.0
        %689 = vst.msk [vmem:[#allocation4 + $0x50] sm:$0xff] %vm678, 0.0
        %690 = vst.msk [vmem:[#allocation4 + $0x58] sm:$0xff] %vm678, 0.0
        %691 = vst.msk [vmem:[#allocation4 + $0x60] sm:$0xff] %vm678, 0.0
        %692 = vst.msk [vmem:[#allocation4 + $0x68] sm:$0xff] %vm678, 0.0
        %693 = vst.msk [vmem:[#allocation4 + $0x70] sm:$0xff] %vm678, 0.0
        %694 = vst.msk [vmem:[#allocation4 + $0x78] sm:$0xff] %vm678, 0.0
      $region52: #{tpu_custom_call.1} parent=47 // pred_fallthru
        _
      %s695 = sld [smem:[#allocation6 + %s28]]
      %s696 = sld [smem:[#allocation7 + %s28]]
      %p697 = scmp.ge.s32.totalorder %s29, %s695
      %p698 = scmp.le.s32.totalorder %s29, %s696
      %p699 = pnand %p697, %p698
      %p700 = pneg %p699
      // Predicated region
      $region53: #{tpu_custom_call.1} parent=47 // pred_check
        _
      $region54: #{tpu_custom_call.1} parent=47 // pred_check_branch
        %702 = sbr.rel (%p699) target = $region56
      $region55: #{tpu_custom_call.1} parent=47 // pred_region
        %v703 = vld [vmem:[%s585] sm:$0xff]
        %v704 = vld [vmem:[%s585 + $0x8] sm:$0xff]
        %v705 = vld [vmem:[%s585 + $0x10] sm:$0xff]
        %v706 = vld [vmem:[%s585 + $0x18] sm:$0xff]
        %v707 = vld [vmem:[%s585 + $0x20] sm:$0xff]
        %v708 = vld [vmem:[%s585 + $0x28] sm:$0xff]
        %v709 = vld [vmem:[%s585 + $0x30] sm:$0xff]
        %v710 = vld [vmem:[%s585 + $0x38] sm:$0xff]
        %v711 = vld [vmem:[%s585 + $0x40] sm:$0xff]
        %v712 = vld [vmem:[%s585 + $0x48] sm:$0xff]
        %v713 = vld [vmem:[%s585 + $0x50] sm:$0xff]
        %v714 = vld [vmem:[%s585 + $0x58] sm:$0xff]
        %v715 = vld [vmem:[%s585 + $0x60] sm:$0xff]
        %v716 = vld [vmem:[%s585 + $0x68] sm:$0xff]
        %v717 = vld [vmem:[%s585 + $0x70] sm:$0xff]
        %v718 = vld [vmem:[%s585 + $0x78] sm:$0xff]
        %v719 = vld [vmem:[%s601] sm:$0xff]
        %v720 = vld [vmem:[%s601 + $0x8] sm:$0xff]
        %v721 = vld [vmem:[%s601 + $0x10] sm:$0xff]
        %v722 = vld [vmem:[%s601 + $0x18] sm:$0xff]
        %v723 = vld [vmem:[%s601 + $0x20] sm:$0xff]
        %v724 = vld [vmem:[%s601 + $0x28] sm:$0xff]
        %v725 = vld [vmem:[%s601 + $0x30] sm:$0xff]
        %v726 = vld [vmem:[%s601 + $0x38] sm:$0xff]
        %v727 = vld [vmem:[%s601 + $0x40] sm:$0xff]
        %v728 = vld [vmem:[%s601 + $0x48] sm:$0xff]
        %v729 = vld [vmem:[%s601 + $0x50] sm:$0xff]
        %v730 = vld [vmem:[%s601 + $0x58] sm:$0xff]
        %v731 = vld [vmem:[%s601 + $0x60] sm:$0xff]
        %v732 = vld [vmem:[%s601 + $0x68] sm:$0xff]
        %v733 = vld [vmem:[%s601 + $0x70] sm:$0xff]
        %v734 = vld [vmem:[%s601 + $0x78] sm:$0xff]
        %v735 = vld [vmem:[%s623] sm:$0xff]
        %v736 = vld [vmem:[%s623 + $0x8] sm:$0xff]
        %v737 = vld [vmem:[%s623 + $0x10] sm:$0xff]
        %v738 = vld [vmem:[%s623 + $0x18] sm:$0xff]
        %v739 = vld [vmem:[%s623 + $0x20] sm:$0xff]
        %v740 = vld [vmem:[%s623 + $0x28] sm:$0xff]
        %v741 = vld [vmem:[%s623 + $0x30] sm:$0xff]
        %v742 = vld [vmem:[%s623 + $0x38] sm:$0xff]
        %v743 = vld [vmem:[%s623 + $0x40] sm:$0xff]
        %v744 = vld [vmem:[%s623 + $0x48] sm:$0xff]
        %v745 = vld [vmem:[%s623 + $0x50] sm:$0xff]
        %v746 = vld [vmem:[%s623 + $0x58] sm:$0xff]
        %v747 = vld [vmem:[%s623 + $0x60] sm:$0xff]
        %v748 = vld [vmem:[%s623 + $0x68] sm:$0xff]
        %v749 = vld [vmem:[%s623 + $0x70] sm:$0xff]
        %v750 = vld [vmem:[%s623 + $0x78] sm:$0xff]
        %v751 = vmul.f32 %v703, 0.125
        %v752 = vmul.f32 %v704, 0.125
        %v753 = vmul.f32 %v705, 0.125
        %v754 = vmul.f32 %v706, 0.125
        %v755 = vmul.f32 %v707, 0.125
        %v756 = vmul.f32 %v708, 0.125
        %v757 = vmul.f32 %v709, 0.125
        %v758 = vmul.f32 %v710, 0.125
        %v759 = vmul.f32 %v711, 0.125
        %v760 = vmul.f32 %v712, 0.125
        %v761 = vmul.f32 %v713, 0.125
        %v762 = vmul.f32 %v714, 0.125
        %v763 = vmul.f32 %v715, 0.125
        %v764 = vmul.f32 %v716, 0.125
        %v765 = vmul.f32 %v717, 0.125
        %v766 = vmul.f32 %v718, 0.125
        %vm767 = vcmask 523264
        %v769 = vsel %vm767, %v751, 0
        %v772 = vsel %vm767, %v752, 0
        %v775 = vsel %vm767, %v753, 0
        %v778 = vsel %vm767, %v754, 0
        %v781 = vsel %vm767, %v755, 0
        %v784 = vsel %vm767, %v756, 0
        %v787 = vsel %vm767, %v757, 0
        %v790 = vsel %vm767, %v758, 0
        %v793 = vsel %vm767, %v759, 0
        %v796 = vsel %vm767, %v760, 0
        %v799 = vsel %vm767, %v761, 0
        %v802 = vsel %vm767, %v762, 0
        %v805 = vsel %vm767, %v763, 0
        %v808 = vsel %vm767, %v764, 0
        %v811 = vsel %vm767, %v765, 0
        %v814 = vsel %vm767, %v766, 0
        %v817 = vsel %vm767, %v719, 0
        %v820 = vsel %vm767, %v720, 0
        %v823 = vsel %vm767, %v721, 0
        %v826 = vsel %vm767, %v722, 0
        %v829 = vsel %vm767, %v723, 0
        %v832 = vsel %vm767, %v724, 0
        %v835 = vsel %vm767, %v725, 0
        %v838 = vsel %vm767, %v726, 0
        %v841 = vsel %vm767, %v727, 0
        %v844 = vsel %vm767, %v728, 0
        %v847 = vsel %vm767, %v729, 0
        %v850 = vsel %vm767, %v730, 0
        %v853 = vsel %vm767, %v731, 0
        %v856 = vsel %vm767, %v732, 0
        %v859 = vsel %vm767, %v733, 0
        %v862 = vsel %vm767, %v734, 0
        %864 = vmatprep.subr.mxu0 0.0
        %v865 = vand.u32 %v862, 4294901760
        %866 = vmatpush1.xpose.msra.mxu0 %v865
        %867 = vmatprep.subr.mxu0 0.0
        %v868 = vand.u32 %v859, 4294901760
        %869 = vmatpush1.xpose.msra.mxu0 %v868
        %870 = vmatprep.subr.mxu0 0.0
        %v871 = vand.u32 %v856, 4294901760
        %872 = vmatpush1.xpose.msra.mxu0 %v871
        %873 = vmatprep.subr.mxu0 0.0
        %v874 = vand.u32 %v853, 4294901760
        %875 = vmatpush1.xpose.msra.mxu0 %v874
        %876 = vmatprep.subr.mxu0 0.0
        %v877 = vand.u32 %v850, 4294901760
        %878 = vmatpush1.xpose.msra.mxu0 %v877
        %879 = vmatprep.subr.mxu0 0.0
        %v880 = vand.u32 %v847, 4294901760
        %881 = vmatpush1.xpose.msra.mxu0 %v880
        %882 = vmatprep.subr.mxu0 0.0
        %v883 = vand.u32 %v844, 4294901760
        %884 = vmatpush1.xpose.msra.mxu0 %v883
        %885 = vmatprep.subr.mxu0 0.0
        %v886 = vand.u32 %v841, 4294901760
        %887 = vmatpush1.xpose.msra.mxu0 %v886
        %888 = vmatprep.subr.mxu0 0.0
        %v889 = vand.u32 %v838, 4294901760
        %890 = vmatpush1.xpose.msra.mxu0 %v889
        %891 = vmatprep.subr.mxu0 0.0
        %v892 = vand.u32 %v835, 4294901760
        %893 = vmatpush1.xpose.msra.mxu0 %v892
        %894 = vmatprep.subr.mxu0 0.0
        %v895 = vand.u32 %v832, 4294901760
        %896 = vmatpush1.xpose.msra.mxu0 %v895
        %897 = vmatprep.subr.mxu0 0.0
        %v898 = vand.u32 %v829, 4294901760
        %899 = vmatpush1.xpose.msra.mxu0 %v898
        %900 = vmatprep.subr.mxu0 0.0
        %v901 = vand.u32 %v826, 4294901760
        %902 = vmatpush1.xpose.msra.mxu0 %v901
        %903 = vmatprep.subr.mxu0 0.0
        %v904 = vand.u32 %v823, 4294901760
        %905 = vmatpush1.xpose.msra.mxu0 %v904
        %906 = vmatprep.subr.mxu0 0.0
        %v907 = vand.u32 %v820, 4294901760
        %908 = vmatpush1.xpose.msra.mxu0 %v907
        %909 = vmatprep.subr.mxu0 0.0
        %v910 = vand.u32 %v817, 4294901760
        %911 = vmatpush1.xpose.msra.mxu0 %v910
        %912 = vmatprep.subr.mxu0 0.0
        %913 = vmatpush2.xpose.msra.mxu0 0.0
        %914 = vmatprep.subr.mxu0 0.0
        %915 = vmatpush2.xpose.msra.mxu0 0.0
        %916 = vmatprep.subr.mxu0 0.0
        %917 = vmatpush2.xpose.msra.mxu0 0.0
        %918 = vmatprep.subr.mxu0 0.0
        %919 = vmatpush2.xpose.msra.mxu0 0.0
        %920 = vmatprep.subr.mxu0 0.0
        %921 = vmatpush2.xpose.msra.mxu0 0.0
        %922 = vmatprep.subr.mxu0 0.0
        %923 = vmatpush2.xpose.msra.mxu0 0.0
        %924 = vmatprep.subr.mxu0 0.0
        %925 = vmatpush2.xpose.msra.mxu0 0.0
        %926 = vmatprep.subr.mxu0 0.0
        %927 = vmatpush2.xpose.msra.mxu0 0.0
        %928 = vmatprep.subr.mxu0 0.0
        %929 = vmatpush2.xpose.msra.mxu0 0.0
        %930 = vmatprep.subr.mxu0 0.0
        %931 = vmatpush2.xpose.msra.mxu0 0.0
        %932 = vmatprep.subr.mxu0 0.0
        %933 = vmatpush2.xpose.msra.mxu0 0.0
        %934 = vmatprep.subr.mxu0 0.0
        %935 = vmatpush2.xpose.msra.mxu0 0.0
        %936 = vmatprep.subr.mxu0 0.0
        %937 = vmatpush2.xpose.msra.mxu0 0.0
        %938 = vmatprep.subr.mxu0 0.0
        %939 = vmatpush2.xpose.msra.mxu0 0.0
        %940 = vmatprep.subr.mxu0 0.0
        %941 = vmatpush2.xpose.msra.mxu0 0.0
        %942 = vmatprep.subr.mxu0 0.0
        %943 = vmatpush2.xpose.msra.mxu0 0.0
        %944 = vmatprep.mubr.f32.mxu0 0.0
        %v945 = vand.u32 %v769, 4294901760
        %v946 = vsub.f32 %v769, %v945
        %v947 = vand.u32 %v946, 4294901760
        %v948 = vsub.f32 %v946, %v947
        %v949 = vand.u32 %v948, 4294901760
        %950 = vmatmul.mubr.f32.gmra.mxu0 %v949
        %v951 = vpop.f32.mrf.mxu0
        %v952 = vadd.f32 0.0, %v951
        %v953 = vpop.f32.mrf.mxu0
        %954 = vmatprep.mubr.f32.mxu0 0.0
        %v955 = vand.u32 %v772, 4294901760
        %v956 = vsub.f32 %v772, %v955
        %v957 = vand.u32 %v956, 4294901760
        %v958 = vsub.f32 %v956, %v957
        %v959 = vand.u32 %v958, 4294901760
        %960 = vmatmul.mubr.f32.gmra.mxu0 %v959
        %v961 = vpop.f32.mrf.mxu0
        %v962 = vadd.f32 0.0, %v961
        %v963 = vpop.f32.mrf.mxu0
        %964 = vmatprep.mubr.f32.mxu0 0.0
        %v965 = vand.u32 %v775, 4294901760
        %v966 = vsub.f32 %v775, %v965
        %v967 = vand.u32 %v966, 4294901760
        %v968 = vsub.f32 %v966, %v967
        %v969 = vand.u32 %v968, 4294901760
        %970 = vmatmul.mubr.f32.gmra.mxu0 %v969
        %v971 = vpop.f32.mrf.mxu0
        %v972 = vadd.f32 0.0, %v971
        %v973 = vpop.f32.mrf.mxu0
        %974 = vmatprep.mubr.f32.mxu0 0.0
        %v975 = vand.u32 %v778, 4294901760
        %v976 = vsub.f32 %v778, %v975
        %v977 = vand.u32 %v976, 4294901760
        %v978 = vsub.f32 %v976, %v977
        %v979 = vand.u32 %v978, 4294901760
        %980 = vmatmul.mubr.f32.gmra.mxu0 %v979
        %v981 = vpop.f32.mrf.mxu0
        %v982 = vadd.f32 0.0, %v981
        %v983 = vpop.f32.mrf.mxu0
        %984 = vmatprep.mubr.f32.mxu0 0.0
        %v985 = vand.u32 %v781, 4294901760
        %v986 = vsub.f32 %v781, %v985
        %v987 = vand.u32 %v986, 4294901760
        %v988 = vsub.f32 %v986, %v987
        %v989 = vand.u32 %v988, 4294901760
        %990 = vmatmul.mubr.f32.gmra.mxu0 %v989
        %v991 = vpop.f32.mrf.mxu0
        %v992 = vadd.f32 0.0, %v991
        %v993 = vpop.f32.mrf.mxu0
        %994 = vmatprep.mubr.f32.mxu0 0.0
        %v995 = vand.u32 %v784, 4294901760
        %v996 = vsub.f32 %v784, %v995
        %v997 = vand.u32 %v996, 4294901760
        %v998 = vsub.f32 %v996, %v997
        %v999 = vand.u32 %v998, 4294901760
        %1000 = vmatmul.mubr.f32.gmra.mxu0 %v999
        %v1001 = vpop.f32.mrf.mxu0
        %v1002 = vadd.f32 0.0, %v1001
        %v1003 = vpop.f32.mrf.mxu0
        %1004 = vmatprep.mubr.f32.mxu0 0.0
        %v1005 = vand.u32 %v787, 4294901760
        %v1006 = vsub.f32 %v787, %v1005
        %v1007 = vand.u32 %v1006, 4294901760
        %v1008 = vsub.f32 %v1006, %v1007
        %v1009 = vand.u32 %v1008, 4294901760
        %1010 = vmatmul.mubr.f32.gmra.mxu0 %v1009
        %v1011 = vpop.f32.mrf.mxu0
        %v1012 = vadd.f32 0.0, %v1011
        %v1013 = vpop.f32.mrf.mxu0
        %1014 = vmatprep.mubr.f32.mxu0 0.0
        %v1015 = vand.u32 %v790, 4294901760
        %v1016 = vsub.f32 %v790, %v1015
        %v1017 = vand.u32 %v1016, 4294901760
        %v1018 = vsub.f32 %v1016, %v1017
        %v1019 = vand.u32 %v1018, 4294901760
        %1020 = vmatmul.mubr.f32.gmra.mxu0 %v1019
        %v1021 = vpop.f32.mrf.mxu0
        %v1022 = vadd.f32 0.0, %v1021
        %v1023 = vpop.f32.mrf.mxu0
        %1024 = vmatprep.mubr.f32.mxu0 0.0
        %v1025 = vand.u32 %v793, 4294901760
        %v1026 = vsub.f32 %v793, %v1025
        %v1027 = vand.u32 %v1026, 4294901760
        %v1028 = vsub.f32 %v1026, %v1027
        %v1029 = vand.u32 %v1028, 4294901760
        %1030 = vmatmul.mubr.f32.gmra.mxu0 %v1029
        %v1031 = vpop.f32.mrf.mxu0
        %v1032 = vadd.f32 0.0, %v1031
        %v1033 = vpop.f32.mrf.mxu0
        %1034 = vmatprep.mubr.f32.mxu0 0.0
        %v1035 = vand.u32 %v796, 4294901760
        %v1036 = vsub.f32 %v796, %v1035
        %v1037 = vand.u32 %v1036, 4294901760
        %v1038 = vsub.f32 %v1036, %v1037
        %v1039 = vand.u32 %v1038, 4294901760
        %1040 = vmatmul.mubr.f32.gmra.mxu0 %v1039
        %v1041 = vpop.f32.mrf.mxu0
        %v1042 = vadd.f32 0.0, %v1041
        %v1043 = vpop.f32.mrf.mxu0
        %1044 = vmatprep.mubr.f32.mxu0 0.0
        %v1045 = vand.u32 %v799, 4294901760
        %v1046 = vsub.f32 %v799, %v1045
        %v1047 = vand.u32 %v1046, 4294901760
        %v1048 = vsub.f32 %v1046, %v1047
        %v1049 = vand.u32 %v1048, 4294901760
        %1050 = vmatmul.mubr.f32.gmra.mxu0 %v1049
        %v1051 = vpop.f32.mrf.mxu0
        %v1052 = vadd.f32 0.0, %v1051
        %v1053 = vpop.f32.mrf.mxu0
        %1054 = vmatprep.mubr.f32.mxu0 0.0
        %v1055 = vand.u32 %v802, 4294901760
        %v1056 = vsub.f32 %v802, %v1055
        %v1057 = vand.u32 %v1056, 4294901760
        %v1058 = vsub.f32 %v1056, %v1057
        %v1059 = vand.u32 %v1058, 4294901760
        %1060 = vmatmul.mubr.f32.gmra.mxu0 %v1059
        %v1061 = vpop.f32.mrf.mxu0
        %v1062 = vadd.f32 0.0, %v1061
        %v1063 = vpop.f32.mrf.mxu0
        %1064 = vmatprep.mubr.f32.mxu0 0.0
        %v1065 = vand.u32 %v805, 4294901760
        %v1066 = vsub.f32 %v805, %v1065
        %v1067 = vand.u32 %v1066, 4294901760
        %v1068 = vsub.f32 %v1066, %v1067
        %v1069 = vand.u32 %v1068, 4294901760
        %1070 = vmatmul.mubr.f32.gmra.mxu0 %v1069
        %v1071 = vpop.f32.mrf.mxu0
        %v1072 = vadd.f32 0.0, %v1071
        %v1073 = vpop.f32.mrf.mxu0
        %1074 = vmatprep.mubr.f32.mxu0 0.0
        %v1075 = vand.u32 %v808, 4294901760
        %v1076 = vsub.f32 %v808, %v1075
        %v1077 = vand.u32 %v1076, 4294901760
        %v1078 = vsub.f32 %v1076, %v1077
        %v1079 = vand.u32 %v1078, 4294901760
        %1080 = vmatmul.mubr.f32.gmra.mxu0 %v1079
        %v1081 = vpop.f32.mrf.mxu0
        %v1082 = vadd.f32 0.0, %v1081
        %v1083 = vpop.f32.mrf.mxu0
        %1084 = vmatprep.mubr.f32.mxu0 0.0
        %v1085 = vand.u32 %v811, 4294901760
        %v1086 = vsub.f32 %v811, %v1085
        %v1087 = vand.u32 %v1086, 4294901760
        %v1088 = vsub.f32 %v1086, %v1087
        %v1089 = vand.u32 %v1088, 4294901760
        %1090 = vmatmul.mubr.f32.gmra.mxu0 %v1089
        %v1091 = vpop.f32.mrf.mxu0
        %v1092 = vadd.f32 0.0, %v1091
        %v1093 = vpop.f32.mrf.mxu0
        %1094 = vmatprep.mubr.f32.mxu0 0.0
        %v1095 = vand.u32 %v814, 4294901760
        %v1096 = vsub.f32 %v814, %v1095
        %v1097 = vand.u32 %v1096, 4294901760
        %v1098 = vsub.f32 %v1096, %v1097
        %v1099 = vand.u32 %v1098, 4294901760
        %1100 = vmatmul.mubr.f32.gmra.mxu0 %v1099
        %v1101 = vpop.f32.mrf.mxu0
        %v1102 = vadd.f32 0.0, %v1101
        %v1103 = vpop.f32.mrf.mxu0
        %1104 = vdwg.mxu0
        %1105 = vmatprep.subr.mxu0 0.0
        %v1106 = vand.u32 %v862, 4294901760
        %v1107 = vsub.f32 %v862, %v1106
        %v1108 = vand.u32 %v1107, 4294901760
        %v1109 = vsub.f32 %v1107, %v1108
        %v1110 = vand.u32 %v1109, 4294901760
        %1111 = vmatpush1.xpose.msra.mxu0 %v1110
        %1112 = vmatprep.subr.mxu0 0.0
        %v1113 = vand.u32 %v859, 4294901760
        %v1114 = vsub.f32 %v859, %v1113
        %v1115 = vand.u32 %v1114, 4294901760
        %v1116 = vsub.f32 %v1114, %v1115
        %v1117 = vand.u32 %v1116, 4294901760
        %1118 = vmatpush1.xpose.msra.mxu0 %v1117
        %1119 = vmatprep.subr.mxu0 0.0
        %v1120 = vand.u32 %v856, 4294901760
        %v1121 = vsub.f32 %v856, %v1120
        %v1122 = vand.u32 %v1121, 4294901760
        %v1123 = vsub.f32 %v1121, %v1122
        %v1124 = vand.u32 %v1123, 4294901760
        %1125 = vmatpush1.xpose.msra.mxu0 %v1124
        %1126 = vmatprep.subr.mxu0 0.0
        %v1127 = vand.u32 %v853, 4294901760
        %v1128 = vsub.f32 %v853, %v1127
        %v1129 = vand.u32 %v1128, 4294901760
        %v1130 = vsub.f32 %v1128, %v1129
        %v1131 = vand.u32 %v1130, 4294901760
        %1132 = vmatpush1.xpose.msra.mxu0 %v1131
        %1133 = vmatprep.subr.mxu0 0.0
        %v1134 = vand.u32 %v850, 4294901760
        %v1135 = vsub.f32 %v850, %v1134
        %v1136 = vand.u32 %v1135, 4294901760
        %v1137 = vsub.f32 %v1135, %v1136
        %v1138 = vand.u32 %v1137, 4294901760
        %1139 = vmatpush1.xpose.msra.mxu0 %v1138
        %1140 = vmatprep.subr.mxu0 0.0
        %v1141 = vand.u32 %v847, 4294901760
        %v1142 = vsub.f32 %v847, %v1141
        %v1143 = vand.u32 %v1142, 4294901760
        %v1144 = vsub.f32 %v1142, %v1143
        %v1145 = vand.u32 %v1144, 4294901760
        %1146 = vmatpush1.xpose.msra.mxu0 %v1145
        %1147 = vmatprep.subr.mxu0 0.0
        %v1148 = vand.u32 %v844, 4294901760
        %v1149 = vsub.f32 %v844, %v1148
        %v1150 = vand.u32 %v1149, 4294901760
        %v1151 = vsub.f32 %v1149, %v1150
        %v1152 = vand.u32 %v1151, 4294901760
        %1153 = vmatpush1.xpose.msra.mxu0 %v1152
        %1154 = vmatprep.subr.mxu0 0.0
        %v1155 = vand.u32 %v841, 4294901760
        %v1156 = vsub.f32 %v841, %v1155
        %v1157 = vand.u32 %v1156, 4294901760
        %v1158 = vsub.f32 %v1156, %v1157
        %v1159 = vand.u32 %v1158, 4294901760
        %1160 = vmatpush1.xpose.msra.mxu0 %v1159
        %1161 = vmatprep.subr.mxu0 0.0
        %v1162 = vand.u32 %v838, 4294901760
        %v1163 = vsub.f32 %v838, %v1162
        %v1164 = vand.u32 %v1163, 4294901760
        %v1165 = vsub.f32 %v1163, %v1164
        %v1166 = vand.u32 %v1165, 4294901760
        %1167 = vmatpush1.xpose.msra.mxu0 %v1166
        %1168 = vmatprep.subr.mxu0 0.0
        %v1169 = vand.u32 %v835, 4294901760
        %v1170 = vsub.f32 %v835, %v1169
        %v1171 = vand.u32 %v1170, 4294901760
        %v1172 = vsub.f32 %v1170, %v1171
        %v1173 = vand.u32 %v1172, 4294901760
        %1174 = vmatpush1.xpose.msra.mxu0 %v1173
        %1175 = vmatprep.subr.mxu0 0.0
        %v1176 = vand.u32 %v832, 4294901760
        %v1177 = vsub.f32 %v832, %v1176
        %v1178 = vand.u32 %v1177, 4294901760
        %v1179 = vsub.f32 %v1177, %v1178
        %v1180 = vand.u32 %v1179, 4294901760
        %1181 = vmatpush1.xpose.msra.mxu0 %v1180
        %1182 = vmatprep.subr.mxu0 0.0
        %v1183 = vand.u32 %v829, 4294901760
        %v1184 = vsub.f32 %v829, %v1183
        %v1185 = vand.u32 %v1184, 4294901760
        %v1186 = vsub.f32 %v1184, %v1185
        %v1187 = vand.u32 %v1186, 4294901760
        %1188 = vmatpush1.xpose.msra.mxu0 %v1187
        %1189 = vmatprep.subr.mxu0 0.0
        %v1190 = vand.u32 %v826, 4294901760
        %v1191 = vsub.f32 %v826, %v1190
        %v1192 = vand.u32 %v1191, 4294901760
        %v1193 = vsub.f32 %v1191, %v1192
        %v1194 = vand.u32 %v1193, 4294901760
        %1195 = vmatpush1.xpose.msra.mxu0 %v1194
        %1196 = vmatprep.subr.mxu0 0.0
        %v1197 = vand.u32 %v823, 4294901760
        %v1198 = vsub.f32 %v823, %v1197
        %v1199 = vand.u32 %v1198, 4294901760
        %v1200 = vsub.f32 %v1198, %v1199
        %v1201 = vand.u32 %v1200, 4294901760
        %1202 = vmatpush1.xpose.msra.mxu0 %v1201
        %1203 = vmatprep.subr.mxu0 0.0
        %v1204 = vand.u32 %v820, 4294901760
        %v1205 = vsub.f32 %v820, %v1204
        %v1206 = vand.u32 %v1205, 4294901760
        %v1207 = vsub.f32 %v1205, %v1206
        %v1208 = vand.u32 %v1207, 4294901760
        %1209 = vmatpush1.xpose.msra.mxu0 %v1208
        %1210 = vmatprep.subr.mxu0 0.0
        %v1211 = vand.u32 %v817, 4294901760
        %v1212 = vsub.f32 %v817, %v1211
        %v1213 = vand.u32 %v1212, 4294901760
        %v1214 = vsub.f32 %v1212, %v1213
        %v1215 = vand.u32 %v1214, 4294901760
        %1216 = vmatpush1.xpose.msra.mxu0 %v1215
        %1217 = vmatprep.subr.mxu0 0.0
        %1218 = vmatpush2.xpose.msra.mxu0 0.0
        %1219 = vmatprep.subr.mxu0 0.0
        %1220 = vmatpush2.xpose.msra.mxu0 0.0
        %1221 = vmatprep.subr.mxu0 0.0
        %1222 = vmatpush2.xpose.msra.mxu0 0.0
        %1223 = vmatprep.subr.mxu0 0.0
        %1224 = vmatpush2.xpose.msra.mxu0 0.0
        %1225 = vmatprep.subr.mxu0 0.0
        %1226 = vmatpush2.xpose.msra.mxu0 0.0
        %1227 = vmatprep.subr.mxu0 0.0
        %1228 = vmatpush2.xpose.msra.mxu0 0.0
        %1229 = vmatprep.subr.mxu0 0.0
        %1230 = vmatpush2.xpose.msra.mxu0 0.0
        %1231 = vmatprep.subr.mxu0 0.0
        %1232 = vmatpush2.xpose.msra.mxu0 0.0
        %1233 = vmatprep.subr.mxu0 0.0
        %1234 = vmatpush2.xpose.msra.mxu0 0.0
        %1235 = vmatprep.subr.mxu0 0.0
        %1236 = vmatpush2.xpose.msra.mxu0 0.0
        %1237 = vmatprep.subr.mxu0 0.0
        %1238 = vmatpush2.xpose.msra.mxu0 0.0
        %1239 = vmatprep.subr.mxu0 0.0
        %1240 = vmatpush2.xpose.msra.mxu0 0.0
        %1241 = vmatprep.subr.mxu0 0.0
        %1242 = vmatpush2.xpose.msra.mxu0 0.0
        %1243 = vmatprep.subr.mxu0 0.0
        %1244 = vmatpush2.xpose.msra.mxu0 0.0
        %1245 = vmatprep.subr.mxu0 0.0
        %1246 = vmatpush2.xpose.msra.mxu0 0.0
        %1247 = vmatprep.subr.mxu0 0.0
        %1248 = vmatpush2.xpose.msra.mxu0 0.0
        %1249 = vmatprep.mubr.f32.mxu0 0.0
        %v1250 = vand.u32 %v769, 4294901760
        %1251 = vmatmul.mubr.f32.gmra.mxu0 %v1250
        %v1252 = vpop.f32.mrf.mxu0
        %v1253 = vadd.f32 %v952, %v1252
        %v1254 = vpop.f32.mrf.mxu0
        %1255 = vmatprep.mubr.f32.mxu0 0.0
        %v1256 = vand.u32 %v772, 4294901760
        %1257 = vmatmul.mubr.f32.gmra.mxu0 %v1256
        %v1258 = vpop.f32.mrf.mxu0
        %v1259 = vadd.f32 %v962, %v1258
        %v1260 = vpop.f32.mrf.mxu0
        %1261 = vmatprep.mubr.f32.mxu0 0.0
        %v1262 = vand.u32 %v775, 4294901760
        %1263 = vmatmul.mubr.f32.gmra.mxu0 %v1262
        %v1264 = vpop.f32.mrf.mxu0
        %v1265 = vadd.f32 %v972, %v1264
        %v1266 = vpop.f32.mrf.mxu0
        %1267 = vmatprep.mubr.f32.mxu0 0.0
        %v1268 = vand.u32 %v778, 4294901760
        %1269 = vmatmul.mubr.f32.gmra.mxu0 %v1268
        %v1270 = vpop.f32.mrf.mxu0
        %v1271 = vadd.f32 %v982, %v1270
        %v1272 = vpop.f32.mrf.mxu0
        %1273 = vmatprep.mubr.f32.mxu0 0.0
        %v1274 = vand.u32 %v781, 4294901760
        %1275 = vmatmul.mubr.f32.gmra.mxu0 %v1274
        %v1276 = vpop.f32.mrf.mxu0
        %v1277 = vadd.f32 %v992, %v1276
        %v1278 = vpop.f32.mrf.mxu0
        %1279 = vmatprep.mubr.f32.mxu0 0.0
        %v1280 = vand.u32 %v784, 4294901760
        %1281 = vmatmul.mubr.f32.gmra.mxu0 %v1280
        %v1282 = vpop.f32.mrf.mxu0
        %v1283 = vadd.f32 %v1002, %v1282
        %v1284 = vpop.f32.mrf.mxu0
        %1285 = vmatprep.mubr.f32.mxu0 0.0
        %v1286 = vand.u32 %v787, 4294901760
        %1287 = vmatmul.mubr.f32.gmra.mxu0 %v1286
        %v1288 = vpop.f32.mrf.mxu0
        %v1289 = vadd.f32 %v1012, %v1288
        %v1290 = vpop.f32.mrf.mxu0
        %1291 = vmatprep.mubr.f32.mxu0 0.0
        %v1292 = vand.u32 %v790, 4294901760
        %1293 = vmatmul.mubr.f32.gmra.mxu0 %v1292
        %v1294 = vpop.f32.mrf.mxu0
        %v1295 = vadd.f32 %v1022, %v1294
        %v1296 = vpop.f32.mrf.mxu0
        %1297 = vmatprep.mubr.f32.mxu0 0.0
        %v1298 = vand.u32 %v793, 4294901760
        %1299 = vmatmul.mubr.f32.gmra.mxu0 %v1298
        %v1300 = vpop.f32.mrf.mxu0
        %v1301 = vadd.f32 %v1032, %v1300
        %v1302 = vpop.f32.mrf.mxu0
        %1303 = vmatprep.mubr.f32.mxu0 0.0
        %v1304 = vand.u32 %v796, 4294901760
        %1305 = vmatmul.mubr.f32.gmra.mxu0 %v1304
        %v1306 = vpop.f32.mrf.mxu0
        %v1307 = vadd.f32 %v1042, %v1306
        %v1308 = vpop.f32.mrf.mxu0
        %1309 = vmatprep.mubr.f32.mxu0 0.0
        %v1310 = vand.u32 %v799, 4294901760
        %1311 = vmatmul.mubr.f32.gmra.mxu0 %v1310
        %v1312 = vpop.f32.mrf.mxu0
        %v1313 = vadd.f32 %v1052, %v1312
        %v1314 = vpop.f32.mrf.mxu0
        %1315 = vmatprep.mubr.f32.mxu0 0.0
        %v1316 = vand.u32 %v802, 4294901760
        %1317 = vmatmul.mubr.f32.gmra.mxu0 %v1316
        %v1318 = vpop.f32.mrf.mxu0
        %v1319 = vadd.f32 %v1062, %v1318
        %v1320 = vpop.f32.mrf.mxu0
        %1321 = vmatprep.mubr.f32.mxu0 0.0
        %v1322 = vand.u32 %v805, 4294901760
        %1323 = vmatmul.mubr.f32.gmra.mxu0 %v1322
        %v1324 = vpop.f32.mrf.mxu0
        %v1325 = vadd.f32 %v1072, %v1324
        %v1326 = vpop.f32.mrf.mxu0
        %1327 = vmatprep.mubr.f32.mxu0 0.0
        %v1328 = vand.u32 %v808, 4294901760
        %1329 = vmatmul.mubr.f32.gmra.mxu0 %v1328
        %v1330 = vpop.f32.mrf.mxu0
        %v1331 = vadd.f32 %v1082, %v1330
        %v1332 = vpop.f32.mrf.mxu0
        %1333 = vmatprep.mubr.f32.mxu0 0.0
        %v1334 = vand.u32 %v811, 4294901760
        %1335 = vmatmul.mubr.f32.gmra.mxu0 %v1334
        %v1336 = vpop.f32.mrf.mxu0
        %v1337 = vadd.f32 %v1092, %v1336
        %v1338 = vpop.f32.mrf.mxu0
        %1339 = vmatprep.mubr.f32.mxu0 0.0
        %v1340 = vand.u32 %v814, 4294901760
        %1341 = vmatmul.mubr.f32.gmra.mxu0 %v1340
        %v1342 = vpop.f32.mrf.mxu0
        %v1343 = vadd.f32 %v1102, %v1342
        %v1344 = vpop.f32.mrf.mxu0
        %1345 = vdwg.mxu0
        %1346 = vmatprep.subr.mxu0 0.0
        %v1347 = vand.u32 %v862, 4294901760
        %v1348 = vsub.f32 %v862, %v1347
        %1349 = vmatpush1.xpose.msra.mxu0 %v1348
        %1350 = vmatprep.subr.mxu0 0.0
        %v1351 = vand.u32 %v859, 4294901760
        %v1352 = vsub.f32 %v859, %v1351
        %1353 = vmatpush1.xpose.msra.mxu0 %v1352
        %1354 = vmatprep.subr.mxu0 0.0
        %v1355 = vand.u32 %v856, 4294901760
        %v1356 = vsub.f32 %v856, %v1355
        %1357 = vmatpush1.xpose.msra.mxu0 %v1356
        %1358 = vmatprep.subr.mxu0 0.0
        %v1359 = vand.u32 %v853, 4294901760
        %v1360 = vsub.f32 %v853, %v1359
        %1361 = vmatpush1.xpose.msra.mxu0 %v1360
        %1362 = vmatprep.subr.mxu0 0.0
        %v1363 = vand.u32 %v850, 4294901760
        %v1364 = vsub.f32 %v850, %v1363
        %1365 = vmatpush1.xpose.msra.mxu0 %v1364
        %1366 = vmatprep.subr.mxu0 0.0
        %v1367 = vand.u32 %v847, 4294901760
        %v1368 = vsub.f32 %v847, %v1367
        %1369 = vmatpush1.xpose.msra.mxu0 %v1368
        %1370 = vmatprep.subr.mxu0 0.0
        %v1371 = vand.u32 %v844, 4294901760
        %v1372 = vsub.f32 %v844, %v1371
        %1373 = vmatpush1.xpose.msra.mxu0 %v1372
        %1374 = vmatprep.subr.mxu0 0.0
        %v1375 = vand.u32 %v841, 4294901760
        %v1376 = vsub.f32 %v841, %v1375
        %1377 = vmatpush1.xpose.msra.mxu0 %v1376
        %1378 = vmatprep.subr.mxu0 0.0
        %v1379 = vand.u32 %v838, 4294901760
        %v1380 = vsub.f32 %v838, %v1379
        %1381 = vmatpush1.xpose.msra.mxu0 %v1380
        %1382 = vmatprep.subr.mxu0 0.0
        %v1383 = vand.u32 %v835, 4294901760
        %v1384 = vsub.f32 %v835, %v1383
        %1385 = vmatpush1.xpose.msra.mxu0 %v1384
        %1386 = vmatprep.subr.mxu0 0.0
        %v1387 = vand.u32 %v832, 4294901760
        %v1388 = vsub.f32 %v832, %v1387
        %1389 = vmatpush1.xpose.msra.mxu0 %v1388
        %1390 = vmatprep.subr.mxu0 0.0
        %v1391 = vand.u32 %v829, 4294901760
        %v1392 = vsub.f32 %v829, %v1391
        %1393 = vmatpush1.xpose.msra.mxu0 %v1392
        %1394 = vmatprep.subr.mxu0 0.0
        %v1395 = vand.u32 %v826, 4294901760
        %v1396 = vsub.f32 %v826, %v1395
        %1397 = vmatpush1.xpose.msra.mxu0 %v1396
        %1398 = vmatprep.subr.mxu0 0.0
        %v1399 = vand.u32 %v823, 4294901760
        %v1400 = vsub.f32 %v823, %v1399
        %1401 = vmatpush1.xpose.msra.mxu0 %v1400
        %1402 = vmatprep.subr.mxu0 0.0
        %v1403 = vand.u32 %v820, 4294901760
        %v1404 = vsub.f32 %v820, %v1403
        %1405 = vmatpush1.xpose.msra.mxu0 %v1404
        %1406 = vmatprep.subr.mxu0 0.0
        %v1407 = vand.u32 %v817, 4294901760
        %v1408 = vsub.f32 %v817, %v1407
        %1409 = vmatpush1.xpose.msra.mxu0 %v1408
        %1410 = vmatprep.subr.mxu0 0.0
        %1411 = vmatpush2.xpose.msra.mxu0 0.0
        %1412 = vmatprep.subr.mxu0 0.0
        %1413 = vmatpush2.xpose.msra.mxu0 0.0
        %1414 = vmatprep.subr.mxu0 0.0
        %1415 = vmatpush2.xpose.msra.mxu0 0.0
        %1416 = vmatprep.subr.mxu0 0.0
        %1417 = vmatpush2.xpose.msra.mxu0 0.0
        %1418 = vmatprep.subr.mxu0 0.0
        %1419 = vmatpush2.xpose.msra.mxu0 0.0
        %1420 = vmatprep.subr.mxu0 0.0
        %1421 = vmatpush2.xpose.msra.mxu0 0.0
        %1422 = vmatprep.subr.mxu0 0.0
        %1423 = vmatpush2.xpose.msra.mxu0 0.0
        %1424 = vmatprep.subr.mxu0 0.0
        %1425 = vmatpush2.xpose.msra.mxu0 0.0
        %1426 = vmatprep.subr.mxu0 0.0
        %1427 = vmatpush2.xpose.msra.mxu0 0.0
        %1428 = vmatprep.subr.mxu0 0.0
        %1429 = vmatpush2.xpose.msra.mxu0 0.0
        %1430 = vmatprep.subr.mxu0 0.0
        %1431 = vmatpush2.xpose.msra.mxu0 0.0
        %1432 = vmatprep.subr.mxu0 0.0
        %1433 = vmatpush2.xpose.msra.mxu0 0.0
        %1434 = vmatprep.subr.mxu0 0.0
        %1435 = vmatpush2.xpose.msra.mxu0 0.0
        %1436 = vmatprep.subr.mxu0 0.0
        %1437 = vmatpush2.xpose.msra.mxu0 0.0
        %1438 = vmatprep.subr.mxu0 0.0
        %1439 = vmatpush2.xpose.msra.mxu0 0.0
        %1440 = vmatprep.subr.mxu0 0.0
        %1441 = vmatpush2.xpose.msra.mxu0 0.0
        %1442 = vmatprep.mubr.f32.mxu0 0.0
        %v1443 = vand.u32 %v769, 4294901760
        %v1444 = vsub.f32 %v769, %v1443
        %1445 = vmatmul.mubr.f32.gmra.mxu0 %v1444
        %v1446 = vpop.f32.mrf.mxu0
        %v1447 = vadd.f32 %v1253, %v1446
        %v1448 = vpop.f32.mrf.mxu0
        %1449 = vmatprep.mubr.f32.mxu0 0.0
        %v1450 = vand.u32 %v772, 4294901760
        %v1451 = vsub.f32 %v772, %v1450
        %1452 = vmatmul.mubr.f32.gmra.mxu0 %v1451
        %v1453 = vpop.f32.mrf.mxu0
        %v1454 = vadd.f32 %v1259, %v1453
        %v1455 = vpop.f32.mrf.mxu0
        %1456 = vmatprep.mubr.f32.mxu0 0.0
        %v1457 = vand.u32 %v775, 4294901760
        %v1458 = vsub.f32 %v775, %v1457
        %1459 = vmatmul.mubr.f32.gmra.mxu0 %v1458
        %v1460 = vpop.f32.mrf.mxu0
        %v1461 = vadd.f32 %v1265, %v1460
        %v1462 = vpop.f32.mrf.mxu0
        %1463 = vmatprep.mubr.f32.mxu0 0.0
        %v1464 = vand.u32 %v778, 4294901760
        %v1465 = vsub.f32 %v778, %v1464
        %1466 = vmatmul.mubr.f32.gmra.mxu0 %v1465
        %v1467 = vpop.f32.mrf.mxu0
        %v1468 = vadd.f32 %v1271, %v1467
        %v1469 = vpop.f32.mrf.mxu0
        %1470 = vmatprep.mubr.f32.mxu0 0.0
        %v1471 = vand.u32 %v781, 4294901760
        %v1472 = vsub.f32 %v781, %v1471
        %1473 = vmatmul.mubr.f32.gmra.mxu0 %v1472
        %v1474 = vpop.f32.mrf.mxu0
        %v1475 = vadd.f32 %v1277, %v1474
        %v1476 = vpop.f32.mrf.mxu0
        %1477 = vmatprep.mubr.f32.mxu0 0.0
        %v1478 = vand.u32 %v784, 4294901760
        %v1479 = vsub.f32 %v784, %v1478
        %1480 = vmatmul.mubr.f32.gmra.mxu0 %v1479
        %v1481 = vpop.f32.mrf.mxu0
        %v1482 = vadd.f32 %v1283, %v1481
        %v1483 = vpop.f32.mrf.mxu0
        %1484 = vmatprep.mubr.f32.mxu0 0.0
        %v1485 = vand.u32 %v787, 4294901760
        %v1486 = vsub.f32 %v787, %v1485
        %1487 = vmatmul.mubr.f32.gmra.mxu0 %v1486
        %v1488 = vpop.f32.mrf.mxu0
        %v1489 = vadd.f32 %v1289, %v1488
        %v1490 = vpop.f32.mrf.mxu0
        %1491 = vmatprep.mubr.f32.mxu0 0.0
        %v1492 = vand.u32 %v790, 4294901760
        %v1493 = vsub.f32 %v790, %v1492
        %1494 = vmatmul.mubr.f32.gmra.mxu0 %v1493
        %v1495 = vpop.f32.mrf.mxu0
        %v1496 = vadd.f32 %v1295, %v1495
        %v1497 = vpop.f32.mrf.mxu0
        %1498 = vmatprep.mubr.f32.mxu0 0.0
        %v1499 = vand.u32 %v793, 4294901760
        %v1500 = vsub.f32 %v793, %v1499
        %1501 = vmatmul.mubr.f32.gmra.mxu0 %v1500
        %v1502 = vpop.f32.mrf.mxu0
        %v1503 = vadd.f32 %v1301, %v1502
        %v1504 = vpop.f32.mrf.mxu0
        %1505 = vmatprep.mubr.f32.mxu0 0.0
        %v1506 = vand.u32 %v796, 4294901760
        %v1507 = vsub.f32 %v796, %v1506
        %1508 = vmatmul.mubr.f32.gmra.mxu0 %v1507
        %v1509 = vpop.f32.mrf.mxu0
        %v1510 = vadd.f32 %v1307, %v1509
        %v1511 = vpop.f32.mrf.mxu0
        %1512 = vmatprep.mubr.f32.mxu0 0.0
        %v1513 = vand.u32 %v799, 4294901760
        %v1514 = vsub.f32 %v799, %v1513
        %1515 = vmatmul.mubr.f32.gmra.mxu0 %v1514
        %v1516 = vpop.f32.mrf.mxu0
        %v1517 = vadd.f32 %v1313, %v1516
        %v1518 = vpop.f32.mrf.mxu0
        %1519 = vmatprep.mubr.f32.mxu0 0.0
        %v1520 = vand.u32 %v802, 4294901760
        %v1521 = vsub.f32 %v802, %v1520
        %1522 = vmatmul.mubr.f32.gmra.mxu0 %v1521
        %v1523 = vpop.f32.mrf.mxu0
        %v1524 = vadd.f32 %v1319, %v1523
        %v1525 = vpop.f32.mrf.mxu0
        %1526 = vmatprep.mubr.f32.mxu0 0.0
        %v1527 = vand.u32 %v805, 4294901760
        %v1528 = vsub.f32 %v805, %v1527
        %1529 = vmatmul.mubr.f32.gmra.mxu0 %v1528
        %v1530 = vpop.f32.mrf.mxu0
        %v1531 = vadd.f32 %v1325, %v1530
        %v1532 = vpop.f32.mrf.mxu0
        %1533 = vmatprep.mubr.f32.mxu0 0.0
        %v1534 = vand.u32 %v808, 4294901760
        %v1535 = vsub.f32 %v808, %v1534
        %1536 = vmatmul.mubr.f32.gmra.mxu0 %v1535
        %v1537 = vpop.f32.mrf.mxu0
        %v1538 = vadd.f32 %v1331, %v1537
        %v1539 = vpop.f32.mrf.mxu0
        %1540 = vmatprep.mubr.f32.mxu0 0.0
        %v1541 = vand.u32 %v811, 4294901760
        %v1542 = vsub.f32 %v811, %v1541
        %1543 = vmatmul.mubr.f32.gmra.mxu0 %v1542
        %v1544 = vpop.f32.mrf.mxu0
        %v1545 = vadd.f32 %v1337, %v1544
        %v1546 = vpop.f32.mrf.mxu0
        %1547 = vmatprep.mubr.f32.mxu0 0.0
        %v1548 = vand.u32 %v814, 4294901760
        %v1549 = vsub.f32 %v814, %v1548
        %1550 = vmatmul.mubr.f32.gmra.mxu0 %v1549
        %v1551 = vpop.f32.mrf.mxu0
        %v1552 = vadd.f32 %v1343, %v1551
        %v1553 = vpop.f32.mrf.mxu0
        %1554 = vdwg.mxu0
        %1555 = vmatprep.subr.mxu0 0.0
        %v1556 = vand.u32 %v862, 4294901760
        %1557 = vmatpush1.xpose.msra.mxu0 %v1556
        %1558 = vmatprep.subr.mxu0 0.0
        %v1559 = vand.u32 %v859, 4294901760
        %1560 = vmatpush1.xpose.msra.mxu0 %v1559
        %1561 = vmatprep.subr.mxu0 0.0
        %v1562 = vand.u32 %v856, 4294901760
        %1563 = vmatpush1.xpose.msra.mxu0 %v1562
        %1564 = vmatprep.subr.mxu0 0.0
        %v1565 = vand.u32 %v853, 4294901760
        %1566 = vmatpush1.xpose.msra.mxu0 %v1565
        %1567 = vmatprep.subr.mxu0 0.0
        %v1568 = vand.u32 %v850, 4294901760
        %1569 = vmatpush1.xpose.msra.mxu0 %v1568
        %1570 = vmatprep.subr.mxu0 0.0
        %v1571 = vand.u32 %v847, 4294901760
        %1572 = vmatpush1.xpose.msra.mxu0 %v1571
        %1573 = vmatprep.subr.mxu0 0.0
        %v1574 = vand.u32 %v844, 4294901760
        %1575 = vmatpush1.xpose.msra.mxu0 %v1574
        %1576 = vmatprep.subr.mxu0 0.0
        %v1577 = vand.u32 %v841, 4294901760
        %1578 = vmatpush1.xpose.msra.mxu0 %v1577
        %1579 = vmatprep.subr.mxu0 0.0
        %v1580 = vand.u32 %v838, 4294901760
        %1581 = vmatpush1.xpose.msra.mxu0 %v1580
        %1582 = vmatprep.subr.mxu0 0.0
        %v1583 = vand.u32 %v835, 4294901760
        %1584 = vmatpush1.xpose.msra.mxu0 %v1583
        %1585 = vmatprep.subr.mxu0 0.0
        %v1586 = vand.u32 %v832, 4294901760
        %1587 = vmatpush1.xpose.msra.mxu0 %v1586
        %1588 = vmatprep.subr.mxu0 0.0
        %v1589 = vand.u32 %v829, 4294901760
        %1590 = vmatpush1.xpose.msra.mxu0 %v1589
        %1591 = vmatprep.subr.mxu0 0.0
        %v1592 = vand.u32 %v826, 4294901760
        %1593 = vmatpush1.xpose.msra.mxu0 %v1592
        %1594 = vmatprep.subr.mxu0 0.0
        %v1595 = vand.u32 %v823, 4294901760
        %1596 = vmatpush1.xpose.msra.mxu0 %v1595
        %1597 = vmatprep.subr.mxu0 0.0
        %v1598 = vand.u32 %v820, 4294901760
        %1599 = vmatpush1.xpose.msra.mxu0 %v1598
        %1600 = vmatprep.subr.mxu0 0.0
        %v1601 = vand.u32 %v817, 4294901760
        %1602 = vmatpush1.xpose.msra.mxu0 %v1601
        %1603 = vmatprep.subr.mxu0 0.0
        %1604 = vmatpush2.xpose.msra.mxu0 0.0
        %1605 = vmatprep.subr.mxu0 0.0
        %1606 = vmatpush2.xpose.msra.mxu0 0.0
        %1607 = vmatprep.subr.mxu0 0.0
        %1608 = vmatpush2.xpose.msra.mxu0 0.0
        %1609 = vmatprep.subr.mxu0 0.0
        %1610 = vmatpush2.xpose.msra.mxu0 0.0
        %1611 = vmatprep.subr.mxu0 0.0
        %1612 = vmatpush2.xpose.msra.mxu0 0.0
        %1613 = vmatprep.subr.mxu0 0.0
        %1614 = vmatpush2.xpose.msra.mxu0 0.0
        %1615 = vmatprep.subr.mxu0 0.0
        %1616 = vmatpush2.xpose.msra.mxu0 0.0
        %1617 = vmatprep.subr.mxu0 0.0
        %1618 = vmatpush2.xpose.msra.mxu0 0.0
        %1619 = vmatprep.subr.mxu0 0.0
        %1620 = vmatpush2.xpose.msra.mxu0 0.0
        %1621 = vmatprep.subr.mxu0 0.0
        %1622 = vmatpush2.xpose.msra.mxu0 0.0
        %1623 = vmatprep.subr.mxu0 0.0
        %1624 = vmatpush2.xpose.msra.mxu0 0.0
        %1625 = vmatprep.subr.mxu0 0.0
        %1626 = vmatpush2.xpose.msra.mxu0 0.0
        %1627 = vmatprep.subr.mxu0 0.0
        %1628 = vmatpush2.xpose.msra.mxu0 0.0
        %1629 = vmatprep.subr.mxu0 0.0
        %1630 = vmatpush2.xpose.msra.mxu0 0.0
        %1631 = vmatprep.subr.mxu0 0.0
        %1632 = vmatpush2.xpose.msra.mxu0 0.0
        %1633 = vmatprep.subr.mxu0 0.0
        %1634 = vmatpush2.xpose.msra.mxu0 0.0
        %1635 = vmatprep.mubr.f32.mxu0 0.0
        %v1636 = vand.u32 %v769, 4294901760
        %v1637 = vsub.f32 %v769, %v1636
        %v1638 = vand.u32 %v1637, 4294901760
        %1639 = vmatmul.mubr.f32.gmra.mxu0 %v1638
        %v1640 = vpop.f32.mrf.mxu0
        %v1641 = vadd.f32 %v1447, %v1640
        %v1642 = vpop.f32.mrf.mxu0
        %1643 = vmatprep.mubr.f32.mxu0 0.0
        %v1644 = vand.u32 %v772, 4294901760
        %v1645 = vsub.f32 %v772, %v1644
        %v1646 = vand.u32 %v1645, 4294901760
        %1647 = vmatmul.mubr.f32.gmra.mxu0 %v1646
        %v1648 = vpop.f32.mrf.mxu0
        %v1649 = vadd.f32 %v1454, %v1648
        %v1650 = vpop.f32.mrf.mxu0
        %1651 = vmatprep.mubr.f32.mxu0 0.0
        %v1652 = vand.u32 %v775, 4294901760
        %v1653 = vsub.f32 %v775, %v1652
        %v1654 = vand.u32 %v1653, 4294901760
        %1655 = vmatmul.mubr.f32.gmra.mxu0 %v1654
        %v1656 = vpop.f32.mrf.mxu0
        %v1657 = vadd.f32 %v1461, %v1656
        %v1658 = vpop.f32.mrf.mxu0
        %1659 = vmatprep.mubr.f32.mxu0 0.0
        %v1660 = vand.u32 %v778, 4294901760
        %v1661 = vsub.f32 %v778, %v1660
        %v1662 = vand.u32 %v1661, 4294901760
        %1663 = vmatmul.mubr.f32.gmra.mxu0 %v1662
        %v1664 = vpop.f32.mrf.mxu0
        %v1665 = vadd.f32 %v1468, %v1664
        %v1666 = vpop.f32.mrf.mxu0
        %1667 = vmatprep.mubr.f32.mxu0 0.0
        %v1668 = vand.u32 %v781, 4294901760
        %v1669 = vsub.f32 %v781, %v1668
        %v1670 = vand.u32 %v1669, 4294901760
        %1671 = vmatmul.mubr.f32.gmra.mxu0 %v1670
        %v1672 = vpop.f32.mrf.mxu0
        %v1673 = vadd.f32 %v1475, %v1672
        %v1674 = vpop.f32.mrf.mxu0
        %1675 = vmatprep.mubr.f32.mxu0 0.0
        %v1676 = vand.u32 %v784, 4294901760
        %v1677 = vsub.f32 %v784, %v1676
        %v1678 = vand.u32 %v1677, 4294901760
        %1679 = vmatmul.mubr.f32.gmra.mxu0 %v1678
        %v1680 = vpop.f32.mrf.mxu0
        %v1681 = vadd.f32 %v1482, %v1680
        %v1682 = vpop.f32.mrf.mxu0
        %1683 = vmatprep.mubr.f32.mxu0 0.0
        %v1684 = vand.u32 %v787, 4294901760
        %v1685 = vsub.f32 %v787, %v1684
        %v1686 = vand.u32 %v1685, 4294901760
        %1687 = vmatmul.mubr.f32.gmra.mxu0 %v1686
        %v1688 = vpop.f32.mrf.mxu0
        %v1689 = vadd.f32 %v1489, %v1688
        %v1690 = vpop.f32.mrf.mxu0
        %1691 = vmatprep.mubr.f32.mxu0 0.0
        %v1692 = vand.u32 %v790, 4294901760
        %v1693 = vsub.f32 %v790, %v1692
        %v1694 = vand.u32 %v1693, 4294901760
        %1695 = vmatmul.mubr.f32.gmra.mxu0 %v1694
        %v1696 = vpop.f32.mrf.mxu0
        %v1697 = vadd.f32 %v1496, %v1696
        %v1698 = vpop.f32.mrf.mxu0
        %1699 = vmatprep.mubr.f32.mxu0 0.0
        %v1700 = vand.u32 %v793, 4294901760
        %v1701 = vsub.f32 %v793, %v1700
        %v1702 = vand.u32 %v1701, 4294901760
        %1703 = vmatmul.mubr.f32.gmra.mxu0 %v1702
        %v1704 = vpop.f32.mrf.mxu0
        %v1705 = vadd.f32 %v1503, %v1704
        %v1706 = vpop.f32.mrf.mxu0
        %1707 = vmatprep.mubr.f32.mxu0 0.0
        %v1708 = vand.u32 %v796, 4294901760
        %v1709 = vsub.f32 %v796, %v1708
        %v1710 = vand.u32 %v1709, 4294901760
        %1711 = vmatmul.mubr.f32.gmra.mxu0 %v1710
        %v1712 = vpop.f32.mrf.mxu0
        %v1713 = vadd.f32 %v1510, %v1712
        %v1714 = vpop.f32.mrf.mxu0
        %1715 = vmatprep.mubr.f32.mxu0 0.0
        %v1716 = vand.u32 %v799, 4294901760
        %v1717 = vsub.f32 %v799, %v1716
        %v1718 = vand.u32 %v1717, 4294901760
        %1719 = vmatmul.mubr.f32.gmra.mxu0 %v1718
        %v1720 = vpop.f32.mrf.mxu0
        %v1721 = vadd.f32 %v1517, %v1720
        %v1722 = vpop.f32.mrf.mxu0
        %1723 = vmatprep.mubr.f32.mxu0 0.0
        %v1724 = vand.u32 %v802, 4294901760
        %v1725 = vsub.f32 %v802, %v1724
        %v1726 = vand.u32 %v1725, 4294901760
        %1727 = vmatmul.mubr.f32.gmra.mxu0 %v1726
        %v1728 = vpop.f32.mrf.mxu0
        %v1729 = vadd.f32 %v1524, %v1728
        %v1730 = vpop.f32.mrf.mxu0
        %1731 = vmatprep.mubr.f32.mxu0 0.0
        %v1732 = vand.u32 %v805, 4294901760
        %v1733 = vsub.f32 %v805, %v1732
        %v1734 = vand.u32 %v1733, 4294901760
        %1735 = vmatmul.mubr.f32.gmra.mxu0 %v1734
        %v1736 = vpop.f32.mrf.mxu0
        %v1737 = vadd.f32 %v1531, %v1736
        %v1738 = vpop.f32.mrf.mxu0
        %1739 = vmatprep.mubr.f32.mxu0 0.0
        %v1740 = vand.u32 %v808, 4294901760
        %v1741 = vsub.f32 %v808, %v1740
        %v1742 = vand.u32 %v1741, 4294901760
        %1743 = vmatmul.mubr.f32.gmra.mxu0 %v1742
        %v1744 = vpop.f32.mrf.mxu0
        %v1745 = vadd.f32 %v1538, %v1744
        %v1746 = vpop.f32.mrf.mxu0
        %1747 = vmatprep.mubr.f32.mxu0 0.0
        %v1748 = vand.u32 %v811, 4294901760
        %v1749 = vsub.f32 %v811, %v1748
        %v1750 = vand.u32 %v1749, 4294901760
        %1751 = vmatmul.mubr.f32.gmra.mxu0 %v1750
        %v1752 = vpop.f32.mrf.mxu0
        %v1753 = vadd.f32 %v1545, %v1752
        %v1754 = vpop.f32.mrf.mxu0
        %1755 = vmatprep.mubr.f32.mxu0 0.0
        %v1756 = vand.u32 %v814, 4294901760
        %v1757 = vsub.f32 %v814, %v1756
        %v1758 = vand.u32 %v1757, 4294901760
        %1759 = vmatmul.mubr.f32.gmra.mxu0 %v1758
        %v1760 = vpop.f32.mrf.mxu0
        %v1761 = vadd.f32 %v1552, %v1760
        %v1762 = vpop.f32.mrf.mxu0
        %1763 = vdwg.mxu0
        %1764 = vmatprep.subr.mxu0 0.0
        %v1765 = vand.u32 %v862, 4294901760
        %v1766 = vsub.f32 %v862, %v1765
        %v1767 = vand.u32 %v1766, 4294901760
        %1768 = vmatpush1.xpose.msra.mxu0 %v1767
        %1769 = vmatprep.subr.mxu0 0.0
        %v1770 = vand.u32 %v859, 4294901760
        %v1771 = vsub.f32 %v859, %v1770
        %v1772 = vand.u32 %v1771, 4294901760
        %1773 = vmatpush1.xpose.msra.mxu0 %v1772
        %1774 = vmatprep.subr.mxu0 0.0
        %v1775 = vand.u32 %v856, 4294901760
        %v1776 = vsub.f32 %v856, %v1775
        %v1777 = vand.u32 %v1776, 4294901760
        %1778 = vmatpush1.xpose.msra.mxu0 %v1777
        %1779 = vmatprep.subr.mxu0 0.0
        %v1780 = vand.u32 %v853, 4294901760
        %v1781 = vsub.f32 %v853, %v1780
        %v1782 = vand.u32 %v1781, 4294901760
        %1783 = vmatpush1.xpose.msra.mxu0 %v1782
        %1784 = vmatprep.subr.mxu0 0.0
        %v1785 = vand.u32 %v850, 4294901760
        %v1786 = vsub.f32 %v850, %v1785
        %v1787 = vand.u32 %v1786, 4294901760
        %1788 = vmatpush1.xpose.msra.mxu0 %v1787
        %1789 = vmatprep.subr.mxu0 0.0
        %v1790 = vand.u32 %v847, 4294901760
        %v1791 = vsub.f32 %v847, %v1790
        %v1792 = vand.u32 %v1791, 4294901760
        %1793 = vmatpush1.xpose.msra.mxu0 %v1792
        %1794 = vmatprep.subr.mxu0 0.0
        %v1795 = vand.u32 %v844, 4294901760
        %v1796 = vsub.f32 %v844, %v1795
        %v1797 = vand.u32 %v1796, 4294901760
        %1798 = vmatpush1.xpose.msra.mxu0 %v1797
        %1799 = vmatprep.subr.mxu0 0.0
        %v1800 = vand.u32 %v841, 4294901760
        %v1801 = vsub.f32 %v841, %v1800
        %v1802 = vand.u32 %v1801, 4294901760
        %1803 = vmatpush1.xpose.msra.mxu0 %v1802
        %1804 = vmatprep.subr.mxu0 0.0
        %v1805 = vand.u32 %v838, 4294901760
        %v1806 = vsub.f32 %v838, %v1805
        %v1807 = vand.u32 %v1806, 4294901760
        %1808 = vmatpush1.xpose.msra.mxu0 %v1807
        %1809 = vmatprep.subr.mxu0 0.0
        %v1810 = vand.u32 %v835, 4294901760
        %v1811 = vsub.f32 %v835, %v1810
        %v1812 = vand.u32 %v1811, 4294901760
        %1813 = vmatpush1.xpose.msra.mxu0 %v1812
        %1814 = vmatprep.subr.mxu0 0.0
        %v1815 = vand.u32 %v832, 4294901760
        %v1816 = vsub.f32 %v832, %v1815
        %v1817 = vand.u32 %v1816, 4294901760
        %1818 = vmatpush1.xpose.msra.mxu0 %v1817
        %1819 = vmatprep.subr.mxu0 0.0
        %v1820 = vand.u32 %v829, 4294901760
        %v1821 = vsub.f32 %v829, %v1820
        %v1822 = vand.u32 %v1821, 4294901760
        %1823 = vmatpush1.xpose.msra.mxu0 %v1822
        %1824 = vmatprep.subr.mxu0 0.0
        %v1825 = vand.u32 %v826, 4294901760
        %v1826 = vsub.f32 %v826, %v1825
        %v1827 = vand.u32 %v1826, 4294901760
        %1828 = vmatpush1.xpose.msra.mxu0 %v1827
        %1829 = vmatprep.subr.mxu0 0.0
        %v1830 = vand.u32 %v823, 4294901760
        %v1831 = vsub.f32 %v823, %v1830
        %v1832 = vand.u32 %v1831, 4294901760
        %1833 = vmatpush1.xpose.msra.mxu0 %v1832
        %1834 = vmatprep.subr.mxu0 0.0
        %v1835 = vand.u32 %v820, 4294901760
        %v1836 = vsub.f32 %v820, %v1835
        %v1837 = vand.u32 %v1836, 4294901760
        %1838 = vmatpush1.xpose.msra.mxu0 %v1837
        %1839 = vmatprep.subr.mxu0 0.0
        %v1840 = vand.u32 %v817, 4294901760
        %v1841 = vsub.f32 %v817, %v1840
        %v1842 = vand.u32 %v1841, 4294901760
        %1843 = vmatpush1.xpose.msra.mxu0 %v1842
        %1844 = vmatprep.subr.mxu0 0.0
        %1845 = vmatpush2.xpose.msra.mxu0 0.0
        %1846 = vmatprep.subr.mxu0 0.0
        %1847 = vmatpush2.xpose.msra.mxu0 0.0
        %1848 = vmatprep.subr.mxu0 0.0
        %1849 = vmatpush2.xpose.msra.mxu0 0.0
        %1850 = vmatprep.subr.mxu0 0.0
        %1851 = vmatpush2.xpose.msra.mxu0 0.0
        %1852 = vmatprep.subr.mxu0 0.0
        %1853 = vmatpush2.xpose.msra.mxu0 0.0
        %1854 = vmatprep.subr.mxu0 0.0
        %1855 = vmatpush2.xpose.msra.mxu0 0.0
        %1856 = vmatprep.subr.mxu0 0.0
        %1857 = vmatpush2.xpose.msra.mxu0 0.0
        %1858 = vmatprep.subr.mxu0 0.0
        %1859 = vmatpush2.xpose.msra.mxu0 0.0
        %1860 = vmatprep.subr.mxu0 0.0
        %1861 = vmatpush2.xpose.msra.mxu0 0.0
        %1862 = vmatprep.subr.mxu0 0.0
        %1863 = vmatpush2.xpose.msra.mxu0 0.0
        %1864 = vmatprep.subr.mxu0 0.0
        %1865 = vmatpush2.xpose.msra.mxu0 0.0
        %1866 = vmatprep.subr.mxu0 0.0
        %1867 = vmatpush2.xpose.msra.mxu0 0.0
        %1868 = vmatprep.subr.mxu0 0.0
        %1869 = vmatpush2.xpose.msra.mxu0 0.0
        %1870 = vmatprep.subr.mxu0 0.0
        %1871 = vmatpush2.xpose.msra.mxu0 0.0
        %1872 = vmatprep.subr.mxu0 0.0
        %1873 = vmatpush2.xpose.msra.mxu0 0.0
        %1874 = vmatprep.subr.mxu0 0.0
        %1875 = vmatpush2.xpose.msra.mxu0 0.0
        %1876 = vmatprep.mubr.f32.mxu0 0.0
        %v1877 = vand.u32 %v769, 4294901760
        %1878 = vmatmul.mubr.f32.gmra.mxu0 %v1877
        %v1879 = vpop.f32.mrf.mxu0
        %v1880 = vadd.f32 %v1641, %v1879
        %v1881 = vpop.f32.mrf.mxu0
        %1882 = vmatprep.mubr.f32.mxu0 0.0
        %v1883 = vand.u32 %v772, 4294901760
        %1884 = vmatmul.mubr.f32.gmra.mxu0 %v1883
        %v1885 = vpop.f32.mrf.mxu0
        %v1886 = vadd.f32 %v1649, %v1885
        %v1887 = vpop.f32.mrf.mxu0
        %1888 = vmatprep.mubr.f32.mxu0 0.0
        %v1889 = vand.u32 %v775, 4294901760
        %1890 = vmatmul.mubr.f32.gmra.mxu0 %v1889
        %v1891 = vpop.f32.mrf.mxu0
        %v1892 = vadd.f32 %v1657, %v1891
        %v1893 = vpop.f32.mrf.mxu0
        %1894 = vmatprep.mubr.f32.mxu0 0.0
        %v1895 = vand.u32 %v778, 4294901760
        %1896 = vmatmul.mubr.f32.gmra.mxu0 %v1895
        %v1897 = vpop.f32.mrf.mxu0
        %v1898 = vadd.f32 %v1665, %v1897
        %v1899 = vpop.f32.mrf.mxu0
        %1900 = vmatprep.mubr.f32.mxu0 0.0
        %v1901 = vand.u32 %v781, 4294901760
        %1902 = vmatmul.mubr.f32.gmra.mxu0 %v1901
        %v1903 = vpop.f32.mrf.mxu0
        %v1904 = vadd.f32 %v1673, %v1903
        %v1905 = vpop.f32.mrf.mxu0
        %1906 = vmatprep.mubr.f32.mxu0 0.0
        %v1907 = vand.u32 %v784, 4294901760
        %1908 = vmatmul.mubr.f32.gmra.mxu0 %v1907
        %v1909 = vpop.f32.mrf.mxu0
        %v1910 = vadd.f32 %v1681, %v1909
        %v1911 = vpop.f32.mrf.mxu0
        %1912 = vmatprep.mubr.f32.mxu0 0.0
        %v1913 = vand.u32 %v787, 4294901760
        %1914 = vmatmul.mubr.f32.gmra.mxu0 %v1913
        %v1915 = vpop.f32.mrf.mxu0
        %v1916 = vadd.f32 %v1689, %v1915
        %v1917 = vpop.f32.mrf.mxu0
        %1918 = vmatprep.mubr.f32.mxu0 0.0
        %v1919 = vand.u32 %v790, 4294901760
        %1920 = vmatmul.mubr.f32.gmra.mxu0 %v1919
        %v1921 = vpop.f32.mrf.mxu0
        %v1922 = vadd.f32 %v1697, %v1921
        %v1923 = vpop.f32.mrf.mxu0
        %1924 = vmatprep.mubr.f32.mxu0 0.0
        %v1925 = vand.u32 %v793, 4294901760
        %1926 = vmatmul.mubr.f32.gmra.mxu0 %v1925
        %v1927 = vpop.f32.mrf.mxu0
        %v1928 = vadd.f32 %v1705, %v1927
        %v1929 = vpop.f32.mrf.mxu0
        %1930 = vmatprep.mubr.f32.mxu0 0.0
        %v1931 = vand.u32 %v796, 4294901760
        %1932 = vmatmul.mubr.f32.gmra.mxu0 %v1931
        %v1933 = vpop.f32.mrf.mxu0
        %v1934 = vadd.f32 %v1713, %v1933
        %v1935 = vpop.f32.mrf.mxu0
        %1936 = vmatprep.mubr.f32.mxu0 0.0
        %v1937 = vand.u32 %v799, 4294901760
        %1938 = vmatmul.mubr.f32.gmra.mxu0 %v1937
        %v1939 = vpop.f32.mrf.mxu0
        %v1940 = vadd.f32 %v1721, %v1939
        %v1941 = vpop.f32.mrf.mxu0
        %1942 = vmatprep.mubr.f32.mxu0 0.0
        %v1943 = vand.u32 %v802, 4294901760
        %1944 = vmatmul.mubr.f32.gmra.mxu0 %v1943
        %v1945 = vpop.f32.mrf.mxu0
        %v1946 = vadd.f32 %v1729, %v1945
        %v1947 = vpop.f32.mrf.mxu0
        %1948 = vmatprep.mubr.f32.mxu0 0.0
        %v1949 = vand.u32 %v805, 4294901760
        %1950 = vmatmul.mubr.f32.gmra.mxu0 %v1949
        %v1951 = vpop.f32.mrf.mxu0
        %v1952 = vadd.f32 %v1737, %v1951
        %v1953 = vpop.f32.mrf.mxu0
        %1954 = vmatprep.mubr.f32.mxu0 0.0
        %v1955 = vand.u32 %v808, 4294901760
        %1956 = vmatmul.mubr.f32.gmra.mxu0 %v1955
        %v1957 = vpop.f32.mrf.mxu0
        %v1958 = vadd.f32 %v1745, %v1957
        %v1959 = vpop.f32.mrf.mxu0
        %1960 = vmatprep.mubr.f32.mxu0 0.0
        %v1961 = vand.u32 %v811, 4294901760
        %1962 = vmatmul.mubr.f32.gmra.mxu0 %v1961
        %v1963 = vpop.f32.mrf.mxu0
        %v1964 = vadd.f32 %v1753, %v1963
        %v1965 = vpop.f32.mrf.mxu0
        %1966 = vmatprep.mubr.f32.mxu0 0.0
        %v1967 = vand.u32 %v814, 4294901760
        %1968 = vmatmul.mubr.f32.gmra.mxu0 %v1967
        %v1969 = vpop.f32.mrf.mxu0
        %v1970 = vadd.f32 %v1761, %v1969
        %v1971 = vpop.f32.mrf.mxu0
        %1972 = vdwg.mxu0
        %1973 = vmatprep.subr.mxu0 0.0
        %v1974 = vand.u32 %v862, 4294901760
        %1975 = vmatpush1.xpose.msra.mxu0 %v1974
        %1976 = vmatprep.subr.mxu0 0.0
        %v1977 = vand.u32 %v859, 4294901760
        %1978 = vmatpush1.xpose.msra.mxu0 %v1977
        %1979 = vmatprep.subr.mxu0 0.0
        %v1980 = vand.u32 %v856, 4294901760
        %1981 = vmatpush1.xpose.msra.mxu0 %v1980
        %1982 = vmatprep.subr.mxu0 0.0
        %v1983 = vand.u32 %v853, 4294901760
        %1984 = vmatpush1.xpose.msra.mxu0 %v1983
        %1985 = vmatprep.subr.mxu0 0.0
        %v1986 = vand.u32 %v850, 4294901760
        %1987 = vmatpush1.xpose.msra.mxu0 %v1986
        %1988 = vmatprep.subr.mxu0 0.0
        %v1989 = vand.u32 %v847, 4294901760
        %1990 = vmatpush1.xpose.msra.mxu0 %v1989
        %1991 = vmatprep.subr.mxu0 0.0
        %v1992 = vand.u32 %v844, 4294901760
        %1993 = vmatpush1.xpose.msra.mxu0 %v1992
        %1994 = vmatprep.subr.mxu0 0.0
        %v1995 = vand.u32 %v841, 4294901760
        %1996 = vmatpush1.xpose.msra.mxu0 %v1995
        %1997 = vmatprep.subr.mxu0 0.0
        %v1998 = vand.u32 %v838, 4294901760
        %1999 = vmatpush1.xpose.msra.mxu0 %v1998
        %2000 = vmatprep.subr.mxu0 0.0
        %v2001 = vand.u32 %v835, 4294901760
        %2002 = vmatpush1.xpose.msra.mxu0 %v2001
        %2003 = vmatprep.subr.mxu0 0.0
        %v2004 = vand.u32 %v832, 4294901760
        %2005 = vmatpush1.xpose.msra.mxu0 %v2004
        %2006 = vmatprep.subr.mxu0 0.0
        %v2007 = vand.u32 %v829, 4294901760
        %2008 = vmatpush1.xpose.msra.mxu0 %v2007
        %2009 = vmatprep.subr.mxu0 0.0
        %v2010 = vand.u32 %v826, 4294901760
        %2011 = vmatpush1.xpose.msra.mxu0 %v2010
        %2012 = vmatprep.subr.mxu0 0.0
        %v2013 = vand.u32 %v823, 4294901760
        %2014 = vmatpush1.xpose.msra.mxu0 %v2013
        %2015 = vmatprep.subr.mxu0 0.0
        %v2016 = vand.u32 %v820, 4294901760
        %2017 = vmatpush1.xpose.msra.mxu0 %v2016
        %2018 = vmatprep.subr.mxu0 0.0
        %v2019 = vand.u32 %v817, 4294901760
        %2020 = vmatpush1.xpose.msra.mxu0 %v2019
        %2021 = vmatprep.subr.mxu0 0.0
        %2022 = vmatpush2.xpose.msra.mxu0 0.0
        %2023 = vmatprep.subr.mxu0 0.0
        %2024 = vmatpush2.xpose.msra.mxu0 0.0
        %2025 = vmatprep.subr.mxu0 0.0
        %2026 = vmatpush2.xpose.msra.mxu0 0.0
        %2027 = vmatprep.subr.mxu0 0.0
        %2028 = vmatpush2.xpose.msra.mxu0 0.0
        %2029 = vmatprep.subr.mxu0 0.0
        %2030 = vmatpush2.xpose.msra.mxu0 0.0
        %2031 = vmatprep.subr.mxu0 0.0
        %2032 = vmatpush2.xpose.msra.mxu0 0.0
        %2033 = vmatprep.subr.mxu0 0.0
        %2034 = vmatpush2.xpose.msra.mxu0 0.0
        %2035 = vmatprep.subr.mxu0 0.0
        %2036 = vmatpush2.xpose.msra.mxu0 0.0
        %2037 = vmatprep.subr.mxu0 0.0
        %2038 = vmatpush2.xpose.msra.mxu0 0.0
        %2039 = vmatprep.subr.mxu0 0.0
        %2040 = vmatpush2.xpose.msra.mxu0 0.0
        %2041 = vmatprep.subr.mxu0 0.0
        %2042 = vmatpush2.xpose.msra.mxu0 0.0
        %2043 = vmatprep.subr.mxu0 0.0
        %2044 = vmatpush2.xpose.msra.mxu0 0.0
        %2045 = vmatprep.subr.mxu0 0.0
        %2046 = vmatpush2.xpose.msra.mxu0 0.0
        %2047 = vmatprep.subr.mxu0 0.0
        %2048 = vmatpush2.xpose.msra.mxu0 0.0
        %2049 = vmatprep.subr.mxu0 0.0
        %2050 = vmatpush2.xpose.msra.mxu0 0.0
        %2051 = vmatprep.subr.mxu0 0.0
        %2052 = vmatpush2.xpose.msra.mxu0 0.0
        %2053 = vmatprep.mubr.f32.mxu0 0.0
        %v2054 = vand.u32 %v769, 4294901760
        %2055 = vmatmul.mubr.f32.gmra.mxu0 %v2054
        %v2056 = vpop.f32.mrf.mxu0
        %v2057 = vadd.f32 %v1880, %v2056
        %v2058 = vpop.f32.mrf.mxu0
        %2059 = vmatprep.mubr.f32.mxu0 0.0
        %v2060 = vand.u32 %v772, 4294901760
        %2061 = vmatmul.mubr.f32.gmra.mxu0 %v2060
        %v2062 = vpop.f32.mrf.mxu0
        %v2063 = vadd.f32 %v1886, %v2062
        %v2064 = vpop.f32.mrf.mxu0
        %2065 = vmatprep.mubr.f32.mxu0 0.0
        %v2066 = vand.u32 %v775, 4294901760
        %2067 = vmatmul.mubr.f32.gmra.mxu0 %v2066
        %v2068 = vpop.f32.mrf.mxu0
        %v2069 = vadd.f32 %v1892, %v2068
        %v2070 = vpop.f32.mrf.mxu0
        %2071 = vmatprep.mubr.f32.mxu0 0.0
        %v2072 = vand.u32 %v778, 4294901760
        %2073 = vmatmul.mubr.f32.gmra.mxu0 %v2072
        %v2074 = vpop.f32.mrf.mxu0
        %v2075 = vadd.f32 %v1898, %v2074
        %v2076 = vpop.f32.mrf.mxu0
        %2077 = vmatprep.mubr.f32.mxu0 0.0
        %v2078 = vand.u32 %v781, 4294901760
        %2079 = vmatmul.mubr.f32.gmra.mxu0 %v2078
        %v2080 = vpop.f32.mrf.mxu0
        %v2081 = vadd.f32 %v1904, %v2080
        %v2082 = vpop.f32.mrf.mxu0
        %2083 = vmatprep.mubr.f32.mxu0 0.0
        %v2084 = vand.u32 %v784, 4294901760
        %2085 = vmatmul.mubr.f32.gmra.mxu0 %v2084
        %v2086 = vpop.f32.mrf.mxu0
        %v2087 = vadd.f32 %v1910, %v2086
        %v2088 = vpop.f32.mrf.mxu0
        %2089 = vmatprep.mubr.f32.mxu0 0.0
        %v2090 = vand.u32 %v787, 4294901760
        %2091 = vmatmul.mubr.f32.gmra.mxu0 %v2090
        %v2092 = vpop.f32.mrf.mxu0
        %v2093 = vadd.f32 %v1916, %v2092
        %v2094 = vpop.f32.mrf.mxu0
        %2095 = vmatprep.mubr.f32.mxu0 0.0
        %v2096 = vand.u32 %v790, 4294901760
        %2097 = vmatmul.mubr.f32.gmra.mxu0 %v2096
        %v2098 = vpop.f32.mrf.mxu0
        %v2099 = vadd.f32 %v1922, %v2098
        %v2100 = vpop.f32.mrf.mxu0
        %2101 = vmatprep.mubr.f32.mxu0 0.0
        %v2102 = vand.u32 %v793, 4294901760
        %2103 = vmatmul.mubr.f32.gmra.mxu0 %v2102
        %v2104 = vpop.f32.mrf.mxu0
        %v2105 = vadd.f32 %v1928, %v2104
        %v2106 = vpop.f32.mrf.mxu0
        %2107 = vmatprep.mubr.f32.mxu0 0.0
        %v2108 = vand.u32 %v796, 4294901760
        %2109 = vmatmul.mubr.f32.gmra.mxu0 %v2108
        %v2110 = vpop.f32.mrf.mxu0
        %v2111 = vadd.f32 %v1934, %v2110
        %v2112 = vpop.f32.mrf.mxu0
        %2113 = vmatprep.mubr.f32.mxu0 0.0
        %v2114 = vand.u32 %v799, 4294901760
        %2115 = vmatmul.mubr.f32.gmra.mxu0 %v2114
        %v2116 = vpop.f32.mrf.mxu0
        %v2117 = vadd.f32 %v1940, %v2116
        %v2118 = vpop.f32.mrf.mxu0
        %2119 = vmatprep.mubr.f32.mxu0 0.0
        %v2120 = vand.u32 %v802, 4294901760
        %2121 = vmatmul.mubr.f32.gmra.mxu0 %v2120
        %v2122 = vpop.f32.mrf.mxu0
        %v2123 = vadd.f32 %v1946, %v2122
        %v2124 = vpop.f32.mrf.mxu0
        %2125 = vmatprep.mubr.f32.mxu0 0.0
        %v2126 = vand.u32 %v805, 4294901760
        %2127 = vmatmul.mubr.f32.gmra.mxu0 %v2126
        %v2128 = vpop.f32.mrf.mxu0
        %v2129 = vadd.f32 %v1952, %v2128
        %v2130 = vpop.f32.mrf.mxu0
        %2131 = vmatprep.mubr.f32.mxu0 0.0
        %v2132 = vand.u32 %v808, 4294901760
        %2133 = vmatmul.mubr.f32.gmra.mxu0 %v2132
        %v2134 = vpop.f32.mrf.mxu0
        %v2135 = vadd.f32 %v1958, %v2134
        %v2136 = vpop.f32.mrf.mxu0
        %2137 = vmatprep.mubr.f32.mxu0 0.0
        %v2138 = vand.u32 %v811, 4294901760
        %2139 = vmatmul.mubr.f32.gmra.mxu0 %v2138
        %v2140 = vpop.f32.mrf.mxu0
        %v2141 = vadd.f32 %v1964, %v2140
        %v2142 = vpop.f32.mrf.mxu0
        %2143 = vmatprep.mubr.f32.mxu0 0.0
        %v2144 = vand.u32 %v814, 4294901760
        %2145 = vmatmul.mubr.f32.gmra.mxu0 %v2144
        %v2146 = vpop.f32.mrf.mxu0
        %v2147 = vadd.f32 %v1970, %v2146
        %v2148 = vpop.f32.mrf.mxu0
        %2149 = vdwg.mxu0
        %v2150 = vld [vmem:[%s539] sm:$0xff]
        %v2151 = vld [vmem:[%s539 + $0x8] sm:$0xff]
        %v2152 = vld [vmem:[%s539 + $0x10] sm:$0xff]
        %v2153 = vld [vmem:[%s539 + $0x18] sm:$0xff]
        %v2154 = vld [vmem:[%s539 + $0x20] sm:$0xff]
        %v2155 = vld [vmem:[%s539 + $0x28] sm:$0xff]
        %v2156 = vld [vmem:[%s539 + $0x30] sm:$0xff]
        %v2157 = vld [vmem:[%s539 + $0x38] sm:$0xff]
        %v2158 = vld [vmem:[%s539 + $0x40] sm:$0xff]
        %v2159 = vld [vmem:[%s539 + $0x48] sm:$0xff]
        %v2160 = vld [vmem:[%s539 + $0x50] sm:$0xff]
        %v2161 = vld [vmem:[%s539 + $0x58] sm:$0xff]
        %v2162 = vld [vmem:[%s539 + $0x60] sm:$0xff]
        %v2163 = vld [vmem:[%s539 + $0x68] sm:$0xff]
        %v2164 = vld [vmem:[%s539 + $0x70] sm:$0xff]
        %v2165 = vld [vmem:[%s539 + $0x78] sm:$0xff]
        %v2166 = vld [vmem:[%s555] sm:$0x1]
        %2167 = vset.pattern.permute.xlu0 0
        %2168 = vperm.xlu0 %2167, %v2150
        %v2169 = vpop.permute.xlu0 %2168
        %2170 = vset.pattern.permute.xlu0 0
        %2171 = vperm.xlu0 %2170, %v2151
        %v2172 = vpop.permute.xlu0 %2171
        %2173 = vset.pattern.permute.xlu0 0
        %2174 = vperm.xlu0 %2173, %v2152
        %v2175 = vpop.permute.xlu0 %2174
        %2176 = vset.pattern.permute.xlu0 0
        %2177 = vperm.xlu0 %2176, %v2153
        %v2178 = vpop.permute.xlu0 %2177
        %2179 = vset.pattern.permute.xlu0 0
        %2180 = vperm.xlu0 %2179, %v2154
        %v2181 = vpop.permute.xlu0 %2180
        %2182 = vset.pattern.permute.xlu0 0
        %2183 = vperm.xlu0 %2182, %v2155
        %v2184 = vpop.permute.xlu0 %2183
        %2185 = vset.pattern.permute.xlu0 0
        %2186 = vperm.xlu0 %2185, %v2156
        %v2187 = vpop.permute.xlu0 %2186
        %2188 = vset.pattern.permute.xlu0 0
        %2189 = vperm.xlu0 %2188, %v2157
        %v2190 = vpop.permute.xlu0 %2189
        %2191 = vset.pattern.permute.xlu0 0
        %2192 = vperm.xlu0 %2191, %v2158
        %v2193 = vpop.permute.xlu0 %2192
        %2194 = vset.pattern.permute.xlu0 0
        %2195 = vperm.xlu0 %2194, %v2159
        %v2196 = vpop.permute.xlu0 %2195
        %2197 = vset.pattern.permute.xlu0 0
        %2198 = vperm.xlu0 %2197, %v2160
        %v2199 = vpop.permute.xlu0 %2198
        %2200 = vset.pattern.permute.xlu0 0
        %2201 = vperm.xlu0 %2200, %v2161
        %v2202 = vpop.permute.xlu0 %2201
        %2203 = vset.pattern.permute.xlu0 0
        %2204 = vperm.xlu0 %2203, %v2162
        %v2205 = vpop.permute.xlu0 %2204
        %2206 = vset.pattern.permute.xlu0 0
        %2207 = vperm.xlu0 %2206, %v2163
        %v2208 = vpop.permute.xlu0 %2207
        %2209 = vset.pattern.permute.xlu0 0
        %2210 = vperm.xlu0 %2209, %v2164
        %v2211 = vpop.permute.xlu0 %2210
        %2212 = vset.pattern.permute.xlu0 0
        %2213 = vperm.xlu0 %2212, %v2165
        %v2214 = vpop.permute.xlu0 %2213
        %v2215 = vlaneseq
        %v2216 = vshrl.u32 %v2215, 7
        %v2217 = vsub.s32 0, %v2216
        %v2218 = vrot.slane %v2166, %v2217
        %vm2219 = vcmp.eq.s32.totalorder %v2169, %v2218
        %vm2220 = vcmp.eq.s32.totalorder %v2172, %v2218
        %vm2221 = vcmp.eq.s32.totalorder %v2175, %v2218
        %vm2222 = vcmp.eq.s32.totalorder %v2178, %v2218
        %vm2223 = vcmp.eq.s32.totalorder %v2181, %v2218
        %vm2224 = vcmp.eq.s32.totalorder %v2184, %v2218
        %vm2225 = vcmp.eq.s32.totalorder %v2187, %v2218
        %vm2226 = vcmp.eq.s32.totalorder %v2190, %v2218
        %vm2227 = vcmp.eq.s32.totalorder %v2193, %v2218
        %vm2228 = vcmp.eq.s32.totalorder %v2196, %v2218
        %vm2229 = vcmp.eq.s32.totalorder %v2199, %v2218
        %vm2230 = vcmp.eq.s32.totalorder %v2202, %v2218
        %vm2231 = vcmp.eq.s32.totalorder %v2205, %v2218
        %vm2232 = vcmp.eq.s32.totalorder %v2208, %v2218
        %vm2233 = vcmp.eq.s32.totalorder %v2211, %v2218
        %vm2234 = vcmp.eq.s32.totalorder %v2214, %v2218
        %v2235 = vld [vmem:[%s570] sm:$0x1]
        %v2236 = vld [vmem:[%s545] sm:$0xff]
        %v2237 = vld [vmem:[%s545 + $0x8] sm:$0xff]
        %v2238 = vld [vmem:[%s545 + $0x10] sm:$0xff]
        %v2239 = vld [vmem:[%s545 + $0x18] sm:$0xff]
        %v2240 = vld [vmem:[%s545 + $0x20] sm:$0xff]
        %v2241 = vld [vmem:[%s545 + $0x28] sm:$0xff]
        %v2242 = vld [vmem:[%s545 + $0x30] sm:$0xff]
        %v2243 = vld [vmem:[%s545 + $0x38] sm:$0xff]
        %v2244 = vld [vmem:[%s545 + $0x40] sm:$0xff]
        %v2245 = vld [vmem:[%s545 + $0x48] sm:$0xff]
        %v2246 = vld [vmem:[%s545 + $0x50] sm:$0xff]
        %v2247 = vld [vmem:[%s545 + $0x58] sm:$0xff]
        %v2248 = vld [vmem:[%s545 + $0x60] sm:$0xff]
        %v2249 = vld [vmem:[%s545 + $0x68] sm:$0xff]
        %v2250 = vld [vmem:[%s545 + $0x70] sm:$0xff]
        %v2251 = vld [vmem:[%s545 + $0x78] sm:$0xff]
        %v2252 = vlaneseq
        %v2253 = vshrl.u32 %v2252, 7
        %v2254 = vsub.s32 0, %v2253
        %v2255 = vrot.slane %v2235, %v2254
        %2256 = vset.pattern.permute.xlu0 0
        %2257 = vperm.xlu0 %2256, %v2236
        %v2258 = vpop.permute.xlu0 %2257
        %2259 = vset.pattern.permute.xlu0 0
        %2260 = vperm.xlu0 %2259, %v2237
        %v2261 = vpop.permute.xlu0 %2260
        %2262 = vset.pattern.permute.xlu0 0
        %2263 = vperm.xlu0 %2262, %v2238
        %v2264 = vpop.permute.xlu0 %2263
        %2265 = vset.pattern.permute.xlu0 0
        %2266 = vperm.xlu0 %2265, %v2239
        %v2267 = vpop.permute.xlu0 %2266
        %2268 = vset.pattern.permute.xlu0 0
        %2269 = vperm.xlu0 %2268, %v2240
        %v2270 = vpop.permute.xlu0 %2269
        %2271 = vset.pattern.permute.xlu0 0
        %2272 = vperm.xlu0 %2271, %v2241
        %v2273 = vpop.permute.xlu0 %2272
        %2274 = vset.pattern.permute.xlu0 0
        %2275 = vperm.xlu0 %2274, %v2242
        %v2276 = vpop.permute.xlu0 %2275
        %2277 = vset.pattern.permute.xlu0 0
        %2278 = vperm.xlu0 %2277, %v2243
        %v2279 = vpop.permute.xlu0 %2278
        %2280 = vset.pattern.permute.xlu0 0
        %2281 = vperm.xlu0 %2280, %v2244
        %v2282 = vpop.permute.xlu0 %2281
        %2283 = vset.pattern.permute.xlu0 0
        %2284 = vperm.xlu0 %2283, %v2245
        %v2285 = vpop.permute.xlu0 %2284
        %2286 = vset.pattern.permute.xlu0 0
        %2287 = vperm.xlu0 %2286, %v2246
        %v2288 = vpop.permute.xlu0 %2287
        %2289 = vset.pattern.permute.xlu0 0
        %2290 = vperm.xlu0 %2289, %v2247
        %v2291 = vpop.permute.xlu0 %2290
        %2292 = vset.pattern.permute.xlu0 0
        %2293 = vperm.xlu0 %2292, %v2248
        %v2294 = vpop.permute.xlu0 %2293
        %2295 = vset.pattern.permute.xlu0 0
        %2296 = vperm.xlu0 %2295, %v2249
        %v2297 = vpop.permute.xlu0 %2296
        %2298 = vset.pattern.permute.xlu0 0
        %2299 = vperm.xlu0 %2298, %v2250
        %v2300 = vpop.permute.xlu0 %2299
        %2301 = vset.pattern.permute.xlu0 0
        %2302 = vperm.xlu0 %2301, %v2251
        %v2303 = vpop.permute.xlu0 %2302
        %vm2304 = vcmp.le.s32.totalorder %v2255, %v2258
        %vm2305 = vcmp.le.s32.totalorder %v2255, %v2261
        %vm2306 = vcmp.le.s32.totalorder %v2255, %v2264
        %vm2307 = vcmp.le.s32.totalorder %v2255, %v2267
        %vm2308 = vcmp.le.s32.totalorder %v2255, %v2270
        %vm2309 = vcmp.le.s32.totalorder %v2255, %v2273
        %vm2310 = vcmp.le.s32.totalorder %v2255, %v2276
        %vm2311 = vcmp.le.s32.totalorder %v2255, %v2279
        %vm2312 = vcmp.le.s32.totalorder %v2255, %v2282
        %vm2313 = vcmp.le.s32.totalorder %v2255, %v2285
        %vm2314 = vcmp.le.s32.totalorder %v2255, %v2288
        %vm2315 = vcmp.le.s32.totalorder %v2255, %v2291
        %vm2316 = vcmp.le.s32.totalorder %v2255, %v2294
        %vm2317 = vcmp.le.s32.totalorder %v2255, %v2297
        %vm2318 = vcmp.le.s32.totalorder %v2255, %v2300
        %vm2319 = vcmp.le.s32.totalorder %v2255, %v2303
        %vm2320 = vmand %vm2219, %vm2304
        %vm2321 = vmand %vm2220, %vm2305
        %vm2322 = vmand %vm2221, %vm2306
        %vm2323 = vmand %vm2222, %vm2307
        %vm2324 = vmand %vm2223, %vm2308
        %vm2325 = vmand %vm2224, %vm2309
        %vm2326 = vmand %vm2225, %vm2310
        %vm2327 = vmand %vm2226, %vm2311
        %vm2328 = vmand %vm2227, %vm2312
        %vm2329 = vmand %vm2228, %vm2313
        %vm2330 = vmand %vm2229, %vm2314
        %vm2331 = vmand %vm2230, %vm2315
        %vm2332 = vmand %vm2231, %vm2316
        %vm2333 = vmand %vm2232, %vm2317
        %vm2334 = vmand %vm2233, %vm2318
        %vm2335 = vmand %vm2234, %vm2319
        %v2336 = vsel %vm2320, %v2057, -1e+30
        %v2337 = vsel %vm2321, %v2063, -1e+30
        %v2338 = vsel %vm2322, %v2069, -1e+30
        %v2339 = vsel %vm2323, %v2075, -1e+30
        %v2340 = vsel %vm2324, %v2081, -1e+30
        %v2341 = vsel %vm2325, %v2087, -1e+30
        %v2342 = vsel %vm2326, %v2093, -1e+30
        %v2343 = vsel %vm2327, %v2099, -1e+30
        %v2344 = vsel %vm2328, %v2105, -1e+30
        %v2345 = vsel %vm2329, %v2111, -1e+30
        %v2346 = vsel %vm2330, %v2117, -1e+30
        %v2347 = vsel %vm2331, %v2123, -1e+30
        %v2348 = vsel %vm2332, %v2129, -1e+30
        %v2349 = vsel %vm2333, %v2135, -1e+30
        %v2350 = vsel %vm2334, %v2141, -1e+30
        %v2351 = vsel %vm2335, %v2147, -1e+30
        %v2352 = vld [vmem:[#allocation2] sm:$0xff]
        %v2353 = vld [vmem:[#allocation2 + $0x8] sm:$0xff]
        %v2354 = vld [vmem:[#allocation2 + $0x10] sm:$0xff]
        %v2355 = vld [vmem:[#allocation2 + $0x18] sm:$0xff]
        %v2356 = vld [vmem:[#allocation2 + $0x20] sm:$0xff]
        %v2357 = vld [vmem:[#allocation2 + $0x28] sm:$0xff]
        %v2358 = vld [vmem:[#allocation2 + $0x30] sm:$0xff]
        %v2359 = vld [vmem:[#allocation2 + $0x38] sm:$0xff]
        %v2360 = vld [vmem:[#allocation2 + $0x40] sm:$0xff]
        %v2361 = vld [vmem:[#allocation2 + $0x48] sm:$0xff]
        %v2362 = vld [vmem:[#allocation2 + $0x50] sm:$0xff]
        %v2363 = vld [vmem:[#allocation2 + $0x58] sm:$0xff]
        %v2364 = vld [vmem:[#allocation2 + $0x60] sm:$0xff]
        %v2365 = vld [vmem:[#allocation2 + $0x68] sm:$0xff]
        %v2366 = vld [vmem:[#allocation2 + $0x70] sm:$0xff]
        %v2367 = vld [vmem:[#allocation2 + $0x78] sm:$0xff]
        %2368 = vmax.xlane.f32.xlu0 %v2336
        %v2369 = vpop.xlane.xlu0 %2368
        %2370 = vmax.xlane.f32.xlu0 %v2337
        %v2371 = vpop.xlane.xlu0 %2370
        %2372 = vmax.xlane.f32.xlu0 %v2338
        %v2373 = vpop.xlane.xlu0 %2372
        %2374 = vmax.xlane.f32.xlu0 %v2339
        %v2375 = vpop.xlane.xlu0 %2374
        %2376 = vmax.xlane.f32.xlu0 %v2340
        %v2377 = vpop.xlane.xlu0 %2376
        %2378 = vmax.xlane.f32.xlu0 %v2341
        %v2379 = vpop.xlane.xlu0 %2378
        %2380 = vmax.xlane.f32.xlu0 %v2342
        %v2381 = vpop.xlane.xlu0 %2380
        %2382 = vmax.xlane.f32.xlu0 %v2343
        %v2383 = vpop.xlane.xlu0 %2382
        %2384 = vmax.xlane.f32.xlu0 %v2344
        %v2385 = vpop.xlane.xlu0 %2384
        %2386 = vmax.xlane.f32.xlu0 %v2345
        %v2387 = vpop.xlane.xlu0 %2386
        %2388 = vmax.xlane.f32.xlu0 %v2346
        %v2389 = vpop.xlane.xlu0 %2388
        %2390 = vmax.xlane.f32.xlu0 %v2347
        %v2391 = vpop.xlane.xlu0 %2390
        %2392 = vmax.xlane.f32.xlu0 %v2348
        %v2393 = vpop.xlane.xlu0 %2392
        %2394 = vmax.xlane.f32.xlu0 %v2349
        %v2395 = vpop.xlane.xlu0 %2394
        %2396 = vmax.xlane.f32.xlu0 %v2350
        %v2397 = vpop.xlane.xlu0 %2396
        %2398 = vmax.xlane.f32.xlu0 %v2351
        %v2399 = vpop.xlane.xlu0 %2398
        %v2400 = vmax.f32 %v2352, %v2369
        %v2401 = vmax.f32 %v2353, %v2371
        %v2402 = vmax.f32 %v2354, %v2373
        %v2403 = vmax.f32 %v2355, %v2375
        %v2404 = vmax.f32 %v2356, %v2377
        %v2405 = vmax.f32 %v2357, %v2379
        %v2406 = vmax.f32 %v2358, %v2381
        %v2407 = vmax.f32 %v2359, %v2383
        %v2408 = vmax.f32 %v2360, %v2385
        %v2409 = vmax.f32 %v2361, %v2387
        %v2410 = vmax.f32 %v2362, %v2389
        %v2411 = vmax.f32 %v2363, %v2391
        %v2412 = vmax.f32 %v2364, %v2393
        %v2413 = vmax.f32 %v2365, %v2395
        %v2414 = vmax.f32 %v2366, %v2397
        %v2415 = vmax.f32 %v2367, %v2399
        %v2416 = vsub.f32 %v2352, %v2400
        %v2417 = vsub.f32 %v2353, %v2401
        %v2418 = vsub.f32 %v2354, %v2402
        %v2419 = vsub.f32 %v2355, %v2403
        %v2420 = vsub.f32 %v2356, %v2404
        %v2421 = vsub.f32 %v2357, %v2405
        %v2422 = vsub.f32 %v2358, %v2406
        %v2423 = vsub.f32 %v2359, %v2407
        %v2424 = vsub.f32 %v2360, %v2408
        %v2425 = vsub.f32 %v2361, %v2409
        %v2426 = vsub.f32 %v2362, %v2410
        %v2427 = vsub.f32 %v2363, %v2411
        %v2428 = vsub.f32 %v2364, %v2412
        %v2429 = vsub.f32 %v2365, %v2413
        %v2430 = vsub.f32 %v2366, %v2414
        %v2431 = vsub.f32 %v2367, %v2415
        %v2432 = vmul.f32 %v2416, 1.442695
        %v2433 = vpow.pop %v2432
        %v2434 = vmul.f32 %v2417, 1.442695
        %v2435 = vpow.pop %v2434
        %v2436 = vmul.f32 %v2418, 1.442695
        %v2437 = vpow.pop %v2436
        %v2438 = vmul.f32 %v2419, 1.442695
        %v2439 = vpow.pop %v2438
        %v2440 = vmul.f32 %v2420, 1.442695
        %v2441 = vpow.pop %v2440
        %v2442 = vmul.f32 %v2421, 1.442695
        %v2443 = vpow.pop %v2442
        %v2444 = vmul.f32 %v2422, 1.442695
        %v2445 = vpow.pop %v2444
        %v2446 = vmul.f32 %v2423, 1.442695
        %v2447 = vpow.pop %v2446
        %v2448 = vmul.f32 %v2424, 1.442695
        %v2449 = vpow.pop %v2448
        %v2450 = vmul.f32 %v2425, 1.442695
        %v2451 = vpow.pop %v2450
        %v2452 = vmul.f32 %v2426, 1.442695
        %v2453 = vpow.pop %v2452
        %v2454 = vmul.f32 %v2427, 1.442695
        %v2455 = vpow.pop %v2454
        %v2456 = vmul.f32 %v2428, 1.442695
        %v2457 = vpow.pop %v2456
        %v2458 = vmul.f32 %v2429, 1.442695
        %v2459 = vpow.pop %v2458
        %v2460 = vmul.f32 %v2430, 1.442695
        %v2461 = vpow.pop %v2460
        %v2462 = vmul.f32 %v2431, 1.442695
        %v2463 = vpow.pop %v2462
        %2465 = vset.pattern.permute.xlu0 0
        %2466 = vperm.xlu0 %2465, %v2400
        %v2467 = vpop.permute.xlu0 %2466
        %2470 = vset.pattern.permute.xlu0 0
        %2471 = vperm.xlu0 %2470, %v2401
        %v2472 = vpop.permute.xlu0 %2471
        %2475 = vset.pattern.permute.xlu0 0
        %2476 = vperm.xlu0 %2475, %v2402
        %v2477 = vpop.permute.xlu0 %2476
        %2480 = vset.pattern.permute.xlu0 0
        %2481 = vperm.xlu0 %2480, %v2403
        %v2482 = vpop.permute.xlu0 %2481
        %2485 = vset.pattern.permute.xlu0 0
        %2486 = vperm.xlu0 %2485, %v2404
        %v2487 = vpop.permute.xlu0 %2486
        %2490 = vset.pattern.permute.xlu0 0
        %2491 = vperm.xlu0 %2490, %v2405
        %v2492 = vpop.permute.xlu0 %2491
        %2495 = vset.pattern.permute.xlu0 0
        %2496 = vperm.xlu0 %2495, %v2406
        %v2497 = vpop.permute.xlu0 %2496
        %2500 = vset.pattern.permute.xlu0 0
        %2501 = vperm.xlu0 %2500, %v2407
        %v2502 = vpop.permute.xlu0 %2501
        %2505 = vset.pattern.permute.xlu0 0
        %2506 = vperm.xlu0 %2505, %v2408
        %v2507 = vpop.permute.xlu0 %2506
        %2510 = vset.pattern.permute.xlu0 0
        %2511 = vperm.xlu0 %2510, %v2409
        %v2512 = vpop.permute.xlu0 %2511
        %2515 = vset.pattern.permute.xlu0 0
        %2516 = vperm.xlu0 %2515, %v2410
        %v2517 = vpop.permute.xlu0 %2516
        %2520 = vset.pattern.permute.xlu0 0
        %2521 = vperm.xlu0 %2520, %v2411
        %v2522 = vpop.permute.xlu0 %2521
        %2525 = vset.pattern.permute.xlu0 0
        %2526 = vperm.xlu0 %2525, %v2412
        %v2527 = vpop.permute.xlu0 %2526
        %2530 = vset.pattern.permute.xlu0 0
        %2531 = vperm.xlu0 %2530, %v2413
        %v2532 = vpop.permute.xlu0 %2531
        %2535 = vset.pattern.permute.xlu0 0
        %2536 = vperm.xlu0 %2535, %v2414
        %v2537 = vpop.permute.xlu0 %2536
        %2540 = vset.pattern.permute.xlu0 0
        %2541 = vperm.xlu0 %2540, %v2415
        %v2542 = vpop.permute.xlu0 %2541
        %v2544 = vsub.f32 %v2336, %v2467
        %v2545 = vsub.f32 %v2337, %v2472
        %v2546 = vsub.f32 %v2338, %v2477
        %v2547 = vsub.f32 %v2339, %v2482
        %v2548 = vsub.f32 %v2340, %v2487
        %v2549 = vsub.f32 %v2341, %v2492
        %v2550 = vsub.f32 %v2342, %v2497
        %v2551 = vsub.f32 %v2343, %v2502
        %v2552 = vsub.f32 %v2344, %v2507
        %v2553 = vsub.f32 %v2345, %v2512
        %v2554 = vsub.f32 %v2346, %v2517
        %v2555 = vsub.f32 %v2347, %v2522
        %v2556 = vsub.f32 %v2348, %v2527
        %v2557 = vsub.f32 %v2349, %v2532
        %v2558 = vsub.f32 %v2350, %v2537
        %v2559 = vsub.f32 %v2351, %v2542
        %v2560 = vmul.f32 %v2544, 1.442695
        %v2561 = vpow.pop %v2560
        %v2562 = vmul.f32 %v2545, 1.442695
        %v2563 = vpow.pop %v2562
        %v2564 = vmul.f32 %v2546, 1.442695
        %v2565 = vpow.pop %v2564
        %v2566 = vmul.f32 %v2547, 1.442695
        %v2567 = vpow.pop %v2566
        %v2568 = vmul.f32 %v2548, 1.442695
        %v2569 = vpow.pop %v2568
        %v2570 = vmul.f32 %v2549, 1.442695
        %v2571 = vpow.pop %v2570
        %v2572 = vmul.f32 %v2550, 1.442695
        %v2573 = vpow.pop %v2572
        %v2574 = vmul.f32 %v2551, 1.442695
        %v2575 = vpow.pop %v2574
        %v2576 = vmul.f32 %v2552, 1.442695
        %v2577 = vpow.pop %v2576
        %v2578 = vmul.f32 %v2553, 1.442695
        %v2579 = vpow.pop %v2578
        %v2580 = vmul.f32 %v2554, 1.442695
        %v2581 = vpow.pop %v2580
        %v2582 = vmul.f32 %v2555, 1.442695
        %v2583 = vpow.pop %v2582
        %v2584 = vmul.f32 %v2556, 1.442695
        %v2585 = vpow.pop %v2584
        %v2586 = vmul.f32 %v2557, 1.442695
        %v2587 = vpow.pop %v2586
        %v2588 = vmul.f32 %v2558, 1.442695
        %v2589 = vpow.pop %v2588
        %v2590 = vmul.f32 %v2559, 1.442695
        %v2591 = vpow.pop %v2590
        %v2592 = vsel %vm2320, %v2561, 0.0
        %v2593 = vsel %vm2321, %v2563, 0.0
        %v2594 = vsel %vm2322, %v2565, 0.0
        %v2595 = vsel %vm2323, %v2567, 0.0
        %v2596 = vsel %vm2324, %v2569, 0.0
        %v2597 = vsel %vm2325, %v2571, 0.0
        %v2598 = vsel %vm2326, %v2573, 0.0
        %v2599 = vsel %vm2327, %v2575, 0.0
        %v2600 = vsel %vm2328, %v2577, 0.0
        %v2601 = vsel %vm2329, %v2579, 0.0
        %v2602 = vsel %vm2330, %v2581, 0.0
        %v2603 = vsel %vm2331, %v2583, 0.0
        %v2604 = vsel %vm2332, %v2585, 0.0
        %v2605 = vsel %vm2333, %v2587, 0.0
        %v2606 = vsel %vm2334, %v2589, 0.0
        %v2607 = vsel %vm2335, %v2591, 0.0
        %v2608 = vld [vmem:[#allocation3] sm:$0xff]
        %v2609 = vld [vmem:[#allocation3 + $0x8] sm:$0xff]
        %v2610 = vld [vmem:[#allocation3 + $0x10] sm:$0xff]
        %v2611 = vld [vmem:[#allocation3 + $0x18] sm:$0xff]
        %v2612 = vld [vmem:[#allocation3 + $0x20] sm:$0xff]
        %v2613 = vld [vmem:[#allocation3 + $0x28] sm:$0xff]
        %v2614 = vld [vmem:[#allocation3 + $0x30] sm:$0xff]
        %v2615 = vld [vmem:[#allocation3 + $0x38] sm:$0xff]
        %v2616 = vld [vmem:[#allocation3 + $0x40] sm:$0xff]
        %v2617 = vld [vmem:[#allocation3 + $0x48] sm:$0xff]
        %v2618 = vld [vmem:[#allocation3 + $0x50] sm:$0xff]
        %v2619 = vld [vmem:[#allocation3 + $0x58] sm:$0xff]
        %v2620 = vld [vmem:[#allocation3 + $0x60] sm:$0xff]
        %v2621 = vld [vmem:[#allocation3 + $0x68] sm:$0xff]
        %v2622 = vld [vmem:[#allocation3 + $0x70] sm:$0xff]
        %v2623 = vld [vmem:[#allocation3 + $0x78] sm:$0xff]
        %v2624 = vmul.f32 %v2433, %v2608
        %v2625 = vmul.f32 %v2435, %v2609
        %v2626 = vmul.f32 %v2437, %v2610
        %v2627 = vmul.f32 %v2439, %v2611
        %v2628 = vmul.f32 %v2441, %v2612
        %v2629 = vmul.f32 %v2443, %v2613
        %v2630 = vmul.f32 %v2445, %v2614
        %v2631 = vmul.f32 %v2447, %v2615
        %v2632 = vmul.f32 %v2449, %v2616
        %v2633 = vmul.f32 %v2451, %v2617
        %v2634 = vmul.f32 %v2453, %v2618
        %v2635 = vmul.f32 %v2455, %v2619
        %v2636 = vmul.f32 %v2457, %v2620
        %v2637 = vmul.f32 %v2459, %v2621
        %v2638 = vmul.f32 %v2461, %v2622
        %v2639 = vmul.f32 %v2463, %v2623
        %2640 = vadd.xlane.f32.xlu0 %v2592
        %v2641 = vpop.xlane.xlu0 %2640
        %2642 = vadd.xlane.f32.xlu0 %v2593
        %v2643 = vpop.xlane.xlu0 %2642
        %2644 = vadd.xlane.f32.xlu0 %v2594
        %v2645 = vpop.xlane.xlu0 %2644
        %2646 = vadd.xlane.f32.xlu0 %v2595
        %v2647 = vpop.xlane.xlu0 %2646
        %2648 = vadd.xlane.f32.xlu0 %v2596
        %v2649 = vpop.xlane.xlu0 %2648
        %2650 = vadd.xlane.f32.xlu0 %v2597
        %v2651 = vpop.xlane.xlu0 %2650
        %2652 = vadd.xlane.f32.xlu0 %v2598
        %v2653 = vpop.xlane.xlu0 %2652
        %2654 = vadd.xlane.f32.xlu0 %v2599
        %v2655 = vpop.xlane.xlu0 %2654
        %2656 = vadd.xlane.f32.xlu0 %v2600
        %v2657 = vpop.xlane.xlu0 %2656
        %2658 = vadd.xlane.f32.xlu0 %v2601
        %v2659 = vpop.xlane.xlu0 %2658
        %2660 = vadd.xlane.f32.xlu0 %v2602
        %v2661 = vpop.xlane.xlu0 %2660
        %2662 = vadd.xlane.f32.xlu0 %v2603
        %v2663 = vpop.xlane.xlu0 %2662
        %2664 = vadd.xlane.f32.xlu0 %v2604
        %v2665 = vpop.xlane.xlu0 %2664
        %2666 = vadd.xlane.f32.xlu0 %v2605
        %v2667 = vpop.xlane.xlu0 %2666
        %2668 = vadd.xlane.f32.xlu0 %v2606
        %v2669 = vpop.xlane.xlu0 %2668
        %2670 = vadd.xlane.f32.xlu0 %v2607
        %v2671 = vpop.xlane.xlu0 %2670
        %v2672 = vadd.f32 %v2624, %v2641
        %v2673 = vadd.f32 %v2625, %v2643
        %v2674 = vadd.f32 %v2626, %v2645
        %v2675 = vadd.f32 %v2627, %v2647
        %v2676 = vadd.f32 %v2628, %v2649
        %v2677 = vadd.f32 %v2629, %v2651
        %v2678 = vadd.f32 %v2630, %v2653
        %v2679 = vadd.f32 %v2631, %v2655
        %v2680 = vadd.f32 %v2632, %v2657
        %v2681 = vadd.f32 %v2633, %v2659
        %v2682 = vadd.f32 %v2634, %v2661
        %v2683 = vadd.f32 %v2635, %v2663
        %v2684 = vadd.f32 %v2636, %v2665
        %v2685 = vadd.f32 %v2637, %v2667
        %v2686 = vadd.f32 %v2638, %v2669
        %v2687 = vadd.f32 %v2639, %v2671
        %vm2688 = vcmask 7168
        %2689 = vst.msk [vmem:[#allocation3] sm:$0xff] %vm2688, %v2672
        %2690 = vst.msk [vmem:[#allocation3 + $0x8] sm:$0xff] %vm2688, %v2673
        %2691 = vst.msk [vmem:[#allocation3 + $0x10] sm:$0xff] %vm2688, %v2674
        %2692 = vst.msk [vmem:[#allocation3 + $0x18] sm:$0xff] %vm2688, %v2675
        %2693 = vst.msk [vmem:[#allocation3 + $0x20] sm:$0xff] %vm2688, %v2676
        %2694 = vst.msk [vmem:[#allocation3 + $0x28] sm:$0xff] %vm2688, %v2677
        %2695 = vst.msk [vmem:[#allocation3 + $0x30] sm:$0xff] %vm2688, %v2678
        %2696 = vst.msk [vmem:[#allocation3 + $0x38] sm:$0xff] %vm2688, %v2679
        %2697 = vst.msk [vmem:[#allocation3 + $0x40] sm:$0xff] %vm2688, %v2680
        %2698 = vst.msk [vmem:[#allocation3 + $0x48] sm:$0xff] %vm2688, %v2681
        %2699 = vst.msk [vmem:[#allocation3 + $0x50] sm:$0xff] %vm2688, %v2682
        %2700 = vst.msk [vmem:[#allocation3 + $0x58] sm:$0xff] %vm2688, %v2683
        %2701 = vst.msk [vmem:[#allocation3 + $0x60] sm:$0xff] %vm2688, %v2684
        %2702 = vst.msk [vmem:[#allocation3 + $0x68] sm:$0xff] %vm2688, %v2685
        %2703 = vst.msk [vmem:[#allocation3 + $0x70] sm:$0xff] %vm2688, %v2686
        %2704 = vst.msk [vmem:[#allocation3 + $0x78] sm:$0xff] %vm2688, %v2687
        %v2705 = vld [vmem:[#allocation4] sm:$0xff]
        %v2706 = vld [vmem:[#allocation4 + $0x8] sm:$0xff]
        %v2707 = vld [vmem:[#allocation4 + $0x10] sm:$0xff]
        %v2708 = vld [vmem:[#allocation4 + $0x18] sm:$0xff]
        %v2709 = vld [vmem:[#allocation4 + $0x20] sm:$0xff]
        %v2710 = vld [vmem:[#allocation4 + $0x28] sm:$0xff]
        %v2711 = vld [vmem:[#allocation4 + $0x30] sm:$0xff]
        %v2712 = vld [vmem:[#allocation4 + $0x38] sm:$0xff]
        %v2713 = vld [vmem:[#allocation4 + $0x40] sm:$0xff]
        %v2714 = vld [vmem:[#allocation4 + $0x48] sm:$0xff]
        %v2715 = vld [vmem:[#allocation4 + $0x50] sm:$0xff]
        %v2716 = vld [vmem:[#allocation4 + $0x58] sm:$0xff]
        %v2717 = vld [vmem:[#allocation4 + $0x60] sm:$0xff]
        %v2718 = vld [vmem:[#allocation4 + $0x68] sm:$0xff]
        %v2719 = vld [vmem:[#allocation4 + $0x70] sm:$0xff]
        %v2720 = vld [vmem:[#allocation4 + $0x78] sm:$0xff]
        %2722 = vset.pattern.permute.xlu0 0
        %2723 = vperm.xlu0 %2722, %v2433
        %v2724 = vpop.permute.xlu0 %2723
        %2727 = vset.pattern.permute.xlu0 0
        %2728 = vperm.xlu0 %2727, %v2435
        %v2729 = vpop.permute.xlu0 %2728
        %2732 = vset.pattern.permute.xlu0 0
        %2733 = vperm.xlu0 %2732, %v2437
        %v2734 = vpop.permute.xlu0 %2733
        %2737 = vset.pattern.permute.xlu0 0
        %2738 = vperm.xlu0 %2737, %v2439
        %v2739 = vpop.permute.xlu0 %2738
        %2742 = vset.pattern.permute.xlu0 0
        %2743 = vperm.xlu0 %2742, %v2441
        %v2744 = vpop.permute.xlu0 %2743
        %2747 = vset.pattern.permute.xlu0 0
        %2748 = vperm.xlu0 %2747, %v2443
        %v2749 = vpop.permute.xlu0 %2748
        %2752 = vset.pattern.permute.xlu0 0
        %2753 = vperm.xlu0 %2752, %v2445
        %v2754 = vpop.permute.xlu0 %2753
        %2757 = vset.pattern.permute.xlu0 0
        %2758 = vperm.xlu0 %2757, %v2447
        %v2759 = vpop.permute.xlu0 %2758
        %2762 = vset.pattern.permute.xlu0 0
        %2763 = vperm.xlu0 %2762, %v2449
        %v2764 = vpop.permute.xlu0 %2763
        %2767 = vset.pattern.permute.xlu0 0
        %2768 = vperm.xlu0 %2767, %v2451
        %v2769 = vpop.permute.xlu0 %2768
        %2772 = vset.pattern.permute.xlu0 0
        %2773 = vperm.xlu0 %2772, %v2453
        %v2774 = vpop.permute.xlu0 %2773
        %2777 = vset.pattern.permute.xlu0 0
        %2778 = vperm.xlu0 %2777, %v2455
        %v2779 = vpop.permute.xlu0 %2778
        %2782 = vset.pattern.permute.xlu0 0
        %2783 = vperm.xlu0 %2782, %v2457
        %v2784 = vpop.permute.xlu0 %2783
        %2787 = vset.pattern.permute.xlu0 0
        %2788 = vperm.xlu0 %2787, %v2459
        %v2789 = vpop.permute.xlu0 %2788
        %2792 = vset.pattern.permute.xlu0 0
        %2793 = vperm.xlu0 %2792, %v2461
        %v2794 = vpop.permute.xlu0 %2793
        %2797 = vset.pattern.permute.xlu0 0
        %2798 = vperm.xlu0 %2797, %v2463
        %v2799 = vpop.permute.xlu0 %2798
        %v2801 = vmul.f32 %v2724, %v2705
        %v2802 = vmul.f32 %v2729, %v2706
        %v2803 = vmul.f32 %v2734, %v2707
        %v2804 = vmul.f32 %v2739, %v2708
        %v2805 = vmul.f32 %v2744, %v2709
        %v2806 = vmul.f32 %v2749, %v2710
        %v2807 = vmul.f32 %v2754, %v2711
        %v2808 = vmul.f32 %v2759, %v2712
        %v2809 = vmul.f32 %v2764, %v2713
        %v2810 = vmul.f32 %v2769, %v2714
        %v2811 = vmul.f32 %v2774, %v2715
        %v2812 = vmul.f32 %v2779, %v2716
        %v2813 = vmul.f32 %v2784, %v2717
        %v2814 = vmul.f32 %v2789, %v2718
        %v2815 = vmul.f32 %v2794, %v2719
        %v2816 = vmul.f32 %v2799, %v2720
        %2817 = vmatprep.subr.mxu0 0.0
        %v2818 = vand.u32 %v750, 4294901760
        %2819 = vmatpush1.msra.mxu0 %v2818
        %2820 = vmatprep.subr.mxu0 0.0
        %v2821 = vand.u32 %v749, 4294901760
        %2822 = vmatpush1.msra.mxu0 %v2821
        %2823 = vmatprep.subr.mxu0 0.0
        %v2824 = vand.u32 %v748, 4294901760
        %2825 = vmatpush1.msra.mxu0 %v2824
        %2826 = vmatprep.subr.mxu0 0.0
        %v2827 = vand.u32 %v747, 4294901760
        %2828 = vmatpush1.msra.mxu0 %v2827
        %2829 = vmatprep.subr.mxu0 0.0
        %v2830 = vand.u32 %v746, 4294901760
        %2831 = vmatpush1.msra.mxu0 %v2830
        %2832 = vmatprep.subr.mxu0 0.0
        %v2833 = vand.u32 %v745, 4294901760
        %2834 = vmatpush1.msra.mxu0 %v2833
        %2835 = vmatprep.subr.mxu0 0.0
        %v2836 = vand.u32 %v744, 4294901760
        %2837 = vmatpush1.msra.mxu0 %v2836
        %2838 = vmatprep.subr.mxu0 0.0
        %v2839 = vand.u32 %v743, 4294901760
        %2840 = vmatpush1.msra.mxu0 %v2839
        %2841 = vmatprep.subr.mxu0 0.0
        %v2842 = vand.u32 %v742, 4294901760
        %2843 = vmatpush1.msra.mxu0 %v2842
        %2844 = vmatprep.subr.mxu0 0.0
        %v2845 = vand.u32 %v741, 4294901760
        %2846 = vmatpush1.msra.mxu0 %v2845
        %2847 = vmatprep.subr.mxu0 0.0
        %v2848 = vand.u32 %v740, 4294901760
        %2849 = vmatpush1.msra.mxu0 %v2848
        %2850 = vmatprep.subr.mxu0 0.0
        %v2851 = vand.u32 %v739, 4294901760
        %2852 = vmatpush1.msra.mxu0 %v2851
        %2853 = vmatprep.subr.mxu0 0.0
        %v2854 = vand.u32 %v738, 4294901760
        %2855 = vmatpush1.msra.mxu0 %v2854
        %2856 = vmatprep.subr.mxu0 0.0
        %v2857 = vand.u32 %v737, 4294901760
        %2858 = vmatpush1.msra.mxu0 %v2857
        %2859 = vmatprep.subr.mxu0 0.0
        %v2860 = vand.u32 %v736, 4294901760
        %2861 = vmatpush1.msra.mxu0 %v2860
        %2862 = vmatprep.subr.mxu0 0.0
        %v2863 = vand.u32 %v735, 4294901760
        %2864 = vmatpush1.msra.mxu0 %v2863
        %2865 = vmatprep.subr.mxu0 0.0
        %2866 = vmatpush2.msra.mxu0 0.0
        %2867 = vmatprep.subr.mxu0 0.0
        %2868 = vmatpush2.msra.mxu0 0.0
        %2869 = vmatprep.subr.mxu0 0.0
        %2870 = vmatpush2.msra.mxu0 0.0
        %2871 = vmatprep.subr.mxu0 0.0
        %2872 = vmatpush2.msra.mxu0 0.0
        %2873 = vmatprep.subr.mxu0 0.0
        %2874 = vmatpush2.msra.mxu0 0.0
        %2875 = vmatprep.subr.mxu0 0.0
        %2876 = vmatpush2.msra.mxu0 0.0
        %2877 = vmatprep.subr.mxu0 0.0
        %2878 = vmatpush2.msra.mxu0 0.0
        %2879 = vmatprep.subr.mxu0 0.0
        %2880 = vmatpush2.msra.mxu0 0.0
        %2881 = vmatprep.subr.mxu0 0.0
        %2882 = vmatpush2.msra.mxu0 0.0
        %2883 = vmatprep.subr.mxu0 0.0
        %2884 = vmatpush2.msra.mxu0 0.0
        %2885 = vmatprep.subr.mxu0 0.0
        %2886 = vmatpush2.msra.mxu0 0.0
        %2887 = vmatprep.subr.mxu0 0.0
        %2888 = vmatpush2.msra.mxu0 0.0
        %2889 = vmatprep.subr.mxu0 0.0
        %2890 = vmatpush2.msra.mxu0 0.0
        %2891 = vmatprep.subr.mxu0 0.0
        %2892 = vmatpush2.msra.mxu0 0.0
        %2893 = vmatprep.subr.mxu0 0.0
        %2894 = vmatpush2.msra.mxu0 0.0
        %2895 = vmatprep.subr.mxu0 0.0
        %2896 = vmatpush2.msra.mxu0 0.0
        %2897 = vmatprep.mubr.f32.mxu0 0.0
        %v2898 = vand.u32 %v2592, 4294901760
        %v2899 = vsub.f32 %v2592, %v2898
        %v2900 = vand.u32 %v2899, 4294901760
        %v2901 = vsub.f32 %v2899, %v2900
        %v2902 = vand.u32 %v2901, 4294901760
        %2903 = vmatmul.mubr.f32.gmra.mxu0 %v2902
        %v2904 = vpop.f32.mrf.mxu0
        %v2905 = vadd.f32 0.0, %v2904
        %v2906 = vpop.f32.mrf.mxu0
        %2907 = vmatprep.mubr.f32.mxu0 0.0
        %v2908 = vand.u32 %v2593, 4294901760
        %v2909 = vsub.f32 %v2593, %v2908
        %v2910 = vand.u32 %v2909, 4294901760
        %v2911 = vsub.f32 %v2909, %v2910
        %v2912 = vand.u32 %v2911, 4294901760
        %2913 = vmatmul.mubr.f32.gmra.mxu0 %v2912
        %v2914 = vpop.f32.mrf.mxu0
        %v2915 = vadd.f32 0.0, %v2914
        %v2916 = vpop.f32.mrf.mxu0
        %2917 = vmatprep.mubr.f32.mxu0 0.0
        %v2918 = vand.u32 %v2594, 4294901760
        %v2919 = vsub.f32 %v2594, %v2918
        %v2920 = vand.u32 %v2919, 4294901760
        %v2921 = vsub.f32 %v2919, %v2920
        %v2922 = vand.u32 %v2921, 4294901760
        %2923 = vmatmul.mubr.f32.gmra.mxu0 %v2922
        %v2924 = vpop.f32.mrf.mxu0
        %v2925 = vadd.f32 0.0, %v2924
        %v2926 = vpop.f32.mrf.mxu0
        %2927 = vmatprep.mubr.f32.mxu0 0.0
        %v2928 = vand.u32 %v2595, 4294901760
        %v2929 = vsub.f32 %v2595, %v2928
        %v2930 = vand.u32 %v2929, 4294901760
        %v2931 = vsub.f32 %v2929, %v2930
        %v2932 = vand.u32 %v2931, 4294901760
        %2933 = vmatmul.mubr.f32.gmra.mxu0 %v2932
        %v2934 = vpop.f32.mrf.mxu0
        %v2935 = vadd.f32 0.0, %v2934
        %v2936 = vpop.f32.mrf.mxu0
        %2937 = vmatprep.mubr.f32.mxu0 0.0
        %v2938 = vand.u32 %v2596, 4294901760
        %v2939 = vsub.f32 %v2596, %v2938
        %v2940 = vand.u32 %v2939, 4294901760
        %v2941 = vsub.f32 %v2939, %v2940
        %v2942 = vand.u32 %v2941, 4294901760
        %2943 = vmatmul.mubr.f32.gmra.mxu0 %v2942
        %v2944 = vpop.f32.mrf.mxu0
        %v2945 = vadd.f32 0.0, %v2944
        %v2946 = vpop.f32.mrf.mxu0
        %2947 = vmatprep.mubr.f32.mxu0 0.0
        %v2948 = vand.u32 %v2597, 4294901760
        %v2949 = vsub.f32 %v2597, %v2948
        %v2950 = vand.u32 %v2949, 4294901760
        %v2951 = vsub.f32 %v2949, %v2950
        %v2952 = vand.u32 %v2951, 4294901760
        %2953 = vmatmul.mubr.f32.gmra.mxu0 %v2952
        %v2954 = vpop.f32.mrf.mxu0
        %v2955 = vadd.f32 0.0, %v2954
        %v2956 = vpop.f32.mrf.mxu0
        %2957 = vmatprep.mubr.f32.mxu0 0.0
        %v2958 = vand.u32 %v2598, 4294901760
        %v2959 = vsub.f32 %v2598, %v2958
        %v2960 = vand.u32 %v2959, 4294901760
        %v2961 = vsub.f32 %v2959, %v2960
        %v2962 = vand.u32 %v2961, 4294901760
        %2963 = vmatmul.mubr.f32.gmra.mxu0 %v2962
        %v2964 = vpop.f32.mrf.mxu0
        %v2965 = vadd.f32 0.0, %v2964
        %v2966 = vpop.f32.mrf.mxu0
        %2967 = vmatprep.mubr.f32.mxu0 0.0
        %v2968 = vand.u32 %v2599, 4294901760
        %v2969 = vsub.f32 %v2599, %v2968
        %v2970 = vand.u32 %v2969, 4294901760
        %v2971 = vsub.f32 %v2969, %v2970
        %v2972 = vand.u32 %v2971, 4294901760
        %2973 = vmatmul.mubr.f32.gmra.mxu0 %v2972
        %v2974 = vpop.f32.mrf.mxu0
        %v2975 = vadd.f32 0.0, %v2974
        %v2976 = vpop.f32.mrf.mxu0
        %2977 = vmatprep.mubr.f32.mxu0 0.0
        %v2978 = vand.u32 %v2600, 4294901760
        %v2979 = vsub.f32 %v2600, %v2978
        %v2980 = vand.u32 %v2979, 4294901760
        %v2981 = vsub.f32 %v2979, %v2980
        %v2982 = vand.u32 %v2981, 4294901760
        %2983 = vmatmul.mubr.f32.gmra.mxu0 %v2982
        %v2984 = vpop.f32.mrf.mxu0
        %v2985 = vadd.f32 0.0, %v2984
        %v2986 = vpop.f32.mrf.mxu0
        %2987 = vmatprep.mubr.f32.mxu0 0.0
        %v2988 = vand.u32 %v2601, 4294901760
        %v2989 = vsub.f32 %v2601, %v2988
        %v2990 = vand.u32 %v2989, 4294901760
        %v2991 = vsub.f32 %v2989, %v2990
        %v2992 = vand.u32 %v2991, 4294901760
        %2993 = vmatmul.mubr.f32.gmra.mxu0 %v2992
        %v2994 = vpop.f32.mrf.mxu0
        %v2995 = vadd.f32 0.0, %v2994
        %v2996 = vpop.f32.mrf.mxu0
        %2997 = vmatprep.mubr.f32.mxu0 0.0
        %v2998 = vand.u32 %v2602, 4294901760
        %v2999 = vsub.f32 %v2602, %v2998
        %v3000 = vand.u32 %v2999, 4294901760
        %v3001 = vsub.f32 %v2999, %v3000
        %v3002 = vand.u32 %v3001, 4294901760
        %3003 = vmatmul.mubr.f32.gmra.mxu0 %v3002
        %v3004 = vpop.f32.mrf.mxu0
        %v3005 = vadd.f32 0.0, %v3004
        %v3006 = vpop.f32.mrf.mxu0
        %3007 = vmatprep.mubr.f32.mxu0 0.0
        %v3008 = vand.u32 %v2603, 4294901760
        %v3009 = vsub.f32 %v2603, %v3008
        %v3010 = vand.u32 %v3009, 4294901760
        %v3011 = vsub.f32 %v3009, %v3010
        %v3012 = vand.u32 %v3011, 4294901760
        %3013 = vmatmul.mubr.f32.gmra.mxu0 %v3012
        %v3014 = vpop.f32.mrf.mxu0
        %v3015 = vadd.f32 0.0, %v3014
        %v3016 = vpop.f32.mrf.mxu0
        %3017 = vmatprep.mubr.f32.mxu0 0.0
        %v3018 = vand.u32 %v2604, 4294901760
        %v3019 = vsub.f32 %v2604, %v3018
        %v3020 = vand.u32 %v3019, 4294901760
        %v3021 = vsub.f32 %v3019, %v3020
        %v3022 = vand.u32 %v3021, 4294901760
        %3023 = vmatmul.mubr.f32.gmra.mxu0 %v3022
        %v3024 = vpop.f32.mrf.mxu0
        %v3025 = vadd.f32 0.0, %v3024
        %v3026 = vpop.f32.mrf.mxu0
        %3027 = vmatprep.mubr.f32.mxu0 0.0
        %v3028 = vand.u32 %v2605, 4294901760
        %v3029 = vsub.f32 %v2605, %v3028
        %v3030 = vand.u32 %v3029, 4294901760
        %v3031 = vsub.f32 %v3029, %v3030
        %v3032 = vand.u32 %v3031, 4294901760
        %3033 = vmatmul.mubr.f32.gmra.mxu0 %v3032
        %v3034 = vpop.f32.mrf.mxu0
        %v3035 = vadd.f32 0.0, %v3034
        %v3036 = vpop.f32.mrf.mxu0
        %3037 = vmatprep.mubr.f32.mxu0 0.0
        %v3038 = vand.u32 %v2606, 4294901760
        %v3039 = vsub.f32 %v2606, %v3038
        %v3040 = vand.u32 %v3039, 4294901760
        %v3041 = vsub.f32 %v3039, %v3040
        %v3042 = vand.u32 %v3041, 4294901760
        %3043 = vmatmul.mubr.f32.gmra.mxu0 %v3042
        %v3044 = vpop.f32.mrf.mxu0
        %v3045 = vadd.f32 0.0, %v3044
        %v3046 = vpop.f32.mrf.mxu0
        %3047 = vmatprep.mubr.f32.mxu0 0.0
        %v3048 = vand.u32 %v2607, 4294901760
        %v3049 = vsub.f32 %v2607, %v3048
        %v3050 = vand.u32 %v3049, 4294901760
        %v3051 = vsub.f32 %v3049, %v3050
        %v3052 = vand.u32 %v3051, 4294901760
        %3053 = vmatmul.mubr.f32.gmra.mxu0 %v3052
        %v3054 = vpop.f32.mrf.mxu0
        %v3055 = vadd.f32 0.0, %v3054
        %v3056 = vpop.f32.mrf.mxu0
        %3057 = vdwg.mxu0
        %3058 = vmatprep.subr.mxu0 0.0
        %v3059 = vand.u32 %v750, 4294901760
        %v3060 = vsub.f32 %v750, %v3059
        %v3061 = vand.u32 %v3060, 4294901760
        %v3062 = vsub.f32 %v3060, %v3061
        %v3063 = vand.u32 %v3062, 4294901760
        %3064 = vmatpush1.msra.mxu0 %v3063
        %3065 = vmatprep.subr.mxu0 0.0
        %v3066 = vand.u32 %v749, 4294901760
        %v3067 = vsub.f32 %v749, %v3066
        %v3068 = vand.u32 %v3067, 4294901760
        %v3069 = vsub.f32 %v3067, %v3068
        %v3070 = vand.u32 %v3069, 4294901760
        %3071 = vmatpush1.msra.mxu0 %v3070
        %3072 = vmatprep.subr.mxu0 0.0
        %v3073 = vand.u32 %v748, 4294901760
        %v3074 = vsub.f32 %v748, %v3073
        %v3075 = vand.u32 %v3074, 4294901760
        %v3076 = vsub.f32 %v3074, %v3075
        %v3077 = vand.u32 %v3076, 4294901760
        %3078 = vmatpush1.msra.mxu0 %v3077
        %3079 = vmatprep.subr.mxu0 0.0
        %v3080 = vand.u32 %v747, 4294901760
        %v3081 = vsub.f32 %v747, %v3080
        %v3082 = vand.u32 %v3081, 4294901760
        %v3083 = vsub.f32 %v3081, %v3082
        %v3084 = vand.u32 %v3083, 4294901760
        %3085 = vmatpush1.msra.mxu0 %v3084
        %3086 = vmatprep.subr.mxu0 0.0
        %v3087 = vand.u32 %v746, 4294901760
        %v3088 = vsub.f32 %v746, %v3087
        %v3089 = vand.u32 %v3088, 4294901760
        %v3090 = vsub.f32 %v3088, %v3089
        %v3091 = vand.u32 %v3090, 4294901760
        %3092 = vmatpush1.msra.mxu0 %v3091
        %3093 = vmatprep.subr.mxu0 0.0
        %v3094 = vand.u32 %v745, 4294901760
        %v3095 = vsub.f32 %v745, %v3094
        %v3096 = vand.u32 %v3095, 4294901760
        %v3097 = vsub.f32 %v3095, %v3096
        %v3098 = vand.u32 %v3097, 4294901760
        %3099 = vmatpush1.msra.mxu0 %v3098
        %3100 = vmatprep.subr.mxu0 0.0
        %v3101 = vand.u32 %v744, 4294901760
        %v3102 = vsub.f32 %v744, %v3101
        %v3103 = vand.u32 %v3102, 4294901760
        %v3104 = vsub.f32 %v3102, %v3103
        %v3105 = vand.u32 %v3104, 4294901760
        %3106 = vmatpush1.msra.mxu0 %v3105
        %3107 = vmatprep.subr.mxu0 0.0
        %v3108 = vand.u32 %v743, 4294901760
        %v3109 = vsub.f32 %v743, %v3108
        %v3110 = vand.u32 %v3109, 4294901760
        %v3111 = vsub.f32 %v3109, %v3110
        %v3112 = vand.u32 %v3111, 4294901760
        %3113 = vmatpush1.msra.mxu0 %v3112
        %3114 = vmatprep.subr.mxu0 0.0
        %v3115 = vand.u32 %v742, 4294901760
        %v3116 = vsub.f32 %v742, %v3115
        %v3117 = vand.u32 %v3116, 4294901760
        %v3118 = vsub.f32 %v3116, %v3117
        %v3119 = vand.u32 %v3118, 4294901760
        %3120 = vmatpush1.msra.mxu0 %v3119
        %3121 = vmatprep.subr.mxu0 0.0
        %v3122 = vand.u32 %v741, 4294901760
        %v3123 = vsub.f32 %v741, %v3122
        %v3124 = vand.u32 %v3123, 4294901760
        %v3125 = vsub.f32 %v3123, %v3124
        %v3126 = vand.u32 %v3125, 4294901760
        %3127 = vmatpush1.msra.mxu0 %v3126
        %3128 = vmatprep.subr.mxu0 0.0
        %v3129 = vand.u32 %v740, 4294901760
        %v3130 = vsub.f32 %v740, %v3129
        %v3131 = vand.u32 %v3130, 4294901760
        %v3132 = vsub.f32 %v3130, %v3131
        %v3133 = vand.u32 %v3132, 4294901760
        %3134 = vmatpush1.msra.mxu0 %v3133
        %3135 = vmatprep.subr.mxu0 0.0
        %v3136 = vand.u32 %v739, 4294901760
        %v3137 = vsub.f32 %v739, %v3136
        %v3138 = vand.u32 %v3137, 4294901760
        %v3139 = vsub.f32 %v3137, %v3138
        %v3140 = vand.u32 %v3139, 4294901760
        %3141 = vmatpush1.msra.mxu0 %v3140
        %3142 = vmatprep.subr.mxu0 0.0
        %v3143 = vand.u32 %v738, 4294901760
        %v3144 = vsub.f32 %v738, %v3143
        %v3145 = vand.u32 %v3144, 4294901760
        %v3146 = vsub.f32 %v3144, %v3145
        %v3147 = vand.u32 %v3146, 4294901760
        %3148 = vmatpush1.msra.mxu0 %v3147
        %3149 = vmatprep.subr.mxu0 0.0
        %v3150 = vand.u32 %v737, 4294901760
        %v3151 = vsub.f32 %v737, %v3150
        %v3152 = vand.u32 %v3151, 4294901760
        %v3153 = vsub.f32 %v3151, %v3152
        %v3154 = vand.u32 %v3153, 4294901760
        %3155 = vmatpush1.msra.mxu0 %v3154
        %3156 = vmatprep.subr.mxu0 0.0
        %v3157 = vand.u32 %v736, 4294901760
        %v3158 = vsub.f32 %v736, %v3157
        %v3159 = vand.u32 %v3158, 4294901760
        %v3160 = vsub.f32 %v3158, %v3159
        %v3161 = vand.u32 %v3160, 4294901760
        %3162 = vmatpush1.msra.mxu0 %v3161
        %3163 = vmatprep.subr.mxu0 0.0
        %v3164 = vand.u32 %v735, 4294901760
        %v3165 = vsub.f32 %v735, %v3164
        %v3166 = vand.u32 %v3165, 4294901760
        %v3167 = vsub.f32 %v3165, %v3166
        %v3168 = vand.u32 %v3167, 4294901760
        %3169 = vmatpush1.msra.mxu0 %v3168
        %3170 = vmatprep.subr.mxu0 0.0
        %3171 = vmatpush2.msra.mxu0 0.0
        %3172 = vmatprep.subr.mxu0 0.0
        %3173 = vmatpush2.msra.mxu0 0.0
        %3174 = vmatprep.subr.mxu0 0.0
        %3175 = vmatpush2.msra.mxu0 0.0
        %3176 = vmatprep.subr.mxu0 0.0
        %3177 = vmatpush2.msra.mxu0 0.0
        %3178 = vmatprep.subr.mxu0 0.0
        %3179 = vmatpush2.msra.mxu0 0.0
        %3180 = vmatprep.subr.mxu0 0.0
        %3181 = vmatpush2.msra.mxu0 0.0
        %3182 = vmatprep.subr.mxu0 0.0
        %3183 = vmatpush2.msra.mxu0 0.0
        %3184 = vmatprep.subr.mxu0 0.0
        %3185 = vmatpush2.msra.mxu0 0.0
        %3186 = vmatprep.subr.mxu0 0.0
        %3187 = vmatpush2.msra.mxu0 0.0
        %3188 = vmatprep.subr.mxu0 0.0
        %3189 = vmatpush2.msra.mxu0 0.0
        %3190 = vmatprep.subr.mxu0 0.0
        %3191 = vmatpush2.msra.mxu0 0.0
        %3192 = vmatprep.subr.mxu0 0.0
        %3193 = vmatpush2.msra.mxu0 0.0
        %3194 = vmatprep.subr.mxu0 0.0
        %3195 = vmatpush2.msra.mxu0 0.0
        %3196 = vmatprep.subr.mxu0 0.0
        %3197 = vmatpush2.msra.mxu0 0.0
        %3198 = vmatprep.subr.mxu0 0.0
        %3199 = vmatpush2.msra.mxu0 0.0
        %3200 = vmatprep.subr.mxu0 0.0
        %3201 = vmatpush2.msra.mxu0 0.0
        %3202 = vmatprep.mubr.f32.mxu0 0.0
        %v3203 = vand.u32 %v2592, 4294901760
        %3204 = vmatmul.mubr.f32.gmra.mxu0 %v3203
        %v3205 = vpop.f32.mrf.mxu0
        %v3206 = vadd.f32 %v2905, %v3205
        %v3207 = vpop.f32.mrf.mxu0
        %3208 = vmatprep.mubr.f32.mxu0 0.0
        %v3209 = vand.u32 %v2593, 4294901760
        %3210 = vmatmul.mubr.f32.gmra.mxu0 %v3209
        %v3211 = vpop.f32.mrf.mxu0
        %v3212 = vadd.f32 %v2915, %v3211
        %v3213 = vpop.f32.mrf.mxu0
        %3214 = vmatprep.mubr.f32.mxu0 0.0
        %v3215 = vand.u32 %v2594, 4294901760
        %3216 = vmatmul.mubr.f32.gmra.mxu0 %v3215
        %v3217 = vpop.f32.mrf.mxu0
        %v3218 = vadd.f32 %v2925, %v3217
        %v3219 = vpop.f32.mrf.mxu0
        %3220 = vmatprep.mubr.f32.mxu0 0.0
        %v3221 = vand.u32 %v2595, 4294901760
        %3222 = vmatmul.mubr.f32.gmra.mxu0 %v3221
        %v3223 = vpop.f32.mrf.mxu0
        %v3224 = vadd.f32 %v2935, %v3223
        %v3225 = vpop.f32.mrf.mxu0
        %3226 = vmatprep.mubr.f32.mxu0 0.0
        %v3227 = vand.u32 %v2596, 4294901760
        %3228 = vmatmul.mubr.f32.gmra.mxu0 %v3227
        %v3229 = vpop.f32.mrf.mxu0
        %v3230 = vadd.f32 %v2945, %v3229
        %v3231 = vpop.f32.mrf.mxu0
        %3232 = vmatprep.mubr.f32.mxu0 0.0
        %v3233 = vand.u32 %v2597, 4294901760
        %3234 = vmatmul.mubr.f32.gmra.mxu0 %v3233
        %v3235 = vpop.f32.mrf.mxu0
        %v3236 = vadd.f32 %v2955, %v3235
        %v3237 = vpop.f32.mrf.mxu0
        %3238 = vmatprep.mubr.f32.mxu0 0.0
        %v3239 = vand.u32 %v2598, 4294901760
        %3240 = vmatmul.mubr.f32.gmra.mxu0 %v3239
        %v3241 = vpop.f32.mrf.mxu0
        %v3242 = vadd.f32 %v2965, %v3241
        %v3243 = vpop.f32.mrf.mxu0
        %3244 = vmatprep.mubr.f32.mxu0 0.0
        %v3245 = vand.u32 %v2599, 4294901760
        %3246 = vmatmul.mubr.f32.gmra.mxu0 %v3245
        %v3247 = vpop.f32.mrf.mxu0
        %v3248 = vadd.f32 %v2975, %v3247
        %v3249 = vpop.f32.mrf.mxu0
        %3250 = vmatprep.mubr.f32.mxu0 0.0
        %v3251 = vand.u32 %v2600, 4294901760
        %3252 = vmatmul.mubr.f32.gmra.mxu0 %v3251
        %v3253 = vpop.f32.mrf.mxu0
        %v3254 = vadd.f32 %v2985, %v3253
        %v3255 = vpop.f32.mrf.mxu0
        %3256 = vmatprep.mubr.f32.mxu0 0.0
        %v3257 = vand.u32 %v2601, 4294901760
        %3258 = vmatmul.mubr.f32.gmra.mxu0 %v3257
        %v3259 = vpop.f32.mrf.mxu0
        %v3260 = vadd.f32 %v2995, %v3259
        %v3261 = vpop.f32.mrf.mxu0
        %3262 = vmatprep.mubr.f32.mxu0 0.0
        %v3263 = vand.u32 %v2602, 4294901760
        %3264 = vmatmul.mubr.f32.gmra.mxu0 %v3263
        %v3265 = vpop.f32.mrf.mxu0
        %v3266 = vadd.f32 %v3005, %v3265
        %v3267 = vpop.f32.mrf.mxu0
        %3268 = vmatprep.mubr.f32.mxu0 0.0
        %v3269 = vand.u32 %v2603, 4294901760
        %3270 = vmatmul.mubr.f32.gmra.mxu0 %v3269
        %v3271 = vpop.f32.mrf.mxu0
        %v3272 = vadd.f32 %v3015, %v3271
        %v3273 = vpop.f32.mrf.mxu0
        %3274 = vmatprep.mubr.f32.mxu0 0.0
        %v3275 = vand.u32 %v2604, 4294901760
        %3276 = vmatmul.mubr.f32.gmra.mxu0 %v3275
        %v3277 = vpop.f32.mrf.mxu0
        %v3278 = vadd.f32 %v3025, %v3277
        %v3279 = vpop.f32.mrf.mxu0
        %3280 = vmatprep.mubr.f32.mxu0 0.0
        %v3281 = vand.u32 %v2605, 4294901760
        %3282 = vmatmul.mubr.f32.gmra.mxu0 %v3281
        %v3283 = vpop.f32.mrf.mxu0
        %v3284 = vadd.f32 %v3035, %v3283
        %v3285 = vpop.f32.mrf.mxu0
        %3286 = vmatprep.mubr.f32.mxu0 0.0
        %v3287 = vand.u32 %v2606, 4294901760
        %3288 = vmatmul.mubr.f32.gmra.mxu0 %v3287
        %v3289 = vpop.f32.mrf.mxu0
        %v3290 = vadd.f32 %v3045, %v3289
        %v3291 = vpop.f32.mrf.mxu0
        %3292 = vmatprep.mubr.f32.mxu0 0.0
        %v3293 = vand.u32 %v2607, 4294901760
        %3294 = vmatmul.mubr.f32.gmra.mxu0 %v3293
        %v3295 = vpop.f32.mrf.mxu0
        %v3296 = vadd.f32 %v3055, %v3295
        %v3297 = vpop.f32.mrf.mxu0
        %3298 = vdwg.mxu0
        %3299 = vmatprep.subr.mxu0 0.0
        %v3300 = vand.u32 %v750, 4294901760
        %v3301 = vsub.f32 %v750, %v3300
        %3302 = vmatpush1.msra.mxu0 %v3301
        %3303 = vmatprep.subr.mxu0 0.0
        %v3304 = vand.u32 %v749, 4294901760
        %v3305 = vsub.f32 %v749, %v3304
        %3306 = vmatpush1.msra.mxu0 %v3305
        %3307 = vmatprep.subr.mxu0 0.0
        %v3308 = vand.u32 %v748, 4294901760
        %v3309 = vsub.f32 %v748, %v3308
        %3310 = vmatpush1.msra.mxu0 %v3309
        %3311 = vmatprep.subr.mxu0 0.0
        %v3312 = vand.u32 %v747, 4294901760
        %v3313 = vsub.f32 %v747, %v3312
        %3314 = vmatpush1.msra.mxu0 %v3313
        %3315 = vmatprep.subr.mxu0 0.0
        %v3316 = vand.u32 %v746, 4294901760
        %v3317 = vsub.f32 %v746, %v3316
        %3318 = vmatpush1.msra.mxu0 %v3317
        %3319 = vmatprep.subr.mxu0 0.0
        %v3320 = vand.u32 %v745, 4294901760
        %v3321 = vsub.f32 %v745, %v3320
        %3322 = vmatpush1.msra.mxu0 %v3321
        %3323 = vmatprep.subr.mxu0 0.0
        %v3324 = vand.u32 %v744, 4294901760
        %v3325 = vsub.f32 %v744, %v3324
        %3326 = vmatpush1.msra.mxu0 %v3325
        %3327 = vmatprep.subr.mxu0 0.0
        %v3328 = vand.u32 %v743, 4294901760
        %v3329 = vsub.f32 %v743, %v3328
        %3330 = vmatpush1.msra.mxu0 %v3329
        %3331 = vmatprep.subr.mxu0 0.0
        %v3332 = vand.u32 %v742, 4294901760
        %v3333 = vsub.f32 %v742, %v3332
        %3334 = vmatpush1.msra.mxu0 %v3333
        %3335 = vmatprep.subr.mxu0 0.0
        %v3336 = vand.u32 %v741, 4294901760
        %v3337 = vsub.f32 %v741, %v3336
        %3338 = vmatpush1.msra.mxu0 %v3337
        %3339 = vmatprep.subr.mxu0 0.0
        %v3340 = vand.u32 %v740, 4294901760
        %v3341 = vsub.f32 %v740, %v3340
        %3342 = vmatpush1.msra.mxu0 %v3341
        %3343 = vmatprep.subr.mxu0 0.0
        %v3344 = vand.u32 %v739, 4294901760
        %v3345 = vsub.f32 %v739, %v3344
        %3346 = vmatpush1.msra.mxu0 %v3345
        %3347 = vmatprep.subr.mxu0 0.0
        %v3348 = vand.u32 %v738, 4294901760
        %v3349 = vsub.f32 %v738, %v3348
        %3350 = vmatpush1.msra.mxu0 %v3349
        %3351 = vmatprep.subr.mxu0 0.0
        %v3352 = vand.u32 %v737, 4294901760
        %v3353 = vsub.f32 %v737, %v3352
        %3354 = vmatpush1.msra.mxu0 %v3353
        %3355 = vmatprep.subr.mxu0 0.0
        %v3356 = vand.u32 %v736, 4294901760
        %v3357 = vsub.f32 %v736, %v3356
        %3358 = vmatpush1.msra.mxu0 %v3357
        %3359 = vmatprep.subr.mxu0 0.0
        %v3360 = vand.u32 %v735, 4294901760
        %v3361 = vsub.f32 %v735, %v3360
        %3362 = vmatpush1.msra.mxu0 %v3361
        %3363 = vmatprep.subr.mxu0 0.0
        %3364 = vmatpush2.msra.mxu0 0.0
        %3365 = vmatprep.subr.mxu0 0.0
        %3366 = vmatpush2.msra.mxu0 0.0
        %3367 = vmatprep.subr.mxu0 0.0
        %3368 = vmatpush2.msra.mxu0 0.0
        %3369 = vmatprep.subr.mxu0 0.0
        %3370 = vmatpush2.msra.mxu0 0.0
        %3371 = vmatprep.subr.mxu0 0.0
        %3372 = vmatpush2.msra.mxu0 0.0
        %3373 = vmatprep.subr.mxu0 0.0
        %3374 = vmatpush2.msra.mxu0 0.0
        %3375 = vmatprep.subr.mxu0 0.0
        %3376 = vmatpush2.msra.mxu0 0.0
        %3377 = vmatprep.subr.mxu0 0.0
        %3378 = vmatpush2.msra.mxu0 0.0
        %3379 = vmatprep.subr.mxu0 0.0
        %3380 = vmatpush2.msra.mxu0 0.0
        %3381 = vmatprep.subr.mxu0 0.0
        %3382 = vmatpush2.msra.mxu0 0.0
        %3383 = vmatprep.subr.mxu0 0.0
        %3384 = vmatpush2.msra.mxu0 0.0
        %3385 = vmatprep.subr.mxu0 0.0
        %3386 = vmatpush2.msra.mxu0 0.0
        %3387 = vmatprep.subr.mxu0 0.0
        %3388 = vmatpush2.msra.mxu0 0.0
        %3389 = vmatprep.subr.mxu0 0.0
        %3390 = vmatpush2.msra.mxu0 0.0
        %3391 = vmatprep.subr.mxu0 0.0
        %3392 = vmatpush2.msra.mxu0 0.0
        %3393 = vmatprep.subr.mxu0 0.0
        %3394 = vmatpush2.msra.mxu0 0.0
        %3395 = vmatprep.mubr.f32.mxu0 0.0
        %v3396 = vand.u32 %v2592, 4294901760
        %v3397 = vsub.f32 %v2592, %v3396
        %3398 = vmatmul.mubr.f32.gmra.mxu0 %v3397
        %v3399 = vpop.f32.mrf.mxu0
        %v3400 = vadd.f32 %v3206, %v3399
        %v3401 = vpop.f32.mrf.mxu0
        %3402 = vmatprep.mubr.f32.mxu0 0.0
        %v3403 = vand.u32 %v2593, 4294901760
        %v3404 = vsub.f32 %v2593, %v3403
        %3405 = vmatmul.mubr.f32.gmra.mxu0 %v3404
        %v3406 = vpop.f32.mrf.mxu0
        %v3407 = vadd.f32 %v3212, %v3406
        %v3408 = vpop.f32.mrf.mxu0
        %3409 = vmatprep.mubr.f32.mxu0 0.0
        %v3410 = vand.u32 %v2594, 4294901760
        %v3411 = vsub.f32 %v2594, %v3410
        %3412 = vmatmul.mubr.f32.gmra.mxu0 %v3411
        %v3413 = vpop.f32.mrf.mxu0
        %v3414 = vadd.f32 %v3218, %v3413
        %v3415 = vpop.f32.mrf.mxu0
        %3416 = vmatprep.mubr.f32.mxu0 0.0
        %v3417 = vand.u32 %v2595, 4294901760
        %v3418 = vsub.f32 %v2595, %v3417
        %3419 = vmatmul.mubr.f32.gmra.mxu0 %v3418
        %v3420 = vpop.f32.mrf.mxu0
        %v3421 = vadd.f32 %v3224, %v3420
        %v3422 = vpop.f32.mrf.mxu0
        %3423 = vmatprep.mubr.f32.mxu0 0.0
        %v3424 = vand.u32 %v2596, 4294901760
        %v3425 = vsub.f32 %v2596, %v3424
        %3426 = vmatmul.mubr.f32.gmra.mxu0 %v3425
        %v3427 = vpop.f32.mrf.mxu0
        %v3428 = vadd.f32 %v3230, %v3427
        %v3429 = vpop.f32.mrf.mxu0
        %3430 = vmatprep.mubr.f32.mxu0 0.0
        %v3431 = vand.u32 %v2597, 4294901760
        %v3432 = vsub.f32 %v2597, %v3431
        %3433 = vmatmul.mubr.f32.gmra.mxu0 %v3432
        %v3434 = vpop.f32.mrf.mxu0
        %v3435 = vadd.f32 %v3236, %v3434
        %v3436 = vpop.f32.mrf.mxu0
        %3437 = vmatprep.mubr.f32.mxu0 0.0
        %v3438 = vand.u32 %v2598, 4294901760
        %v3439 = vsub.f32 %v2598, %v3438
        %3440 = vmatmul.mubr.f32.gmra.mxu0 %v3439
        %v3441 = vpop.f32.mrf.mxu0
        %v3442 = vadd.f32 %v3242, %v3441
        %v3443 = vpop.f32.mrf.mxu0
        %3444 = vmatprep.mubr.f32.mxu0 0.0
        %v3445 = vand.u32 %v2599, 4294901760
        %v3446 = vsub.f32 %v2599, %v3445
        %3447 = vmatmul.mubr.f32.gmra.mxu0 %v3446
        %v3448 = vpop.f32.mrf.mxu0
        %v3449 = vadd.f32 %v3248, %v3448
        %v3450 = vpop.f32.mrf.mxu0
        %3451 = vmatprep.mubr.f32.mxu0 0.0
        %v3452 = vand.u32 %v2600, 4294901760
        %v3453 = vsub.f32 %v2600, %v3452
        %3454 = vmatmul.mubr.f32.gmra.mxu0 %v3453
        %v3455 = vpop.f32.mrf.mxu0
        %v3456 = vadd.f32 %v3254, %v3455
        %v3457 = vpop.f32.mrf.mxu0
        %3458 = vmatprep.mubr.f32.mxu0 0.0
        %v3459 = vand.u32 %v2601, 4294901760
        %v3460 = vsub.f32 %v2601, %v3459
        %3461 = vmatmul.mubr.f32.gmra.mxu0 %v3460
        %v3462 = vpop.f32.mrf.mxu0
        %v3463 = vadd.f32 %v3260, %v3462
        %v3464 = vpop.f32.mrf.mxu0
        %3465 = vmatprep.mubr.f32.mxu0 0.0
        %v3466 = vand.u32 %v2602, 4294901760
        %v3467 = vsub.f32 %v2602, %v3466
        %3468 = vmatmul.mubr.f32.gmra.mxu0 %v3467
        %v3469 = vpop.f32.mrf.mxu0
        %v3470 = vadd.f32 %v3266, %v3469
        %v3471 = vpop.f32.mrf.mxu0
        %3472 = vmatprep.mubr.f32.mxu0 0.0
        %v3473 = vand.u32 %v2603, 4294901760
        %v3474 = vsub.f32 %v2603, %v3473
        %3475 = vmatmul.mubr.f32.gmra.mxu0 %v3474
        %v3476 = vpop.f32.mrf.mxu0
        %v3477 = vadd.f32 %v3272, %v3476
        %v3478 = vpop.f32.mrf.mxu0
        %3479 = vmatprep.mubr.f32.mxu0 0.0
        %v3480 = vand.u32 %v2604, 4294901760
        %v3481 = vsub.f32 %v2604, %v3480
        %3482 = vmatmul.mubr.f32.gmra.mxu0 %v3481
        %v3483 = vpop.f32.mrf.mxu0
        %v3484 = vadd.f32 %v3278, %v3483
        %v3485 = vpop.f32.mrf.mxu0
        %3486 = vmatprep.mubr.f32.mxu0 0.0
        %v3487 = vand.u32 %v2605, 4294901760
        %v3488 = vsub.f32 %v2605, %v3487
        %3489 = vmatmul.mubr.f32.gmra.mxu0 %v3488
        %v3490 = vpop.f32.mrf.mxu0
        %v3491 = vadd.f32 %v3284, %v3490
        %v3492 = vpop.f32.mrf.mxu0
        %3493 = vmatprep.mubr.f32.mxu0 0.0
        %v3494 = vand.u32 %v2606, 4294901760
        %v3495 = vsub.f32 %v2606, %v3494
        %3496 = vmatmul.mubr.f32.gmra.mxu0 %v3495
        %v3497 = vpop.f32.mrf.mxu0
        %v3498 = vadd.f32 %v3290, %v3497
        %v3499 = vpop.f32.mrf.mxu0
        %3500 = vmatprep.mubr.f32.mxu0 0.0
        %v3501 = vand.u32 %v2607, 4294901760
        %v3502 = vsub.f32 %v2607, %v3501
        %3503 = vmatmul.mubr.f32.gmra.mxu0 %v3502
        %v3504 = vpop.f32.mrf.mxu0
        %v3505 = vadd.f32 %v3296, %v3504
        %v3506 = vpop.f32.mrf.mxu0
        %3507 = vdwg.mxu0
        %3508 = vmatprep.subr.mxu0 0.0
        %v3509 = vand.u32 %v750, 4294901760
        %3510 = vmatpush1.msra.mxu0 %v3509
        %3511 = vmatprep.subr.mxu0 0.0
        %v3512 = vand.u32 %v749, 4294901760
        %3513 = vmatpush1.msra.mxu0 %v3512
        %3514 = vmatprep.subr.mxu0 0.0
        %v3515 = vand.u32 %v748, 4294901760
        %3516 = vmatpush1.msra.mxu0 %v3515
        %3517 = vmatprep.subr.mxu0 0.0
        %v3518 = vand.u32 %v747, 4294901760
        %3519 = vmatpush1.msra.mxu0 %v3518
        %3520 = vmatprep.subr.mxu0 0.0
        %v3521 = vand.u32 %v746, 4294901760
        %3522 = vmatpush1.msra.mxu0 %v3521
        %3523 = vmatprep.subr.mxu0 0.0
        %v3524 = vand.u32 %v745, 4294901760
        %3525 = vmatpush1.msra.mxu0 %v3524
        %3526 = vmatprep.subr.mxu0 0.0
        %v3527 = vand.u32 %v744, 4294901760
        %3528 = vmatpush1.msra.mxu0 %v3527
        %3529 = vmatprep.subr.mxu0 0.0
        %v3530 = vand.u32 %v743, 4294901760
        %3531 = vmatpush1.msra.mxu0 %v3530
        %3532 = vmatprep.subr.mxu0 0.0
        %v3533 = vand.u32 %v742, 4294901760
        %3534 = vmatpush1.msra.mxu0 %v3533
        %3535 = vmatprep.subr.mxu0 0.0
        %v3536 = vand.u32 %v741, 4294901760
        %3537 = vmatpush1.msra.mxu0 %v3536
        %3538 = vmatprep.subr.mxu0 0.0
        %v3539 = vand.u32 %v740, 4294901760
        %3540 = vmatpush1.msra.mxu0 %v3539
        %3541 = vmatprep.subr.mxu0 0.0
        %v3542 = vand.u32 %v739, 4294901760
        %3543 = vmatpush1.msra.mxu0 %v3542
        %3544 = vmatprep.subr.mxu0 0.0
        %v3545 = vand.u32 %v738, 4294901760
        %3546 = vmatpush1.msra.mxu0 %v3545
        %3547 = vmatprep.subr.mxu0 0.0
        %v3548 = vand.u32 %v737, 4294901760
        %3549 = vmatpush1.msra.mxu0 %v3548
        %3550 = vmatprep.subr.mxu0 0.0
        %v3551 = vand.u32 %v736, 4294901760
        %3552 = vmatpush1.msra.mxu0 %v3551
        %3553 = vmatprep.subr.mxu0 0.0
        %v3554 = vand.u32 %v735, 4294901760
        %3555 = vmatpush1.msra.mxu0 %v3554
        %3556 = vmatprep.subr.mxu0 0.0
        %3557 = vmatpush2.msra.mxu0 0.0
        %3558 = vmatprep.subr.mxu0 0.0
        %3559 = vmatpush2.msra.mxu0 0.0
        %3560 = vmatprep.subr.mxu0 0.0
        %3561 = vmatpush2.msra.mxu0 0.0
        %3562 = vmatprep.subr.mxu0 0.0
        %3563 = vmatpush2.msra.mxu0 0.0
        %3564 = vmatprep.subr.mxu0 0.0
        %3565 = vmatpush2.msra.mxu0 0.0
        %3566 = vmatprep.subr.mxu0 0.0
        %3567 = vmatpush2.msra.mxu0 0.0
        %3568 = vmatprep.subr.mxu0 0.0
        %3569 = vmatpush2.msra.mxu0 0.0
        %3570 = vmatprep.subr.mxu0 0.0
        %3571 = vmatpush2.msra.mxu0 0.0
        %3572 = vmatprep.subr.mxu0 0.0
        %3573 = vmatpush2.msra.mxu0 0.0
        %3574 = vmatprep.subr.mxu0 0.0
        %3575 = vmatpush2.msra.mxu0 0.0
        %3576 = vmatprep.subr.mxu0 0.0
        %3577 = vmatpush2.msra.mxu0 0.0
        %3578 = vmatprep.subr.mxu0 0.0
        %3579 = vmatpush2.msra.mxu0 0.0
        %3580 = vmatprep.subr.mxu0 0.0
        %3581 = vmatpush2.msra.mxu0 0.0
        %3582 = vmatprep.subr.mxu0 0.0
        %3583 = vmatpush2.msra.mxu0 0.0
        %3584 = vmatprep.subr.mxu0 0.0
        %3585 = vmatpush2.msra.mxu0 0.0
        %3586 = vmatprep.subr.mxu0 0.0
        %3587 = vmatpush2.msra.mxu0 0.0
        %3588 = vmatprep.mubr.f32.mxu0 0.0
        %v3589 = vand.u32 %v2592, 4294901760
        %v3590 = vsub.f32 %v2592, %v3589
        %v3591 = vand.u32 %v3590, 4294901760
        %3592 = vmatmul.mubr.f32.gmra.mxu0 %v3591
        %v3593 = vpop.f32.mrf.mxu0
        %v3594 = vadd.f32 %v3400, %v3593
        %v3595 = vpop.f32.mrf.mxu0
        %3596 = vmatprep.mubr.f32.mxu0 0.0
        %v3597 = vand.u32 %v2593, 4294901760
        %v3598 = vsub.f32 %v2593, %v3597
        %v3599 = vand.u32 %v3598, 4294901760
        %3600 = vmatmul.mubr.f32.gmra.mxu0 %v3599
        %v3601 = vpop.f32.mrf.mxu0
        %v3602 = vadd.f32 %v3407, %v3601
        %v3603 = vpop.f32.mrf.mxu0
        %3604 = vmatprep.mubr.f32.mxu0 0.0
        %v3605 = vand.u32 %v2594, 4294901760
        %v3606 = vsub.f32 %v2594, %v3605
        %v3607 = vand.u32 %v3606, 4294901760
        %3608 = vmatmul.mubr.f32.gmra.mxu0 %v3607
        %v3609 = vpop.f32.mrf.mxu0
        %v3610 = vadd.f32 %v3414, %v3609
        %v3611 = vpop.f32.mrf.mxu0
        %3612 = vmatprep.mubr.f32.mxu0 0.0
        %v3613 = vand.u32 %v2595, 4294901760
        %v3614 = vsub.f32 %v2595, %v3613
        %v3615 = vand.u32 %v3614, 4294901760
        %3616 = vmatmul.mubr.f32.gmra.mxu0 %v3615
        %v3617 = vpop.f32.mrf.mxu0
        %v3618 = vadd.f32 %v3421, %v3617
        %v3619 = vpop.f32.mrf.mxu0
        %3620 = vmatprep.mubr.f32.mxu0 0.0
        %v3621 = vand.u32 %v2596, 4294901760
        %v3622 = vsub.f32 %v2596, %v3621
        %v3623 = vand.u32 %v3622, 4294901760
        %3624 = vmatmul.mubr.f32.gmra.mxu0 %v3623
        %v3625 = vpop.f32.mrf.mxu0
        %v3626 = vadd.f32 %v3428, %v3625
        %v3627 = vpop.f32.mrf.mxu0
        %3628 = vmatprep.mubr.f32.mxu0 0.0
        %v3629 = vand.u32 %v2597, 4294901760
        %v3630 = vsub.f32 %v2597, %v3629
        %v3631 = vand.u32 %v3630, 4294901760
        %3632 = vmatmul.mubr.f32.gmra.mxu0 %v3631
        %v3633 = vpop.f32.mrf.mxu0
        %v3634 = vadd.f32 %v3435, %v3633
        %v3635 = vpop.f32.mrf.mxu0
        %3636 = vmatprep.mubr.f32.mxu0 0.0
        %v3637 = vand.u32 %v2598, 4294901760
        %v3638 = vsub.f32 %v2598, %v3637
        %v3639 = vand.u32 %v3638, 4294901760
        %3640 = vmatmul.mubr.f32.gmra.mxu0 %v3639
        %v3641 = vpop.f32.mrf.mxu0
        %v3642 = vadd.f32 %v3442, %v3641
        %v3643 = vpop.f32.mrf.mxu0
        %3644 = vmatprep.mubr.f32.mxu0 0.0
        %v3645 = vand.u32 %v2599, 4294901760
        %v3646 = vsub.f32 %v2599, %v3645
        %v3647 = vand.u32 %v3646, 4294901760
        %3648 = vmatmul.mubr.f32.gmra.mxu0 %v3647
        %v3649 = vpop.f32.mrf.mxu0
        %v3650 = vadd.f32 %v3449, %v3649
        %v3651 = vpop.f32.mrf.mxu0
        %3652 = vmatprep.mubr.f32.mxu0 0.0
        %v3653 = vand.u32 %v2600, 4294901760
        %v3654 = vsub.f32 %v2600, %v3653
        %v3655 = vand.u32 %v3654, 4294901760
        %3656 = vmatmul.mubr.f32.gmra.mxu0 %v3655
        %v3657 = vpop.f32.mrf.mxu0
        %v3658 = vadd.f32 %v3456, %v3657
        %v3659 = vpop.f32.mrf.mxu0
        %3660 = vmatprep.mubr.f32.mxu0 0.0
        %v3661 = vand.u32 %v2601, 4294901760
        %v3662 = vsub.f32 %v2601, %v3661
        %v3663 = vand.u32 %v3662, 4294901760
        %3664 = vmatmul.mubr.f32.gmra.mxu0 %v3663
        %v3665 = vpop.f32.mrf.mxu0
        %v3666 = vadd.f32 %v3463, %v3665
        %v3667 = vpop.f32.mrf.mxu0
        %3668 = vmatprep.mubr.f32.mxu0 0.0
        %v3669 = vand.u32 %v2602, 4294901760
        %v3670 = vsub.f32 %v2602, %v3669
        %v3671 = vand.u32 %v3670, 4294901760
        %3672 = vmatmul.mubr.f32.gmra.mxu0 %v3671
        %v3673 = vpop.f32.mrf.mxu0
        %v3674 = vadd.f32 %v3470, %v3673
        %v3675 = vpop.f32.mrf.mxu0
        %3676 = vmatprep.mubr.f32.mxu0 0.0
        %v3677 = vand.u32 %v2603, 4294901760
        %v3678 = vsub.f32 %v2603, %v3677
        %v3679 = vand.u32 %v3678, 4294901760
        %3680 = vmatmul.mubr.f32.gmra.mxu0 %v3679
        %v3681 = vpop.f32.mrf.mxu0
        %v3682 = vadd.f32 %v3477, %v3681
        %v3683 = vpop.f32.mrf.mxu0
        %3684 = vmatprep.mubr.f32.mxu0 0.0
        %v3685 = vand.u32 %v2604, 4294901760
        %v3686 = vsub.f32 %v2604, %v3685
        %v3687 = vand.u32 %v3686, 4294901760
        %3688 = vmatmul.mubr.f32.gmra.mxu0 %v3687
        %v3689 = vpop.f32.mrf.mxu0
        %v3690 = vadd.f32 %v3484, %v3689
        %v3691 = vpop.f32.mrf.mxu0
        %3692 = vmatprep.mubr.f32.mxu0 0.0
        %v3693 = vand.u32 %v2605, 4294901760
        %v3694 = vsub.f32 %v2605, %v3693
        %v3695 = vand.u32 %v3694, 4294901760
        %3696 = vmatmul.mubr.f32.gmra.mxu0 %v3695
        %v3697 = vpop.f32.mrf.mxu0
        %v3698 = vadd.f32 %v3491, %v3697
        %v3699 = vpop.f32.mrf.mxu0
        %3700 = vmatprep.mubr.f32.mxu0 0.0
        %v3701 = vand.u32 %v2606, 4294901760
        %v3702 = vsub.f32 %v2606, %v3701
        %v3703 = vand.u32 %v3702, 4294901760
        %3704 = vmatmul.mubr.f32.gmra.mxu0 %v3703
        %v3705 = vpop.f32.mrf.mxu0
        %v3706 = vadd.f32 %v3498, %v3705
        %v3707 = vpop.f32.mrf.mxu0
        %3708 = vmatprep.mubr.f32.mxu0 0.0
        %v3709 = vand.u32 %v2607, 4294901760
        %v3710 = vsub.f32 %v2607, %v3709
        %v3711 = vand.u32 %v3710, 4294901760
        %3712 = vmatmul.mubr.f32.gmra.mxu0 %v3711
        %v3713 = vpop.f32.mrf.mxu0
        %v3714 = vadd.f32 %v3505, %v3713
        %v3715 = vpop.f32.mrf.mxu0
        %3716 = vdwg.mxu0
        %3717 = vmatprep.subr.mxu0 0.0
        %v3718 = vand.u32 %v750, 4294901760
        %v3719 = vsub.f32 %v750, %v3718
        %v3720 = vand.u32 %v3719, 4294901760
        %3721 = vmatpush1.msra.mxu0 %v3720
        %3722 = vmatprep.subr.mxu0 0.0
        %v3723 = vand.u32 %v749, 4294901760
        %v3724 = vsub.f32 %v749, %v3723
        %v3725 = vand.u32 %v3724, 4294901760
        %3726 = vmatpush1.msra.mxu0 %v3725
        %3727 = vmatprep.subr.mxu0 0.0
        %v3728 = vand.u32 %v748, 4294901760
        %v3729 = vsub.f32 %v748, %v3728
        %v3730 = vand.u32 %v3729, 4294901760
        %3731 = vmatpush1.msra.mxu0 %v3730
        %3732 = vmatprep.subr.mxu0 0.0
        %v3733 = vand.u32 %v747, 4294901760
        %v3734 = vsub.f32 %v747, %v3733
        %v3735 = vand.u32 %v3734, 4294901760
        %3736 = vmatpush1.msra.mxu0 %v3735
        %3737 = vmatprep.subr.mxu0 0.0
        %v3738 = vand.u32 %v746, 4294901760
        %v3739 = vsub.f32 %v746, %v3738
        %v3740 = vand.u32 %v3739, 4294901760
        %3741 = vmatpush1.msra.mxu0 %v3740
        %3742 = vmatprep.subr.mxu0 0.0
        %v3743 = vand.u32 %v745, 4294901760
        %v3744 = vsub.f32 %v745, %v3743
        %v3745 = vand.u32 %v3744, 4294901760
        %3746 = vmatpush1.msra.mxu0 %v3745
        %3747 = vmatprep.subr.mxu0 0.0
        %v3748 = vand.u32 %v744, 4294901760
        %v3749 = vsub.f32 %v744, %v3748
        %v3750 = vand.u32 %v3749, 4294901760
        %3751 = vmatpush1.msra.mxu0 %v3750
        %3752 = vmatprep.subr.mxu0 0.0
        %v3753 = vand.u32 %v743, 4294901760
        %v3754 = vsub.f32 %v743, %v3753
        %v3755 = vand.u32 %v3754, 4294901760
        %3756 = vmatpush1.msra.mxu0 %v3755
        %3757 = vmatprep.subr.mxu0 0.0
        %v3758 = vand.u32 %v742, 4294901760
        %v3759 = vsub.f32 %v742, %v3758
        %v3760 = vand.u32 %v3759, 4294901760
        %3761 = vmatpush1.msra.mxu0 %v3760
        %3762 = vmatprep.subr.mxu0 0.0
        %v3763 = vand.u32 %v741, 4294901760
        %v3764 = vsub.f32 %v741, %v3763
        %v3765 = vand.u32 %v3764, 4294901760
        %3766 = vmatpush1.msra.mxu0 %v3765
        %3767 = vmatprep.subr.mxu0 0.0
        %v3768 = vand.u32 %v740, 4294901760
        %v3769 = vsub.f32 %v740, %v3768
        %v3770 = vand.u32 %v3769, 4294901760
        %3771 = vmatpush1.msra.mxu0 %v3770
        %3772 = vmatprep.subr.mxu0 0.0
        %v3773 = vand.u32 %v739, 4294901760
        %v3774 = vsub.f32 %v739, %v3773
        %v3775 = vand.u32 %v3774, 4294901760
        %3776 = vmatpush1.msra.mxu0 %v3775
        %3777 = vmatprep.subr.mxu0 0.0
        %v3778 = vand.u32 %v738, 4294901760
        %v3779 = vsub.f32 %v738, %v3778
        %v3780 = vand.u32 %v3779, 4294901760
        %3781 = vmatpush1.msra.mxu0 %v3780
        %3782 = vmatprep.subr.mxu0 0.0
        %v3783 = vand.u32 %v737, 4294901760
        %v3784 = vsub.f32 %v737, %v3783
        %v3785 = vand.u32 %v3784, 4294901760
        %3786 = vmatpush1.msra.mxu0 %v3785
        %3787 = vmatprep.subr.mxu0 0.0
        %v3788 = vand.u32 %v736, 4294901760
        %v3789 = vsub.f32 %v736, %v3788
        %v3790 = vand.u32 %v3789, 4294901760
        %3791 = vmatpush1.msra.mxu0 %v3790
        %3792 = vmatprep.subr.mxu0 0.0
        %v3793 = vand.u32 %v735, 4294901760
        %v3794 = vsub.f32 %v735, %v3793
        %v3795 = vand.u32 %v3794, 4294901760
        %3796 = vmatpush1.msra.mxu0 %v3795
        %3797 = vmatprep.subr.mxu0 0.0
        %3798 = vmatpush2.msra.mxu0 0.0
        %3799 = vmatprep.subr.mxu0 0.0
        %3800 = vmatpush2.msra.mxu0 0.0
        %3801 = vmatprep.subr.mxu0 0.0
        %3802 = vmatpush2.msra.mxu0 0.0
        %3803 = vmatprep.subr.mxu0 0.0
        %3804 = vmatpush2.msra.mxu0 0.0
        %3805 = vmatprep.subr.mxu0 0.0
        %3806 = vmatpush2.msra.mxu0 0.0
        %3807 = vmatprep.subr.mxu0 0.0
        %3808 = vmatpush2.msra.mxu0 0.0
        %3809 = vmatprep.subr.mxu0 0.0
        %3810 = vmatpush2.msra.mxu0 0.0
        %3811 = vmatprep.subr.mxu0 0.0
        %3812 = vmatpush2.msra.mxu0 0.0
        %3813 = vmatprep.subr.mxu0 0.0
        %3814 = vmatpush2.msra.mxu0 0.0
        %3815 = vmatprep.subr.mxu0 0.0
        %3816 = vmatpush2.msra.mxu0 0.0
        %3817 = vmatprep.subr.mxu0 0.0
        %3818 = vmatpush2.msra.mxu0 0.0
        %3819 = vmatprep.subr.mxu0 0.0
        %3820 = vmatpush2.msra.mxu0 0.0
        %3821 = vmatprep.subr.mxu0 0.0
        %3822 = vmatpush2.msra.mxu0 0.0
        %3823 = vmatprep.subr.mxu0 0.0
        %3824 = vmatpush2.msra.mxu0 0.0
        %3825 = vmatprep.subr.mxu0 0.0
        %3826 = vmatpush2.msra.mxu0 0.0
        %3827 = vmatprep.subr.mxu0 0.0
        %3828 = vmatpush2.msra.mxu0 0.0
        %3829 = vmatprep.mubr.f32.mxu0 0.0
        %v3830 = vand.u32 %v2592, 4294901760
        %3831 = vmatmul.mubr.f32.gmra.mxu0 %v3830
        %v3832 = vpop.f32.mrf.mxu0
        %v3833 = vadd.f32 %v3594, %v3832
        %v3834 = vpop.f32.mrf.mxu0
        %3835 = vmatprep.mubr.f32.mxu0 0.0
        %v3836 = vand.u32 %v2593, 4294901760
        %3837 = vmatmul.mubr.f32.gmra.mxu0 %v3836
        %v3838 = vpop.f32.mrf.mxu0
        %v3839 = vadd.f32 %v3602, %v3838
        %v3840 = vpop.f32.mrf.mxu0
        %3841 = vmatprep.mubr.f32.mxu0 0.0
        %v3842 = vand.u32 %v2594, 4294901760
        %3843 = vmatmul.mubr.f32.gmra.mxu0 %v3842
        %v3844 = vpop.f32.mrf.mxu0
        %v3845 = vadd.f32 %v3610, %v3844
        %v3846 = vpop.f32.mrf.mxu0
        %3847 = vmatprep.mubr.f32.mxu0 0.0
        %v3848 = vand.u32 %v2595, 4294901760
        %3849 = vmatmul.mubr.f32.gmra.mxu0 %v3848
        %v3850 = vpop.f32.mrf.mxu0
        %v3851 = vadd.f32 %v3618, %v3850
        %v3852 = vpop.f32.mrf.mxu0
        %3853 = vmatprep.mubr.f32.mxu0 0.0
        %v3854 = vand.u32 %v2596, 4294901760
        %3855 = vmatmul.mubr.f32.gmra.mxu0 %v3854
        %v3856 = vpop.f32.mrf.mxu0
        %v3857 = vadd.f32 %v3626, %v3856
        %v3858 = vpop.f32.mrf.mxu0
        %3859 = vmatprep.mubr.f32.mxu0 0.0
        %v3860 = vand.u32 %v2597, 4294901760
        %3861 = vmatmul.mubr.f32.gmra.mxu0 %v3860
        %v3862 = vpop.f32.mrf.mxu0
        %v3863 = vadd.f32 %v3634, %v3862
        %v3864 = vpop.f32.mrf.mxu0
        %3865 = vmatprep.mubr.f32.mxu0 0.0
        %v3866 = vand.u32 %v2598, 4294901760
        %3867 = vmatmul.mubr.f32.gmra.mxu0 %v3866
        %v3868 = vpop.f32.mrf.mxu0
        %v3869 = vadd.f32 %v3642, %v3868
        %v3870 = vpop.f32.mrf.mxu0
        %3871 = vmatprep.mubr.f32.mxu0 0.0
        %v3872 = vand.u32 %v2599, 4294901760
        %3873 = vmatmul.mubr.f32.gmra.mxu0 %v3872
        %v3874 = vpop.f32.mrf.mxu0
        %v3875 = vadd.f32 %v3650, %v3874
        %v3876 = vpop.f32.mrf.mxu0
        %3877 = vmatprep.mubr.f32.mxu0 0.0
        %v3878 = vand.u32 %v2600, 4294901760
        %3879 = vmatmul.mubr.f32.gmra.mxu0 %v3878
        %v3880 = vpop.f32.mrf.mxu0
        %v3881 = vadd.f32 %v3658, %v3880
        %v3882 = vpop.f32.mrf.mxu0
        %3883 = vmatprep.mubr.f32.mxu0 0.0
        %v3884 = vand.u32 %v2601, 4294901760
        %3885 = vmatmul.mubr.f32.gmra.mxu0 %v3884
        %v3886 = vpop.f32.mrf.mxu0
        %v3887 = vadd.f32 %v3666, %v3886
        %v3888 = vpop.f32.mrf.mxu0
        %3889 = vmatprep.mubr.f32.mxu0 0.0
        %v3890 = vand.u32 %v2602, 4294901760
        %3891 = vmatmul.mubr.f32.gmra.mxu0 %v3890
        %v3892 = vpop.f32.mrf.mxu0
        %v3893 = vadd.f32 %v3674, %v3892
        %v3894 = vpop.f32.mrf.mxu0
        %3895 = vmatprep.mubr.f32.mxu0 0.0
        %v3896 = vand.u32 %v2603, 4294901760
        %3897 = vmatmul.mubr.f32.gmra.mxu0 %v3896
        %v3898 = vpop.f32.mrf.mxu0
        %v3899 = vadd.f32 %v3682, %v3898
        %v3900 = vpop.f32.mrf.mxu0
        %3901 = vmatprep.mubr.f32.mxu0 0.0
        %v3902 = vand.u32 %v2604, 4294901760
        %3903 = vmatmul.mubr.f32.gmra.mxu0 %v3902
        %v3904 = vpop.f32.mrf.mxu0
        %v3905 = vadd.f32 %v3690, %v3904
        %v3906 = vpop.f32.mrf.mxu0
        %3907 = vmatprep.mubr.f32.mxu0 0.0
        %v3908 = vand.u32 %v2605, 4294901760
        %3909 = vmatmul.mubr.f32.gmra.mxu0 %v3908
        %v3910 = vpop.f32.mrf.mxu0
        %v3911 = vadd.f32 %v3698, %v3910
        %v3912 = vpop.f32.mrf.mxu0
        %3913 = vmatprep.mubr.f32.mxu0 0.0
        %v3914 = vand.u32 %v2606, 4294901760
        %3915 = vmatmul.mubr.f32.gmra.mxu0 %v3914
        %v3916 = vpop.f32.mrf.mxu0
        %v3917 = vadd.f32 %v3706, %v3916
        %v3918 = vpop.f32.mrf.mxu0
        %3919 = vmatprep.mubr.f32.mxu0 0.0
        %v3920 = vand.u32 %v2607, 4294901760
        %3921 = vmatmul.mubr.f32.gmra.mxu0 %v3920
        %v3922 = vpop.f32.mrf.mxu0
        %v3923 = vadd.f32 %v3714, %v3922
        %v3924 = vpop.f32.mrf.mxu0
        %3925 = vdwg.mxu0
        %3926 = vmatprep.subr.mxu0 0.0
        %v3927 = vand.u32 %v750, 4294901760
        %3928 = vmatpush1.msra.mxu0 %v3927
        %3929 = vmatprep.subr.mxu0 0.0
        %v3930 = vand.u32 %v749, 4294901760
        %3931 = vmatpush1.msra.mxu0 %v3930
        %3932 = vmatprep.subr.mxu0 0.0
        %v3933 = vand.u32 %v748, 4294901760
        %3934 = vmatpush1.msra.mxu0 %v3933
        %3935 = vmatprep.subr.mxu0 0.0
        %v3936 = vand.u32 %v747, 4294901760
        %3937 = vmatpush1.msra.mxu0 %v3936
        %3938 = vmatprep.subr.mxu0 0.0
        %v3939 = vand.u32 %v746, 4294901760
        %3940 = vmatpush1.msra.mxu0 %v3939
        %3941 = vmatprep.subr.mxu0 0.0
        %v3942 = vand.u32 %v745, 4294901760
        %3943 = vmatpush1.msra.mxu0 %v3942
        %3944 = vmatprep.subr.mxu0 0.0
        %v3945 = vand.u32 %v744, 4294901760
        %3946 = vmatpush1.msra.mxu0 %v3945
        %3947 = vmatprep.subr.mxu0 0.0
        %v3948 = vand.u32 %v743, 4294901760
        %3949 = vmatpush1.msra.mxu0 %v3948
        %3950 = vmatprep.subr.mxu0 0.0
        %v3951 = vand.u32 %v742, 4294901760
        %3952 = vmatpush1.msra.mxu0 %v3951
        %3953 = vmatprep.subr.mxu0 0.0
        %v3954 = vand.u32 %v741, 4294901760
        %3955 = vmatpush1.msra.mxu0 %v3954
        %3956 = vmatprep.subr.mxu0 0.0
        %v3957 = vand.u32 %v740, 4294901760
        %3958 = vmatpush1.msra.mxu0 %v3957
        %3959 = vmatprep.subr.mxu0 0.0
        %v3960 = vand.u32 %v739, 4294901760
        %3961 = vmatpush1.msra.mxu0 %v3960
        %3962 = vmatprep.subr.mxu0 0.0
        %v3963 = vand.u32 %v738, 4294901760
        %3964 = vmatpush1.msra.mxu0 %v3963
        %3965 = vmatprep.subr.mxu0 0.0
        %v3966 = vand.u32 %v737, 4294901760
        %3967 = vmatpush1.msra.mxu0 %v3966
        %3968 = vmatprep.subr.mxu0 0.0
        %v3969 = vand.u32 %v736, 4294901760
        %3970 = vmatpush1.msra.mxu0 %v3969
        %3971 = vmatprep.subr.mxu0 0.0
        %v3972 = vand.u32 %v735, 4294901760
        %3973 = vmatpush1.msra.mxu0 %v3972
        %3974 = vmatprep.subr.mxu0 0.0
        %3975 = vmatpush2.msra.mxu0 0.0
        %3976 = vmatprep.subr.mxu0 0.0
        %3977 = vmatpush2.msra.mxu0 0.0
        %3978 = vmatprep.subr.mxu0 0.0
        %3979 = vmatpush2.msra.mxu0 0.0
        %3980 = vmatprep.subr.mxu0 0.0
        %3981 = vmatpush2.msra.mxu0 0.0
        %3982 = vmatprep.subr.mxu0 0.0
        %3983 = vmatpush2.msra.mxu0 0.0
        %3984 = vmatprep.subr.mxu0 0.0
        %3985 = vmatpush2.msra.mxu0 0.0
        %3986 = vmatprep.subr.mxu0 0.0
        %3987 = vmatpush2.msra.mxu0 0.0
        %3988 = vmatprep.subr.mxu0 0.0
        %3989 = vmatpush2.msra.mxu0 0.0
        %3990 = vmatprep.subr.mxu0 0.0
        %3991 = vmatpush2.msra.mxu0 0.0
        %3992 = vmatprep.subr.mxu0 0.0
        %3993 = vmatpush2.msra.mxu0 0.0
        %3994 = vmatprep.subr.mxu0 0.0
        %3995 = vmatpush2.msra.mxu0 0.0
        %3996 = vmatprep.subr.mxu0 0.0
        %3997 = vmatpush2.msra.mxu0 0.0
        %3998 = vmatprep.subr.mxu0 0.0
        %3999 = vmatpush2.msra.mxu0 0.0
        %4000 = vmatprep.subr.mxu0 0.0
        %4001 = vmatpush2.msra.mxu0 0.0
        %4002 = vmatprep.subr.mxu0 0.0
        %4003 = vmatpush2.msra.mxu0 0.0
        %4004 = vmatprep.subr.mxu0 0.0
        %4005 = vmatpush2.msra.mxu0 0.0
        %4006 = vmatprep.mubr.f32.mxu0 0.0
        %v4007 = vand.u32 %v2592, 4294901760
        %4008 = vmatmul.mubr.f32.gmra.mxu0 %v4007
        %v4009 = vpop.f32.mrf.mxu0
        %v4010 = vadd.f32 %v3833, %v4009
        %v4011 = vpop.f32.mrf.mxu0
        %4012 = vmatprep.mubr.f32.mxu0 0.0
        %v4013 = vand.u32 %v2593, 4294901760
        %4014 = vmatmul.mubr.f32.gmra.mxu0 %v4013
        %v4015 = vpop.f32.mrf.mxu0
        %v4016 = vadd.f32 %v3839, %v4015
        %v4017 = vpop.f32.mrf.mxu0
        %4018 = vmatprep.mubr.f32.mxu0 0.0
        %v4019 = vand.u32 %v2594, 4294901760
        %4020 = vmatmul.mubr.f32.gmra.mxu0 %v4019
        %v4021 = vpop.f32.mrf.mxu0
        %v4022 = vadd.f32 %v3845, %v4021
        %v4023 = vpop.f32.mrf.mxu0
        %4024 = vmatprep.mubr.f32.mxu0 0.0
        %v4025 = vand.u32 %v2595, 4294901760
        %4026 = vmatmul.mubr.f32.gmra.mxu0 %v4025
        %v4027 = vpop.f32.mrf.mxu0
        %v4028 = vadd.f32 %v3851, %v4027
        %v4029 = vpop.f32.mrf.mxu0
        %4030 = vmatprep.mubr.f32.mxu0 0.0
        %v4031 = vand.u32 %v2596, 4294901760
        %4032 = vmatmul.mubr.f32.gmra.mxu0 %v4031
        %v4033 = vpop.f32.mrf.mxu0
        %v4034 = vadd.f32 %v3857, %v4033
        %v4035 = vpop.f32.mrf.mxu0
        %4036 = vmatprep.mubr.f32.mxu0 0.0
        %v4037 = vand.u32 %v2597, 4294901760
        %4038 = vmatmul.mubr.f32.gmra.mxu0 %v4037
        %v4039 = vpop.f32.mrf.mxu0
        %v4040 = vadd.f32 %v3863, %v4039
        %v4041 = vpop.f32.mrf.mxu0
        %4042 = vmatprep.mubr.f32.mxu0 0.0
        %v4043 = vand.u32 %v2598, 4294901760
        %4044 = vmatmul.mubr.f32.gmra.mxu0 %v4043
        %v4045 = vpop.f32.mrf.mxu0
        %v4046 = vadd.f32 %v3869, %v4045
        %v4047 = vpop.f32.mrf.mxu0
        %4048 = vmatprep.mubr.f32.mxu0 0.0
        %v4049 = vand.u32 %v2599, 4294901760
        %4050 = vmatmul.mubr.f32.gmra.mxu0 %v4049
        %v4051 = vpop.f32.mrf.mxu0
        %v4052 = vadd.f32 %v3875, %v4051
        %v4053 = vpop.f32.mrf.mxu0
        %4054 = vmatprep.mubr.f32.mxu0 0.0
        %v4055 = vand.u32 %v2600, 4294901760
        %4056 = vmatmul.mubr.f32.gmra.mxu0 %v4055
        %v4057 = vpop.f32.mrf.mxu0
        %v4058 = vadd.f32 %v3881, %v4057
        %v4059 = vpop.f32.mrf.mxu0
        %4060 = vmatprep.mubr.f32.mxu0 0.0
        %v4061 = vand.u32 %v2601, 4294901760
        %4062 = vmatmul.mubr.f32.gmra.mxu0 %v4061
        %v4063 = vpop.f32.mrf.mxu0
        %v4064 = vadd.f32 %v3887, %v4063
        %v4065 = vpop.f32.mrf.mxu0
        %4066 = vmatprep.mubr.f32.mxu0 0.0
        %v4067 = vand.u32 %v2602, 4294901760
        %4068 = vmatmul.mubr.f32.gmra.mxu0 %v4067
        %v4069 = vpop.f32.mrf.mxu0
        %v4070 = vadd.f32 %v3893, %v4069
        %v4071 = vpop.f32.mrf.mxu0
        %4072 = vmatprep.mubr.f32.mxu0 0.0
        %v4073 = vand.u32 %v2603, 4294901760
        %4074 = vmatmul.mubr.f32.gmra.mxu0 %v4073
        %v4075 = vpop.f32.mrf.mxu0
        %v4076 = vadd.f32 %v3899, %v4075
        %v4077 = vpop.f32.mrf.mxu0
        %4078 = vmatprep.mubr.f32.mxu0 0.0
        %v4079 = vand.u32 %v2604, 4294901760
        %4080 = vmatmul.mubr.f32.gmra.mxu0 %v4079
        %v4081 = vpop.f32.mrf.mxu0
        %v4082 = vadd.f32 %v3905, %v4081
        %v4083 = vpop.f32.mrf.mxu0
        %4084 = vmatprep.mubr.f32.mxu0 0.0
        %v4085 = vand.u32 %v2605, 4294901760
        %4086 = vmatmul.mubr.f32.gmra.mxu0 %v4085
        %v4087 = vpop.f32.mrf.mxu0
        %v4088 = vadd.f32 %v3911, %v4087
        %v4089 = vpop.f32.mrf.mxu0
        %4090 = vmatprep.mubr.f32.mxu0 0.0
        %v4091 = vand.u32 %v2606, 4294901760
        %4092 = vmatmul.mubr.f32.gmra.mxu0 %v4091
        %v4093 = vpop.f32.mrf.mxu0
        %v4094 = vadd.f32 %v3917, %v4093
        %v4095 = vpop.f32.mrf.mxu0
        %4096 = vmatprep.mubr.f32.mxu0 0.0
        %v4097 = vand.u32 %v2607, 4294901760
        %4098 = vmatmul.mubr.f32.gmra.mxu0 %v4097
        %v4099 = vpop.f32.mrf.mxu0
        %v4100 = vadd.f32 %v3923, %v4099
        %v4101 = vpop.f32.mrf.mxu0
        %4102 = vdwg.mxu0
        %v4103 = vadd.f32 %v2801, %v4010
        %v4104 = vadd.f32 %v2802, %v4016
        %v4105 = vadd.f32 %v2803, %v4022
        %v4106 = vadd.f32 %v2804, %v4028
        %v4107 = vadd.f32 %v2805, %v4034
        %v4108 = vadd.f32 %v2806, %v4040
        %v4109 = vadd.f32 %v2807, %v4046
        %v4110 = vadd.f32 %v2808, %v4052
        %v4111 = vadd.f32 %v2809, %v4058
        %v4112 = vadd.f32 %v2810, %v4064
        %v4113 = vadd.f32 %v2811, %v4070
        %v4114 = vadd.f32 %v2812, %v4076
        %v4115 = vadd.f32 %v2813, %v4082
        %v4116 = vadd.f32 %v2814, %v4088
        %v4117 = vadd.f32 %v2815, %v4094
        %v4118 = vadd.f32 %v2816, %v4100
        %4119 = vst.msk [vmem:[#allocation4] sm:$0xff] %vm767, %v4103
        %4120 = vst.msk [vmem:[#allocation4 + $0x8] sm:$0xff] %vm767, %v4104
        %4121 = vst.msk [vmem:[#allocation4 + $0x10] sm:$0xff] %vm767, %v4105
        %4122 = vst.msk [vmem:[#allocation4 + $0x18] sm:$0xff] %vm767, %v4106
        %4123 = vst.msk [vmem:[#allocation4 + $0x20] sm:$0xff] %vm767, %v4107
        %4124 = vst.msk [vmem:[#allocation4 + $0x28] sm:$0xff] %vm767, %v4108
        %4125 = vst.msk [vmem:[#allocation4 + $0x30] sm:$0xff] %vm767, %v4109
        %4126 = vst.msk [vmem:[#allocation4 + $0x38] sm:$0xff] %vm767, %v4110
        %4127 = vst.msk [vmem:[#allocation4 + $0x40] sm:$0xff] %vm767, %v4111
        %4128 = vst.msk [vmem:[#allocation4 + $0x48] sm:$0xff] %vm767, %v4112
        %4129 = vst.msk [vmem:[#allocation4 + $0x50] sm:$0xff] %vm767, %v4113
        %4130 = vst.msk [vmem:[#allocation4 + $0x58] sm:$0xff] %vm767, %v4114
        %4131 = vst.msk [vmem:[#allocation4 + $0x60] sm:$0xff] %vm767, %v4115
        %4132 = vst.msk [vmem:[#allocation4 + $0x68] sm:$0xff] %vm767, %v4116
        %4133 = vst.msk [vmem:[#allocation4 + $0x70] sm:$0xff] %vm767, %v4117
        %4134 = vst.msk [vmem:[#allocation4 + $0x78] sm:$0xff] %vm767, %v4118
        %4135 = vst.msk [vmem:[#allocation2] sm:$0xff] %vm2688, %v2400
        %4136 = vst.msk [vmem:[#allocation2 + $0x8] sm:$0xff] %vm2688, %v2401
        %4137 = vst.msk [vmem:[#allocation2 + $0x10] sm:$0xff] %vm2688, %v2402
        %4138 = vst.msk [vmem:[#allocation2 + $0x18] sm:$0xff] %vm2688, %v2403
        %4139 = vst.msk [vmem:[#allocation2 + $0x20] sm:$0xff] %vm2688, %v2404
        %4140 = vst.msk [vmem:[#allocation2 + $0x28] sm:$0xff] %vm2688, %v2405
        %4141 = vst.msk [vmem:[#allocation2 + $0x30] sm:$0xff] %vm2688, %v2406
        %4142 = vst.msk [vmem:[#allocation2 + $0x38] sm:$0xff] %vm2688, %v2407
        %4143 = vst.msk [vmem:[#allocation2 + $0x40] sm:$0xff] %vm2688, %v2408
        %4144 = vst.msk [vmem:[#allocation2 + $0x48] sm:$0xff] %vm2688, %v2409
        %4145 = vst.msk [vmem:[#allocation2 + $0x50] sm:$0xff] %vm2688, %v2410
        %4146 = vst.msk [vmem:[#allocation2 + $0x58] sm:$0xff] %vm2688, %v2411
        %4147 = vst.msk [vmem:[#allocation2 + $0x60] sm:$0xff] %vm2688, %v2412
        %4148 = vst.msk [vmem:[#allocation2 + $0x68] sm:$0xff] %vm2688, %v2413
        %4149 = vst.msk [vmem:[#allocation2 + $0x70] sm:$0xff] %vm2688, %v2414
        %4150 = vst.msk [vmem:[#allocation2 + $0x78] sm:$0xff] %vm2688, %v2415
      $region56: #{tpu_custom_call.1} parent=47 // pred_fallthru
        _
      // Predicated region
      $region57: #{tpu_custom_call.1} parent=47 // pred_check
        %p4151 = pneg %p641
      $region58: #{tpu_custom_call.1} parent=47 // pred_check_branch
        %4153 = sbr.rel (%p4151) target = $region60
      $region59: #{tpu_custom_call.1} parent=47 // pred_region
        %v4154 = vld [vmem:[#allocation3] sm:$0xff]
        %v4155 = vld [vmem:[#allocation3 + $0x8] sm:$0xff]
        %v4156 = vld [vmem:[#allocation3 + $0x10] sm:$0xff]
        %v4157 = vld [vmem:[#allocation3 + $0x18] sm:$0xff]
        %v4158 = vld [vmem:[#allocation3 + $0x20] sm:$0xff]
        %v4159 = vld [vmem:[#allocation3 + $0x28] sm:$0xff]
        %v4160 = vld [vmem:[#allocation3 + $0x30] sm:$0xff]
        %v4161 = vld [vmem:[#allocation3 + $0x38] sm:$0xff]
        %v4162 = vld [vmem:[#allocation3 + $0x40] sm:$0xff]
        %v4163 = vld [vmem:[#allocation3 + $0x48] sm:$0xff]
        %v4164 = vld [vmem:[#allocation3 + $0x50] sm:$0xff]
        %v4165 = vld [vmem:[#allocation3 + $0x58] sm:$0xff]
        %v4166 = vld [vmem:[#allocation3 + $0x60] sm:$0xff]
        %v4167 = vld [vmem:[#allocation3 + $0x68] sm:$0xff]
        %v4168 = vld [vmem:[#allocation3 + $0x70] sm:$0xff]
        %v4169 = vld [vmem:[#allocation3 + $0x78] sm:$0xff]
        %vm4170 = vcmp.gt.f32.partialorder %v4154, 0.0
        %vm4171 = vcmp.gt.f32.partialorder %v4155, 0.0
        %vm4172 = vcmp.gt.f32.partialorder %v4156, 0.0
        %vm4173 = vcmp.gt.f32.partialorder %v4157, 0.0
        %vm4174 = vcmp.gt.f32.partialorder %v4158, 0.0
        %vm4175 = vcmp.gt.f32.partialorder %v4159, 0.0
        %vm4176 = vcmp.gt.f32.partialorder %v4160, 0.0
        %vm4177 = vcmp.gt.f32.partialorder %v4161, 0.0
        %vm4178 = vcmp.gt.f32.partialorder %v4162, 0.0
        %vm4179 = vcmp.gt.f32.partialorder %v4163, 0.0
        %vm4180 = vcmp.gt.f32.partialorder %v4164, 0.0
        %vm4181 = vcmp.gt.f32.partialorder %v4165, 0.0
        %vm4182 = vcmp.gt.f32.partialorder %v4166, 0.0
        %vm4183 = vcmp.gt.f32.partialorder %v4167, 0.0
        %vm4184 = vcmp.gt.f32.partialorder %v4168, 0.0
        %vm4185 = vcmp.gt.f32.partialorder %v4169, 0.0
        %v4186 = vrcp.pop %v4154
        %v4187 = vmul.f32 1.0, %v4186
        %v4188 = vrcp.pop %v4155
        %v4189 = vmul.f32 1.0, %v4188
        %v4190 = vrcp.pop %v4156
        %v4191 = vmul.f32 1.0, %v4190
        %v4192 = vrcp.pop %v4157
        %v4193 = vmul.f32 1.0, %v4192
        %v4194 = vrcp.pop %v4158
        %v4195 = vmul.f32 1.0, %v4194
        %v4196 = vrcp.pop %v4159
        %v4197 = vmul.f32 1.0, %v4196
        %v4198 = vrcp.pop %v4160
        %v4199 = vmul.f32 1.0, %v4198
        %v4200 = vrcp.pop %v4161
        %v4201 = vmul.f32 1.0, %v4200
        %v4202 = vrcp.pop %v4162
        %v4203 = vmul.f32 1.0, %v4202
        %v4204 = vrcp.pop %v4163
        %v4205 = vmul.f32 1.0, %v4204
        %v4206 = vrcp.pop %v4164
        %v4207 = vmul.f32 1.0, %v4206
        %v4208 = vrcp.pop %v4165
        %v4209 = vmul.f32 1.0, %v4208
        %v4210 = vrcp.pop %v4166
        %v4211 = vmul.f32 1.0, %v4210
        %v4212 = vrcp.pop %v4167
        %v4213 = vmul.f32 1.0, %v4212
        %v4214 = vrcp.pop %v4168
        %v4215 = vmul.f32 1.0, %v4214
        %v4216 = vrcp.pop %v4169
        %v4217 = vmul.f32 1.0, %v4216
        %v4218 = vsel %vm4170, %v4187, 0.0
        %v4219 = vsel %vm4171, %v4189, 0.0
        %v4220 = vsel %vm4172, %v4191, 0.0
        %v4221 = vsel %vm4173, %v4193, 0.0
        %v4222 = vsel %vm4174, %v4195, 0.0
        %v4223 = vsel %vm4175, %v4197, 0.0
        %v4224 = vsel %vm4176, %v4199, 0.0
        %v4225 = vsel %vm4177, %v4201, 0.0
        %v4226 = vsel %vm4178, %v4203, 0.0
        %v4227 = vsel %vm4179, %v4205, 0.0
        %v4228 = vsel %vm4180, %v4207, 0.0
        %v4229 = vsel %vm4181, %v4209, 0.0
        %v4230 = vsel %vm4182, %v4211, 0.0
        %v4231 = vsel %vm4183, %v4213, 0.0
        %v4232 = vsel %vm4184, %v4215, 0.0
        %v4233 = vsel %vm4185, %v4217, 0.0
        %v4234 = vld [vmem:[#allocation4] sm:$0xff]
        %v4235 = vld [vmem:[#allocation4 + $0x8] sm:$0xff]
        %v4236 = vld [vmem:[#allocation4 + $0x10] sm:$0xff]
        %v4237 = vld [vmem:[#allocation4 + $0x18] sm:$0xff]
        %v4238 = vld [vmem:[#allocation4 + $0x20] sm:$0xff]
        %v4239 = vld [vmem:[#allocation4 + $0x28] sm:$0xff]
        %v4240 = vld [vmem:[#allocation4 + $0x30] sm:$0xff]
        %v4241 = vld [vmem:[#allocation4 + $0x38] sm:$0xff]
        %v4242 = vld [vmem:[#allocation4 + $0x40] sm:$0xff]
        %v4243 = vld [vmem:[#allocation4 + $0x48] sm:$0xff]
        %v4244 = vld [vmem:[#allocation4 + $0x50] sm:$0xff]
        %v4245 = vld [vmem:[#allocation4 + $0x58] sm:$0xff]
        %v4246 = vld [vmem:[#allocation4 + $0x60] sm:$0xff]
        %v4247 = vld [vmem:[#allocation4 + $0x68] sm:$0xff]
        %v4248 = vld [vmem:[#allocation4 + $0x70] sm:$0xff]
        %v4249 = vld [vmem:[#allocation4 + $0x78] sm:$0xff]
        %4251 = vset.pattern.permute.xlu0 0
        %4252 = vperm.xlu0 %4251, %v4218
        %v4253 = vpop.permute.xlu0 %4252
        %4256 = vset.pattern.permute.xlu0 0
        %4257 = vperm.xlu0 %4256, %v4219
        %v4258 = vpop.permute.xlu0 %4257
        %4261 = vset.pattern.permute.xlu0 0
        %4262 = vperm.xlu0 %4261, %v4220
        %v4263 = vpop.permute.xlu0 %4262
        %4266 = vset.pattern.permute.xlu0 0
        %4267 = vperm.xlu0 %4266, %v4221
        %v4268 = vpop.permute.xlu0 %4267
        %4271 = vset.pattern.permute.xlu0 0
        %4272 = vperm.xlu0 %4271, %v4222
        %v4273 = vpop.permute.xlu0 %4272
        %4276 = vset.pattern.permute.xlu0 0
        %4277 = vperm.xlu0 %4276, %v4223
        %v4278 = vpop.permute.xlu0 %4277
        %4281 = vset.pattern.permute.xlu0 0
        %4282 = vperm.xlu0 %4281, %v4224
        %v4283 = vpop.permute.xlu0 %4282
        %4286 = vset.pattern.permute.xlu0 0
        %4287 = vperm.xlu0 %4286, %v4225
        %v4288 = vpop.permute.xlu0 %4287
        %4291 = vset.pattern.permute.xlu0 0
        %4292 = vperm.xlu0 %4291, %v4226
        %v4293 = vpop.permute.xlu0 %4292
        %4296 = vset.pattern.permute.xlu0 0
        %4297 = vperm.xlu0 %4296, %v4227
        %v4298 = vpop.permute.xlu0 %4297
        %4301 = vset.pattern.permute.xlu0 0
        %4302 = vperm.xlu0 %4301, %v4228
        %v4303 = vpop.permute.xlu0 %4302
        %4306 = vset.pattern.permute.xlu0 0
        %4307 = vperm.xlu0 %4306, %v4229
        %v4308 = vpop.permute.xlu0 %4307
        %4311 = vset.pattern.permute.xlu0 0
        %4312 = vperm.xlu0 %4311, %v4230
        %v4313 = vpop.permute.xlu0 %4312
        %4316 = vset.pattern.permute.xlu0 0
        %4317 = vperm.xlu0 %4316, %v4231
        %v4318 = vpop.permute.xlu0 %4317
        %4321 = vset.pattern.permute.xlu0 0
        %4322 = vperm.xlu0 %4321, %v4232
        %v4323 = vpop.permute.xlu0 %4322
        %4326 = vset.pattern.permute.xlu0 0
        %4327 = vperm.xlu0 %4326, %v4233
        %v4328 = vpop.permute.xlu0 %4327
        %v4330 = vmul.f32 %v4234, %v4253
        %v4331 = vmul.f32 %v4235, %v4258
        %v4332 = vmul.f32 %v4236, %v4263
        %v4333 = vmul.f32 %v4237, %v4268
        %v4334 = vmul.f32 %v4238, %v4273
        %v4335 = vmul.f32 %v4239, %v4278
        %v4336 = vmul.f32 %v4240, %v4283
        %v4337 = vmul.f32 %v4241, %v4288
        %v4338 = vmul.f32 %v4242, %v4293
        %v4339 = vmul.f32 %v4243, %v4298
        %v4340 = vmul.f32 %v4244, %v4303
        %v4341 = vmul.f32 %v4245, %v4308
        %v4342 = vmul.f32 %v4246, %v4313
        %v4343 = vmul.f32 %v4247, %v4318
        %v4344 = vmul.f32 %v4248, %v4323
        %v4345 = vmul.f32 %v4249, %v4328
        %vm4346 = vcmask 523264
        %4347 = vst.msk [vmem:[%s639] sm:$0xff] %vm4346, %v4330
        %4348 = vst.msk [vmem:[%s639 + $0x8] sm:$0xff] %vm4346, %v4331
        %4349 = vst.msk [vmem:[%s639 + $0x10] sm:$0xff] %vm4346, %v4332
        %4350 = vst.msk [vmem:[%s639 + $0x18] sm:$0xff] %vm4346, %v4333
        %4351 = vst.msk [vmem:[%s639 + $0x20] sm:$0xff] %vm4346, %v4334
        %4352 = vst.msk [vmem:[%s639 + $0x28] sm:$0xff] %vm4346, %v4335
        %4353 = vst.msk [vmem:[%s639 + $0x30] sm:$0xff] %vm4346, %v4336
        %4354 = vst.msk [vmem:[%s639 + $0x38] sm:$0xff] %vm4346, %v4337
        %4355 = vst.msk [vmem:[%s639 + $0x40] sm:$0xff] %vm4346, %v4338
        %4356 = vst.msk [vmem:[%s639 + $0x48] sm:$0xff] %vm4346, %v4339
        %4357 = vst.msk [vmem:[%s639 + $0x50] sm:$0xff] %vm4346, %v4340
        %4358 = vst.msk [vmem:[%s639 + $0x58] sm:$0xff] %vm4346, %v4341
        %4359 = vst.msk [vmem:[%s639 + $0x60] sm:$0xff] %vm4346, %v4342
        %4360 = vst.msk [vmem:[%s639 + $0x68] sm:$0xff] %vm4346, %v4343
        %4361 = vst.msk [vmem:[%s639 + $0x70] sm:$0xff] %vm4346, %v4344
        %4362 = vst.msk [vmem:[%s639 + $0x78] sm:$0xff] %vm4346, %v4345
      $region60: #{tpu_custom_call.1} parent=47 // pred_fallthru
        _
      %s4363 = smul.u32 16, %s28
      %p4364 = scmp.lt.s32.totalorder %s27, 3
      %s4365 = scalar_select %p4364, %s27, 3
      %p4366 = scmp.lt.s32.totalorder %s4363, 15
      %s4367 = scalar_select %p4366, %s4363, 15
      %s4368 = smul.addr %s4365, 16
      %s4369 = sadd.s32 %s4367, %s4368
      %s4370 = smul.addr %s4369, 8
      %s4371 = scalar_lea.vmem %s9, %s4370
      // Predicated region
      $region61: #{tpu_custom_call.1} parent=47 // pred_check
        %p4372 = pneg %p297
      $region62: #{tpu_custom_call.1} parent=47 // pred_check_branch
        %4374 = sbr.rel (%p4372) target = $region64
      $region63: #{tpu_custom_call.1} parent=47 // pred_region
        %s4375 = smul.u32 16, %s28
      $region64: #{tpu_custom_call.1} parent=47 // pred_fallthru
        _
    $region48: #{tpu_custom_call.1} parent=5 // pred_fallthru
      _
    %p4376 = scmp.le.s32.totalorder 2, %s17
    // Predicated region
    $region65: #{tpu_custom_call.1} parent=5 // pred_check
      %p4377 = pneg %p4376
    $region66: #{tpu_custom_call.1} parent=5 // pred_check_branch
      %4379 = sbr.rel (%p4377) target = $region68
    $region67: #{tpu_custom_call.1} parent=5 // pred_region
      %s4380 = ssub.s32 %s17, 2
      // Predicated region
      $region69: #{tpu_custom_call.1} parent=67 // pred_check
        %p4381 = pneg %p303
      $region70: #{tpu_custom_call.1} parent=67 // pred_check_branch
        %4383 = sbr.rel (%p4381) target = $region72
      $region71: #{tpu_custom_call.1} parent=67 // pred_region
        %s4384 = smul.u32 16, %s31
        %p4385 = scmp.lt.s32.totalorder %s30, 3
        %s4386 = scalar_select %p4385, %s30, 3
        %p4387 = scmp.lt.s32.totalorder %s4384, 15
        %s4388 = scalar_select %p4387, %s4384, 15
        %s4389 = smul.addr %s4386, 16
        %s4390 = sadd.s32 %s4388, %s4389
        %s4391 = smul.addr %s4390, 8
        %s4392 = scalar_lea.vmem %s9, %s4391
      $region72: #{tpu_custom_call.1} parent=67 // pred_fallthru
        _
    $region68: #{tpu_custom_call.1} parent=5 // pred_fallthru
      _
  $region6: #{tpu_custom_call.1} parent=0 // loop_footer
    %s21 = sadd.s32 1, %s17
  $region7: #{tpu_custom_call.1} parent=0 // loop_footer_branch
    %16 = sbr.rel target = $region3
  $region8: #{tpu_custom_call.1} parent=0 // loop_exit
    _

</llo_original>
